<compile_context>
chip_gen: v6e
topology: v6e:2x2x1
jax: 0.10.0
libtpu: 0.0.40
codegen_flags: <defaults>
</compile_context>

<pallas_src>
import functools
import math

import jax
import jax.numpy as jnp
from jax import lax
from jax.experimental import pallas as pl
from jax.experimental.pallas import tpu as pltpu


# ---------------------------------------------------------------------------
# Kernel bodies
# ---------------------------------------------------------------------------

def _im2col_matmul_store(read_tap, w_ref, b_ref, o_ref, col_ref, *,
                         band_rows, W, KH, KW, dilation, cin):
    """Shared compute: fused im2col -> one MXU matmul -> lane-dense NCHW store.

    read_tap(r0, c0) returns the (band_rows, W, cin) input window whose top-left
    corner is (r0, c0) inside the reflection-padded band.
    """
    m = band_rows * W
    for kh in range(KH):
        for kw in range(KW):
            t = kh * KW + kw
            slab = read_tap(kh * dilation, kw * dilation)     # (band_rows, W, cin)
            # Leading-dim merge only ((band_rows, W) -> m); the lane (cin) dim is
            # untouched, so this is layout-trivial when W is a sublane multiple.
            col_ref[:, pl.ds(t * cin, cin)] = slab.reshape(m, cin)

    # Single matmul with contraction K = KH*KW*Cin.  Both operands contract
    # their minor dim (transposed-rhs MXU path), so the result is produced
    # directly in (Cout, m) orientation -> no XLU transpose before the store.
    acc = lax.dot_general(
        w_ref[...], col_ref[...],
        dimension_numbers=(((1,), (1,)), ((), ())),
        preferred_element_type=jnp.float32)                    # (Cout, m) f32
    acc = acc + b_ref[...]                                     # (Cout, 1) broadcast
    o_ref[0] = acc.astype(o_ref.dtype)                         # lane-dense NCHW store


def _conv_band_kernel(x_ref, w_ref, b_ref, o_ref, col_ref, *,
                      band_rows, W, KH, KW, dilation, cin):
    """Single-band variant: whole padded image is one BlockSpec-pipelined block.

    x_ref : (1, band_rows + 2*pad, Wp, Cin)  reflection-padded NHWC band (VMEM)
    """
    read_tap = lambda r0, c0: x_ref[0, pl.ds(r0, band_rows), pl.ds(c0, W), :]
    _im2col_matmul_store(read_tap, w_ref, b_ref, o_ref, col_ref,
                         band_rows=band_rows, W=W, KH=KH, KW=KW,
                         dilation=dilation, cin=cin)


def _conv_band_kernel_manual(x_hbm, w_ref, b_ref, o_ref, xbuf, col_ref, sem, *,
                             band_rows, band_rows_p, rows_per_batch,
                             W, KH, KW, dilation, cin):
    """Multi-band variant: overlapping halo row-bands are DMA'd from HBM.

    x_hbm : (N * (Hpad + 2*pad), Wp, Cin) reflection-padded NHWC input, left in
            HBM (memory_space=pl.ANY).  Each step copies its halo-extended band
            into a VMEM double buffer and prefetches the next band of the same
            batch while computing, so no duplicated bands are ever written to HBM.
    """
    n = pl.program_id(0)
    b = pl.program_id(1)
    nb = pl.num_programs(1)
    slot = b % 2

    def band_copy(batch, band, slot_):
        row0 = batch * rows_per_batch + band * band_rows
        return pltpu.make_async_copy(
            x_hbm.at[pl.ds(row0, band_rows_p)],
            xbuf.at[slot_], sem.at[slot_])

    @pl.when(b == 0)                       # prime the pipeline for this batch
    def _prime():
        band_copy(n, 0, 0).start()

    band_copy(n, b, slot).wait()           # band b: started at step b-1 (or above)

    @pl.when(b + 1 < nb)                   # prefetch next band during compute
    def _prefetch():
        band_copy(n, b + 1, 1 - slot).start()

    read_tap = lambda r0, c0: xbuf[slot, pl.ds(r0, band_rows), pl.ds(c0, W), :]
    _im2col_matmul_store(read_tap, w_ref, b_ref, o_ref, col_ref,
                         band_rows=band_rows, W=W, KH=KH, KW=KW,
                         dilation=dilation, cin=cin)


# ---------------------------------------------------------------------------
# Wrapper helpers
# ---------------------------------------------------------------------------

def _round_up(x, q):
    return -(-x // q) * q


def _padded_vmem_bytes(shape, dtype):
    """VMEM footprint of a tile including (sublane, lane) layout padding."""
    itemsize = jnp.dtype(dtype).itemsize
    sub_q = {4: 8, 2: 16, 1: 32}.get(itemsize, 8)
    dims = (1, 1) + tuple(int(s) for s in shape)
    lead = 1
    for s in dims[:-2]:
        lead *= s
    return lead * _round_up(dims[-2], sub_q) * _round_up(dims[-1], 128) * itemsize


def _vmem_budget_bytes():
    """~75% of physical VMEM per TensorCore (~48 MiB v7x, ~96 MiB v5e/v6e)."""
    phys = 64 * 1024 * 1024          # conservative fallback = v7x per-core VMEM
    try:
        info = pltpu.get_tpu_info()
        phys = int(getattr(info, "vmem_capacity_bytes", phys)) or phys
    except Exception:
        pass
    return (3 * phys) // 4


def _pick_band_rows(H, W, Wp, Cin, Cout, Ktot, halo, compute_dtype, out_dtype,
                    budget, max_band_rows):
    def est(rows):
        rows_p = rows + halo
        m = rows * W
        total = _padded_vmem_bytes((2, rows_p, Wp, Cin), compute_dtype)   # band x2 bufs
        total += _padded_vmem_bytes((m, Ktot), compute_dtype)             # im2col scratch
        total += 2 * _padded_vmem_bytes((Cout, m), out_dtype)             # out block x2
        total += 2 * _padded_vmem_bytes((Cout, Ktot), compute_dtype)      # weights x2
        total += 2 * _padded_vmem_bytes((Cout, 1), jnp.float32)           # bias x2
        total += _padded_vmem_bytes((Cout, m), jnp.float32)               # live f32 acc
        return total

    # When banding, band_rows*W must stay a multiple of 128 so the flattened
    # NCHW output block remains lane-aligned.
    row_q = 128 // math.gcd(W, 128)
    cap = min(H, max_band_rows) if max_band_rows else H
    if cap >= H and est(H) <= budget:
        return H                                   # single band per image
    rows = max(row_q, (min(cap, 2048) // row_q) * row_q)
    while rows > row_q and est(rows) > budget:
        rows -= row_q
    # TODO(synk): also tile W / Cout when even a single row-quantum band
    # overflows the budget (very wide images or huge channel counts).
    return rows


# ---------------------------------------------------------------------------
# Public forward pass
# ---------------------------------------------------------------------------

def cnn_layer_plain_forward(x_nchw, weight, bias, *, filter_size=3,
                            dilation_rate=1, compute_dtype=jnp.bfloat16,
                            max_band_rows=None):
    """Forward pass of cnn_layer_plain (ReflectionPad2d + dilated Conv2d).

    x_nchw : (N, Cin, H, W), weight : (Cout, Cin, KH, KW), bias : (Cout,)
    returns: (N, Cout, H, W)
    """
    N, Cin, H, W = x_nchw.shape
    Cout, _, KH, KW = weight.shape
    assert (KH, KW) == (filter_size, filter_size)
    d = dilation_rate
    pad = d * (filter_size - 1) // 2
    halo = 2 * pad
    Ktot = KH * KW * Cin
    out_dtype = x_nchw.dtype
    compute_dtype = jnp.dtype(compute_dtype) if compute_dtype is not None else jnp.dtype(out_dtype)

    # NHWC + reflection pad: the HBM band DMA is then one contiguous row range,
    # and Cin sits on lanes (dense for real networks with Cin >= 128).
    # TODO(synk): for tiny-Cin stem layers, pad Cin up to the lane width (or use
    # an NCHW col layout) to avoid masked sub-lane loads in VMEM.
    x = jnp.transpose(x_nchw, (0, 2, 3, 1)).astype(compute_dtype)
    xp = jnp.pad(x, ((0, 0), (pad, pad), (pad, pad), (0, 0)), mode="reflect")
    Wp = W + halo

    budget = _vmem_budget_bytes()
    band_rows = _pick_band_rows(H, W, Wp, Cin, Cout, Ktot, halo,
                                compute_dtype, out_dtype, budget, max_band_rows)
    n_bands = -(-H // band_rows)

    # v7x has two TensorCores: expose >= 2 'parallel' iterations even when the
    # whole image fits one band (split rows if the batch alone cannot do it).
    row_q = 128 // math.gcd(W, 128)
    if N == 1 and n_bands == 1 and H >= 2 * row_q:
        band_rows = max(row_q, ((H // 2) // row_q) * row_q)
        n_bands = -(-H // band_rows)

    Hpad = n_bands * band_rows
    if Hpad > H:        # masked tail band: extra rows are computed then sliced off
        xp = jnp.pad(xp, ((0, 0), (0, Hpad - H), (0, 0), (0, 0)), mode="edge")
    Hp = Hpad + halo
    band_rows_p = band_rows + halo
    m = band_rows * W

    # Per-tap weights flattened to (Cout, KH*KW*Cin); bias as a (Cout, 1) column.
    w_mat = jnp.transpose(weight, (0, 2, 3, 1)).reshape(Cout, Ktot).astype(compute_dtype)
    bias_col = bias.reshape(Cout, 1).astype(jnp.float32)

    w_spec = pl.BlockSpec((Cout, Ktot), lambda n, b: (0, 0))
    b_spec = pl.BlockSpec((Cout, 1), lambda n, b: (0, 0))
    out_spec = pl.BlockSpec((1, Cout, m), lambda n, b: (n, 0, b))
    # TODO(synk): the weight/bias block index never changes; single-buffer them
    # (pl.Buffered(1)) to halve their VMEM footprint at large channel counts.
    # TODO(synk): for large Cout/Cin add a 'parallel' Cout-tile axis (256 on
    # v6e/v7x, 128 on v5e) and an 'arbitrary' K axis with a pl.when-initialized
    # f32 VMEM accumulator.

    flops = 2 * N * Hpad * W * Ktot * Cout
    bytes_accessed = int(xp.size) * xp.dtype.itemsize \
        + int(w_mat.size) * w_mat.dtype.itemsize \
        + int(bias_col.size) * bias_col.dtype.itemsize \
        + N * Cout * Hpad * W * jnp.dtype(out_dtype).itemsize
    cost = pl.CostEstimate(flops=int(flops), transcendentals=0,
                           bytes_accessed=int(bytes_accessed))

    common = dict(band_rows=band_rows, W=W, KH=KH, KW=KW, dilation=d, cin=Cin)

    if n_bands == 1:
        # Whole padded image fits the VMEM budget: plain BlockSpec pipelining
        # (input fetch overlaps compute across the batch axis).
        kernel = functools.partial(_conv_band_kernel, **common)
        in_specs = [pl.BlockSpec((1, Hp, Wp, Cin), lambda n, b: (n, 0, 0, 0)),
                    w_spec, b_spec]
        scratch = [pltpu.VMEM((m, Ktot), compute_dtype)]
        x_arg = xp
    else:
        # Overlapping halo bands are DMA'd straight from HBM into a VMEM double
        # buffer: no wrapper-side jnp.stack rewriting duplicated bands to HBM.
        kernel = functools.partial(_conv_band_kernel_manual,
                                   band_rows_p=band_rows_p, rows_per_batch=Hp,
                                   **common)
        in_specs = [pl.BlockSpec(memory_space=pl.ANY), w_spec, b_spec]
        scratch = [pltpu.VMEM((2, band_rows_p, Wp, Cin), compute_dtype),
                   pltpu.VMEM((m, Ktot), compute_dtype),
                   pltpu.SemaphoreType.DMA((2,))]
        x_arg = xp.reshape(N * Hp, Wp, Cin)        # free leading-dim merge

    out = pl.pallas_call(
        kernel,
        out_shape=jax.ShapeDtypeStruct((N, Cout, Hpad * W), out_dtype),
        grid_spec=pltpu.PrefetchScalarGridSpec(
            num_scalar_prefetch=0,
            grid=(N, n_bands),
            in_specs=in_specs,
            out_specs=out_spec,
            scratch_shapes=scratch),
        compiler_params=pltpu.CompilerParams(
            dimension_semantics=("parallel", "arbitrary"),
            vmem_limit_bytes=int(budget)),
        cost_estimate=cost,
    )(x_arg, w_mat, bias_col)

    out = out.reshape(N, Cout, Hpad, W)
    if Hpad > H:
        out = out[:, :, :H, :]
    return out


# ---------------------------------------------------------------------------
# Demo / correctness check
# ---------------------------------------------------------------------------

if __name__ == "__main__":
    N, Cin, Cout, H, W = 2, 4, 8, 16, 16
    filter_size, dilation_rate = 3, 1

    key = jax.random.PRNGKey(0)
    kx, kw_, kb = jax.random.split(key, 3)
    x = jax.random.normal(kx, (N, Cin, H, W), dtype=jnp.float32)
    weight = jax.random.normal(kw_, (Cout, Cin, filter_size, filter_size),
                               dtype=jnp.float32) * 0.1
    bias = jax.random.normal(kb, (Cout,), dtype=jnp.float32) * 0.1

    # XLA reference: reflection pad + dilated VALID conv (f32).
    pad = dilation_rate * (filter_size - 1) // 2
    xp_ref = jnp.pad(x, ((0, 0), (0, 0), (pad, pad), (pad, pad)), mode="reflect")
    ref = lax.conv_general_dilated(
        xp_ref, weight, window_strides=(1, 1), padding="VALID",
        rhs_dilation=(dilation_rate, dilation_rate),
        dimension_numbers=("NCHW", "OIHW", "NCHW"),
    ) + bias.reshape(1, Cout, 1, 1)

    def run(**kw):
        fwd = jax.jit(functools.partial(cnn_layer_plain_forward,
                                        filter_size=filter_size,
                                        dilation_rate=dilation_rate, **kw))
        return jax.block_until_ready(fwd(x, weight, bias))

    # 1) Default bf16 MXU path (f32 accumulation): tolerance vs the f32
    #    reference is relaxed to cover bf16 operand rounding (expected, not a bug).
    out_bf16 = run()
    assert out_bf16.shape == (N, Cout, H, W)
    assert jnp.allclose(out_bf16, ref, atol=5e-2, rtol=5e-2)

    # 2) f32 path, single band per image (BlockSpec-pipelined variant).
    out_f32 = run(compute_dtype=jnp.float32)
    assert jnp.allclose(out_f32, ref, atol=1e-4, rtol=1e-4)

    # 3) f32 path, forced 2 row-bands per image (manual halo-DMA variant).
    out_banded = run(compute_dtype=jnp.float32, max_band_rows=8)
    assert jnp.allclose(out_banded, ref, atol=1e-4, rtol=1e-4)

    print("KERNEL_OK")
</pallas_src>

<mosaic_0001>
module attributes {stable_mosaic.version = 11 : i64} {
  func.func @_conv_band_kernel(%arg0: i32, %arg1: i32, %arg2: memref<1x18x18x4xbf16, #tpu.memory_space<vmem>>, %arg3: memref<8x36xbf16, #tpu.memory_space<vmem>>, %arg4: memref<8x1xf32, #tpu.memory_space<vmem>>, %arg5: memref<1x8x256xf32, #tpu.memory_space<vmem>>, %arg6: memref<256x36xbf16, #tpu.memory_space<vmem>>) attributes {dimension_semantics = [#tpu.dimension_semantics<parallel>, #tpu.dimension_semantics<arbitrary>], iteration_bounds = array<i64: 2, 1>, scalar_prefetch = 0 : i64, scratch_operands = 1 : i64, tpu.core_type = #tpu.core_type<tc>, window_params = [{transform_indices = @transform_0, window_bounds = array<i64: 1, 18, 18, 4>}, {pipeline_mode = #tpu.pipeline_mode<synchronous>, transform_indices = @transform_1, window_bounds = array<i64: 8, 36>}, {pipeline_mode = #tpu.pipeline_mode<synchronous>, transform_indices = @transform_2, window_bounds = array<i64: 8, 1>}, {transform_indices = @transform_3, window_bounds = array<i64: 1, 8, 256>}]} {
    %c0 = arith.constant 0 : index
    %c0_0 = arith.constant 0 : index
    %c0_1 = arith.constant 0 : index
    %c0_2 = arith.constant 0 : index
    %0 = vector.load %arg2[%c0, %c0_0, %c0_1, %c0_2] : memref<1x18x18x4xbf16, #tpu.memory_space<vmem>>, vector<1x16x16x4xbf16>
    %1 = vector.shape_cast %0 : vector<1x16x16x4xbf16> to vector<16x16x4xbf16>
    %2 = vector.shape_cast %1 : vector<16x16x4xbf16> to vector<256x4xbf16>
    %c0_3 = arith.constant 0 : index
    %c0_4 = arith.constant 0 : index
    %3 = vector.load %arg6[%c0_3, %c0_4] : memref<256x36xbf16, #tpu.memory_space<vmem>>, vector<256x4xbf16>
    tpu.vector_store %arg6[%c0_3, %c0_4], %2 {strides = array<i32>} : memref<256x36xbf16, #tpu.memory_space<vmem>>, vector<256x4xbf16>,
    %c0_5 = arith.constant 0 : index
    %c0_6 = arith.constant 0 : index
    %c1 = arith.constant 1 : index
    %c0_7 = arith.constant 0 : index
    %4 = vector.load %arg2[%c0_5, %c0_6, %c1, %c0_7] : memref<1x18x18x4xbf16, #tpu.memory_space<vmem>>, vector<1x16x16x4xbf16>
    %5 = vector.shape_cast %4 : vector<1x16x16x4xbf16> to vector<16x16x4xbf16>
    %6 = vector.shape_cast %5 : vector<16x16x4xbf16> to vector<256x4xbf16>
    %c0_8 = arith.constant 0 : index
    %c4 = arith.constant 4 : index
    %7 = vector.load %arg6[%c0_8, %c4] : memref<256x36xbf16, #tpu.memory_space<vmem>>, vector<256x4xbf16>
    tpu.vector_store %arg6[%c0_8, %c4], %6 {strides = array<i32>} : memref<256x36xbf16, #tpu.memory_space<vmem>>, vector<256x4xbf16>,
    %c0_9 = arith.constant 0 : index
    %c0_10 = arith.constant 0 : index
    %c2 = arith.constant 2 : index
    %c0_11 = arith.constant 0 : index
    %8 = vector.load %arg2[%c0_9, %c0_10, %c2, %c0_11] : memref<1x18x18x4xbf16, #tpu.memory_space<vmem>>, vector<1x16x16x4xbf16>
    %9 = vector.shape_cast %8 : vector<1x16x16x4xbf16> to vector<16x16x4xbf16>
    %10 = vector.shape_cast %9 : vector<16x16x4xbf16> to vector<256x4xbf16>
    %c0_12 = arith.constant 0 : index
    %c8 = arith.constant 8 : index
    %11 = vector.load %arg6[%c0_12, %c8] : memref<256x36xbf16, #tpu.memory_space<vmem>>, vector<256x4xbf16>
    tpu.vector_store %arg6[%c0_12, %c8], %10 {strides = array<i32>} : memref<256x36xbf16, #tpu.memory_space<vmem>>, vector<256x4xbf16>,
    %c0_13 = arith.constant 0 : index
    %c1_14 = arith.constant 1 : index
    %c0_15 = arith.constant 0 : index
    %c0_16 = arith.constant 0 : index
    %12 = vector.load %arg2[%c0_13, %c1_14, %c0_15, %c0_16] : memref<1x18x18x4xbf16, #tpu.memory_space<vmem>>, vector<1x16x16x4xbf16>
    %13 = vector.shape_cast %12 : vector<1x16x16x4xbf16> to vector<16x16x4xbf16>
    %14 = vector.shape_cast %13 : vector<16x16x4xbf16> to vector<256x4xbf16>
    %c0_17 = arith.constant 0 : index
    %c12 = arith.constant 12 : index
    %15 = vector.load %arg6[%c0_17, %c12] : memref<256x36xbf16, #tpu.memory_space<vmem>>, vector<256x4xbf16>
    tpu.vector_store %arg6[%c0_17, %c12], %14 {strides = array<i32>} : memref<256x36xbf16, #tpu.memory_space<vmem>>, vector<256x4xbf16>,
    %c0_18 = arith.constant 0 : index
    %c1_19 = arith.constant 1 : index
    %c1_20 = arith.constant 1 : index
    %c0_21 = arith.constant 0 : index
    %16 = vector.load %arg2[%c0_18, %c1_19, %c1_20, %c0_21] : memref<1x18x18x4xbf16, #tpu.memory_space<vmem>>, vector<1x16x16x4xbf16>
    %17 = vector.shape_cast %16 : vector<1x16x16x4xbf16> to vector<16x16x4xbf16>
    %18 = vector.shape_cast %17 : vector<16x16x4xbf16> to vector<256x4xbf16>
    %c0_22 = arith.constant 0 : index
    %c16 = arith.constant 16 : index
    %19 = vector.load %arg6[%c0_22, %c16] : memref<256x36xbf16, #tpu.memory_space<vmem>>, vector<256x4xbf16>
    tpu.vector_store %arg6[%c0_22, %c16], %18 {strides = array<i32>} : memref<256x36xbf16, #tpu.memory_space<vmem>>, vector<256x4xbf16>,
    %c0_23 = arith.constant 0 : index
    %c1_24 = arith.constant 1 : index
    %c2_25 = arith.constant 2 : index
    %c0_26 = arith.constant 0 : index
    %20 = vector.load %arg2[%c0_23, %c1_24, %c2_25, %c0_26] : memref<1x18x18x4xbf16, #tpu.memory_space<vmem>>, vector<1x16x16x4xbf16>
    %21 = vector.shape_cast %20 : vector<1x16x16x4xbf16> to vector<16x16x4xbf16>
    %22 = vector.shape_cast %21 : vector<16x16x4xbf16> to vector<256x4xbf16>
    %c0_27 = arith.constant 0 : index
    %c20 = arith.constant 20 : index
    %23 = vector.load %arg6[%c0_27, %c20] : memref<256x36xbf16, #tpu.memory_space<vmem>>, vector<256x4xbf16>
    tpu.vector_store %arg6[%c0_27, %c20], %22 {strides = array<i32>} : memref<256x36xbf16, #tpu.memory_space<vmem>>, vector<256x4xbf16>,
    %c0_28 = arith.constant 0 : index
    %c2_29 = arith.constant 2 : index
    %c0_30 = arith.constant 0 : index
    %c0_31 = arith.constant 0 : index
    %24 = vector.load %arg2[%c0_28, %c2_29, %c0_30, %c0_31] : memref<1x18x18x4xbf16, #tpu.memory_space<vmem>>, vector<1x16x16x4xbf16>
    %25 = vector.shape_cast %24 : vector<1x16x16x4xbf16> to vector<16x16x4xbf16>
    %26 = vector.shape_cast %25 : vector<16x16x4xbf16> to vector<256x4xbf16>
    %c0_32 = arith.constant 0 : index
    %c24 = arith.constant 24 : index
    %27 = vector.load %arg6[%c0_32, %c24] : memref<256x36xbf16, #tpu.memory_space<vmem>>, vector<256x4xbf16>
    tpu.vector_store %arg6[%c0_32, %c24], %26 {strides = array<i32>} : memref<256x36xbf16, #tpu.memory_space<vmem>>, vector<256x4xbf16>,
    %c0_33 = arith.constant 0 : index
    %c2_34 = arith.constant 2 : index
    %c1_35 = arith.constant 1 : index
    %c0_36 = arith.constant 0 : index
    %28 = vector.load %arg2[%c0_33, %c2_34, %c1_35, %c0_36] : memref<1x18x18x4xbf16, #tpu.memory_space<vmem>>, vector<1x16x16x4xbf16>
    %29 = vector.shape_cast %28 : vector<1x16x16x4xbf16> to vector<16x16x4xbf16>
    %30 = vector.shape_cast %29 : vector<16x16x4xbf16> to vector<256x4xbf16>
    %c0_37 = arith.constant 0 : index
    %c28 = arith.constant 28 : index
    %31 = vector.load %arg6[%c0_37, %c28] : memref<256x36xbf16, #tpu.memory_space<vmem>>, vector<256x4xbf16>
    tpu.vector_store %arg6[%c0_37, %c28], %30 {strides = array<i32>} : memref<256x36xbf16, #tpu.memory_space<vmem>>, vector<256x4xbf16>,
    %c0_38 = arith.constant 0 : index
    %c2_39 = arith.constant 2 : index
    %c2_40 = arith.constant 2 : index
    %c0_41 = arith.constant 0 : index
    %32 = vector.load %arg2[%c0_38, %c2_39, %c2_40, %c0_41] : memref<1x18x18x4xbf16, #tpu.memory_space<vmem>>, vector<1x16x16x4xbf16>
    %33 = vector.shape_cast %32 : vector<1x16x16x4xbf16> to vector<16x16x4xbf16>
    %34 = vector.shape_cast %33 : vector<16x16x4xbf16> to vector<256x4xbf16>
    %c0_42 = arith.constant 0 : index
    %c32 = arith.constant 32 : index
    %35 = vector.load %arg6[%c0_42, %c32] : memref<256x36xbf16, #tpu.memory_space<vmem>>, vector<256x4xbf16>
    tpu.vector_store %arg6[%c0_42, %c32], %34 {strides = array<i32>} : memref<256x36xbf16, #tpu.memory_space<vmem>>, vector<256x4xbf16>,
    %c0_43 = arith.constant 0 : index
    %c0_44 = arith.constant 0 : index
    %36 = vector.load %arg3[%c0_43, %c0_44] : memref<8x36xbf16, #tpu.memory_space<vmem>>, vector<8x36xbf16>
    %c0_45 = arith.constant 0 : index
    %c0_46 = arith.constant 0 : index
    %37 = vector.load %arg6[%c0_45, %c0_46] : memref<256x36xbf16, #tpu.memory_space<vmem>>, vector<256x36xbf16>
    %cst = arith.constant dense<0.000000e+00> : vector<8x256xf32>
    %38 = tpu.matmul %36, %37, %cst {dimension_numbers = #tpu.dot_dimension_numbers<[1], [1], [0], [0], [0, 0, 1, 0], [], []>} : vector<8x36xbf16>, vector<256x36xbf16>, vector<8x256xf32> -> vector<8x256xf32>
    %c0_47 = arith.constant 0 : index
    %c0_48 = arith.constant 0 : index
    %39 = vector.load %arg4[%c0_47, %c0_48] : memref<8x1xf32, #tpu.memory_space<vmem>>, vector<8x1xf32>
    %40 = vector.broadcast %39 : vector<8x1xf32> to vector<8x256xf32>
    %41 = arith.addf %38, %40 : vector<8x256xf32>
    %c0_49 = arith.constant 0 : index
    %c0_50 = arith.constant 0 : index
    %c0_51 = arith.constant 0 : index
    %42 = vector.load %arg5[%c0_49, %c0_50, %c0_51] : memref<1x8x256xf32, #tpu.memory_space<vmem>>, vector<1x8x256xf32>
    %43 = vector.shape_cast %42 : vector<1x8x256xf32> to vector<8x256xf32>
    %44 = vector.shape_cast %41 : vector<8x256xf32> to vector<1x8x256xf32>
    tpu.vector_store %arg5[%c0_49, %c0_50, %c0_51], %44 {strides = array<i32>} : memref<1x8x256xf32, #tpu.memory_space<vmem>>, vector<1x8x256xf32>,
    return
  }
  func.func @transform_0(%arg0: i32, %arg1: i32) -> (i32, i32, i32, i32) {
    %c0_i32 = arith.constant 0 : i32
    %c0_i32_0 = arith.constant 0 : i32
    %c0_i32_1 = arith.constant 0 : i32
    %c0_i32_2 = arith.constant 0 : i32
    return %arg0, %c0_i32, %c0_i32_0, %c0_i32_1 : i32, i32, i32, i32
  }
  func.func @transform_1(%arg0: i32, %arg1: i32) -> (i32, i32) {
    %c0_i32 = arith.constant 0 : i32
    %c0_i32_0 = arith.constant 0 : i32
    %c0_i32_1 = arith.constant 0 : i32
    return %c0_i32, %c0_i32_0 : i32, i32
  }
  func.func @transform_2(%arg0: i32, %arg1: i32) -> (i32, i32) {
    %c0_i32 = arith.constant 0 : i32
    %c0_i32_0 = arith.constant 0 : i32
    %c0_i32_1 = arith.constant 0 : i32
    return %c0_i32, %c0_i32_0 : i32, i32
  }
  func.func @transform_3(%arg0: i32, %arg1: i32) -> (i32, i32, i32) {
    %c0_i32 = arith.constant 0 : i32
    %c0_i32_0 = arith.constant 0 : i32
    return %arg0, %c0_i32, %arg1 : i32, i32, i32
  }
}

</mosaic_0001>

<llo_original>
// kernel: cnn_layer_plain_forward.1
$region0: #{cnn_layer_plain_forward.1}
  #allocation0 [shape = 'u32[]', space=smem, size = 0x4, offset = 0x4, fixed_abs, tag = 'smem constant byte address 0x4 - core index']
  #allocation1 [shape = 'u32[144,128]{1,0:T(1,128)}', space=vmem, size = 0x12000, scoped, tag = 'internal scratch']
  #allocation2 [shape = 'bf16[256,36]{1,0:T(8,128)(2,1)}', space=vmem, size = 0x10000, scoped, tag = 'scratch operand']
  %s0 = inlined_call_operand.vmem [shape: bf16[2,18,18,4], index: 0, kind: input, shape index: {}]
  %s1 = inlined_call_operand.vmem [shape: bf16[8,36], index: 1, kind: input, shape index: {}]
  %s2 = inlined_call_operand.vmem [shape: f32[8,1], index: 2, kind: input, shape index: {}]
  %s3 = inlined_call_operand.vmem [shape: f32[2,8,256], index: 3, kind: output, shape index: {}]
  %s4 = sld [smem:[#allocation0]]
  $region45: #{cnn_layer_plain_forward.1} parent=0
    _
  %s6 = ssub.s32 1, %s4
  %s7 = scalar_select 0, %s6, %s4
  loop: start=0, step=1, limit=4
  $region2: #{cnn_layer_plain_forward.1} parent=0 // loop_pre_header
    _
  $region3: #{cnn_layer_plain_forward.1} parent=0 // loop_header
    %s9 = sphi 0, %s13
    %p10 = scmp.ge.s32.totalorder %s9, 4
    %s16 = sphi 0, %s28
    %s17 = sphi 0, %s24
    %s18 = sphi 0, %s16
    %s19 = sphi 0, %s17
    %s20 = sphi 0, %s18
    %s21 = sphi 0, %s19
    %s31 = sphi 0, %s33
    %s34 = sphi 0, %s31
    %s35 = sphi 0, %s34
    %s51 = sphi 0, %s35
    %s55 = sphi 0, %s55
    %s57 = sphi 0, %s55
    %s58 = sphi 0, %s57
    %s72 = sphi 0, %s58
    %s76 = sphi 0, %s76
    %s78 = sphi 0, %s76
    %s79 = sphi 0, %s78
    %s93 = sphi 0, %s79
    %s101 = sphi 0, %s103
    %s104 = sphi 0, %s101
    %s105 = sphi 0, %s104
    %s121 = sphi 0, %s105
  $region4: #{cnn_layer_plain_forward.1} parent=0 // loop_header_branch
    %12 = sbr.rel (%p10) target = $region8
  $region5: #{cnn_layer_plain_forward.1} parent=0 // loop_body
    %s14 = ssub.s32 %s9, 1
    %s15 = ssub.s32 %s9, 2
    %s22 = sadd.s32 1, %s17
    %p23 = scmp.ge.s32.totalorder %s22, 1
    %s24 = scalar_select %p23, 0, %s22
    %s25 = sadd.s32 1, %s16
    %s26 = scalar_select %p23, %s25, %s16
    %p27 = scmp.ge.s32.totalorder %s26, 2
    %s28 = scalar_select %p27, 0, %s26
    %s29 = ssub.s32 %s16, %s28
    %p30 = scmp.eq.s32.totalorder %s29, 0
    %s32 = sadd.s32 %s31, 1
    %s33 = scalar_select %p30, %s31, %s32
    %p36 = pneg %p30
    %p37 = scmp.eq.s32.totalorder %s9, 1
    %p38 = por %p36, %p37
    %p39 = scmp.ne.s32.totalorder %s31, %s34
    %p40 = scmp.eq.s32.totalorder %s9, 0
    %p41 = por %p39, %p40
    %p42 = scmp.ne.s32.totalorder %s31, %s34
    %p43 = scmp.eq.s32.totalorder %s14, 1
    %p44 = por %p42, %p43
    %p45 = scmp.ne.s32.totalorder %s34, %s35
    %p46 = scmp.eq.s32.totalorder %s14, 0
    %p47 = por %p45, %p46
    %p48 = scmp.ne.s32.totalorder %s34, %s35
    %p49 = scmp.eq.s32.totalorder %s15, 1
    %p50 = por %p48, %p49
    %p52 = scmp.ne.s32.totalorder %s35, %s51
    %p53 = scmp.eq.s32.totalorder %s15, 0
    %p54 = por %p52, %p53
    %s56 = sadd.s32 %s55, 1
    %p59 = scmp.eq.s32.totalorder %s9, 1
    %p60 = scmp.ne.s32.totalorder %s55, %s57
    %p61 = scmp.eq.s32.totalorder %s9, 0
    %p62 = por %p60, %p61
    %p63 = scmp.ne.s32.totalorder %s55, %s57
    %p64 = scmp.eq.s32.totalorder %s14, 1
    %p65 = por %p63, %p64
    %p66 = scmp.ne.s32.totalorder %s57, %s58
    %p67 = scmp.eq.s32.totalorder %s14, 0
    %p68 = por %p66, %p67
    %p69 = scmp.ne.s32.totalorder %s57, %s58
    %p70 = scmp.eq.s32.totalorder %s15, 1
    %p71 = por %p69, %p70
    %p73 = scmp.ne.s32.totalorder %s58, %s72
    %p74 = scmp.eq.s32.totalorder %s15, 0
    %p75 = por %p73, %p74
    %s77 = sadd.s32 %s76, 1
    %p80 = scmp.eq.s32.totalorder %s9, 1
    %p81 = scmp.ne.s32.totalorder %s76, %s78
    %p82 = scmp.eq.s32.totalorder %s9, 0
    %p83 = por %p81, %p82
    %p84 = scmp.ne.s32.totalorder %s76, %s78
    %p85 = scmp.eq.s32.totalorder %s14, 1
    %p86 = por %p84, %p85
    %p87 = scmp.ne.s32.totalorder %s78, %s79
    %p88 = scmp.eq.s32.totalorder %s14, 0
    %p89 = por %p87, %p88
    %p90 = scmp.ne.s32.totalorder %s78, %s79
    %p91 = scmp.eq.s32.totalorder %s15, 1
    %p92 = por %p90, %p91
    %p94 = scmp.ne.s32.totalorder %s79, %s93
    %p95 = scmp.eq.s32.totalorder %s15, 0
    %p96 = por %p94, %p95
    %s97 = ssub.s32 %s16, %s28
    %s98 = ssub.s32 %s17, %s24
    %s99 = sor.u32 %s97, %s98
    %p100 = scmp.eq.s32.totalorder %s99, 0
    %s102 = sadd.s32 %s101, 1
    %s103 = scalar_select %p100, %s101, %s102
    %p106 = pneg %p100
    %p107 = scmp.eq.s32.totalorder %s9, 1
    %p108 = por %p106, %p107
    %p109 = scmp.ne.s32.totalorder %s101, %s104
    %p110 = scmp.eq.s32.totalorder %s9, 0
    %p111 = por %p109, %p110
    %p112 = scmp.ne.s32.totalorder %s101, %s104
    %p113 = scmp.eq.s32.totalorder %s14, 1
    %p114 = por %p112, %p113
    %p115 = scmp.ne.s32.totalorder %s104, %s105
    %p116 = scmp.eq.s32.totalorder %s14, 0
    %p117 = por %p115, %p116
    %p118 = scmp.ne.s32.totalorder %s104, %s105
    %p119 = scmp.eq.s32.totalorder %s15, 1
    %p120 = por %p118, %p119
    %p122 = scmp.ne.s32.totalorder %s105, %s121
    %p123 = scmp.eq.s32.totalorder %s15, 0
    %p124 = por %p122, %p123
    %p125 = scmp.le.s32.totalorder 1, %s9
    %p126 = scmp.lt.s32.totalorder %s9, 3
    %p127 = pnand %p125, %p126
    %p128 = pneg %p127
    // Predicated region
    $region9: #{cnn_layer_plain_forward.1} parent=5 // pred_check
      _
    $region10: #{cnn_layer_plain_forward.1} parent=5 // pred_check_branch
      %130 = sbr.rel (%p127) target = $region12
    $region11: #{cnn_layer_plain_forward.1} parent=5 // pred_region
      %s131 = ssub.s32 %s9, 1
      // Predicated region
      $region13: #{cnn_layer_plain_forward.1} parent=11 // pred_check
        %p132 = pneg %p68
      $region14: #{cnn_layer_plain_forward.1} parent=11 // pred_check_branch
        %134 = sbr.rel (%p132) target = $region16
      $region15: #{cnn_layer_plain_forward.1} parent=11 // pred_region
        _
      $region16: #{cnn_layer_plain_forward.1} parent=11 // pred_fallthru
        _
      // Predicated region
      $region17: #{cnn_layer_plain_forward.1} parent=11 // pred_check
        %p135 = pneg %p89
      $region18: #{cnn_layer_plain_forward.1} parent=11 // pred_check_branch
        %137 = sbr.rel (%p135) target = $region20
      $region19: #{cnn_layer_plain_forward.1} parent=11 // pred_region
        _
      $region20: #{cnn_layer_plain_forward.1} parent=11 // pred_fallthru
        _
    $region12: #{cnn_layer_plain_forward.1} parent=5 // pred_fallthru
      _
    %p138 = scmp.lt.s32.totalorder %s9, 2
    // Predicated region
    $region21: #{cnn_layer_plain_forward.1} parent=5 // pred_check
      %p139 = pneg %p138
    $region22: #{cnn_layer_plain_forward.1} parent=5 // pred_check_branch
      %141 = sbr.rel (%p139) target = $region24
    $region23: #{cnn_layer_plain_forward.1} parent=5 // pred_region
      // Predicated region
      $region25: #{cnn_layer_plain_forward.1} parent=23 // pred_check
        %p142 = pneg %p41
      $region26: #{cnn_layer_plain_forward.1} parent=23 // pred_check_branch
        %144 = sbr.rel (%p142) target = $region28
      $region27: #{cnn_layer_plain_forward.1} parent=23 // pred_region
        %p145 = scmp.lt.s32.totalorder %s16, 1
        %s146 = scalar_select %p145, %s16, 1
        %s147 = smul.addr %s146, 54
        %s148 = smul.addr %s147, 4
        %s149 = scalar_lea.vmem %s0, %s148
      $region28: #{cnn_layer_plain_forward.1} parent=23 // pred_fallthru
        _
    $region24: #{cnn_layer_plain_forward.1} parent=5 // pred_fallthru
      _
    %p150 = scmp.le.s32.totalorder 1, %s9
    %p151 = scmp.lt.s32.totalorder %s9, 3
    %p152 = pnand %p150, %p151
    %p153 = pneg %p152
    // Predicated region
    $region29: #{cnn_layer_plain_forward.1} parent=5 // pred_check
      _
    $region30: #{cnn_layer_plain_forward.1} parent=5 // pred_check_branch
      %155 = sbr.rel (%p152) target = $region32
    $region31: #{cnn_layer_plain_forward.1} parent=5 // pred_region
      %s156 = ssub.s32 %s9, 1
      %p157 = scmp.lt.s32.totalorder %s18, 1
      %s158 = scalar_select %p157, %s18, 1
      %s159 = smul.addr %s158, 54
      %s160 = smul.addr %s159, 4
      %s161 = scalar_lea.vmem %s0, %s160
      %p162 = pneg %p47
      %p163 = pneg %p44
      %p164 = pneg %p68
      %p165 = pneg %p65
      %p166 = pneg %p89
      %p167 = pneg %p86
      %p168 = pneg %p117
      %p169 = pneg %p114
      %s170 = smul.u32 2, %s19
      %p171 = scmp.lt.s32.totalorder %s18, 1
      %s172 = scalar_select %p171, %s18, 1
      %p173 = scmp.lt.s32.totalorder %s170, 1
      %s174 = scalar_select %p173, %s170, 1
      %s175 = smul.addr %s172, 2
      %s176 = sadd.s32 %s174, %s175
      %s177 = smul.addr %s176, 8
      %s178 = scalar_lea.vmem %s3, %s177
      %p179 = scmp.lt.s32.totalorder %s18, 1
      %s180 = scalar_select %p179, %s18, 1
      %s181 = smul.addr %s180, 54
      %s182 = smul.addr %s181, 4
      %s183 = scalar_lea.vmem %s0, %s182
      %s184 = smul.u32 2, %s19
      %p185 = scmp.lt.s32.totalorder %s18, 1
      %s186 = scalar_select %p185, %s18, 1
      %p187 = scmp.lt.s32.totalorder %s184, 1
      %s188 = scalar_select %p187, %s184, 1
      %s189 = smul.addr %s186, 2
      %s190 = sadd.s32 %s188, %s189
      %s191 = smul.addr %s190, 8
      %s192 = scalar_lea.vmem %s3, %s191
      %s193 = smul.u32 2, %s19
      %v195 = vld [vmem:[%s183] sm:$0xf]
      %v196 = vld [vmem:[%s183 + $0x4] sm:$0xf]
      %v197 = vld [vmem:[%s183 + $0xc] sm:$0xf]
      %v198 = vld [vmem:[%s183 + $0x10] sm:$0xf]
      %v199 = vld [vmem:[%s183 + $0x18] sm:$0xf]
      %v200 = vld [vmem:[%s183 + $0x1c] sm:$0xf]
      %v201 = vld [vmem:[%s183 + $0x24] sm:$0xf]
      %v202 = vld [vmem:[%s183 + $0x28] sm:$0xf]
      %v203 = vld [vmem:[%s183 + $0x30] sm:$0xf]
      %v204 = vld [vmem:[%s183 + $0x34] sm:$0xf]
      %v205 = vld [vmem:[%s183 + $0x3c] sm:$0xf]
      %v206 = vld [vmem:[%s183 + $0x40] sm:$0xf]
      %v207 = vld [vmem:[%s183 + $0x48] sm:$0xf]
      %v208 = vld [vmem:[%s183 + $0x4c] sm:$0xf]
      %v209 = vld [vmem:[%s183 + $0x54] sm:$0xf]
      %v210 = vld [vmem:[%s183 + $0x58] sm:$0xf]
      %v211 = vld [vmem:[%s183 + $0x60] sm:$0xf]
      %v212 = vld [vmem:[%s183 + $0x64] sm:$0xf]
      %v213 = vld [vmem:[%s183 + $0x6c] sm:$0xf]
      %v214 = vld [vmem:[%s183 + $0x70] sm:$0xf]
      %v215 = vld [vmem:[%s183 + $0x78] sm:$0xf]
      %v216 = vld [vmem:[%s183 + $0x7c] sm:$0xf]
      %v217 = vld [vmem:[%s183 + $0x84] sm:$0xf]
      %v218 = vld [vmem:[%s183 + $0x88] sm:$0xf]
      %v219 = vld [vmem:[%s183 + $0x90] sm:$0xf]
      %v220 = vld [vmem:[%s183 + $0x94] sm:$0xf]
      %v221 = vld [vmem:[%s183 + $0x9c] sm:$0xf]
      %v222 = vld [vmem:[%s183 + $0xa0] sm:$0xf]
      %v223 = vld [vmem:[%s183 + $0xa8] sm:$0xf]
      %v224 = vld [vmem:[%s183 + $0xac] sm:$0xf]
      %v225 = vld [vmem:[%s183 + $0xb4] sm:$0xf]
      %v226 = vld [vmem:[%s183 + $0xb8] sm:$0xf]
      %vm227 = vcmask 27648
      %228 = vst.msk [vmem:[#allocation2] sm:$0xf] %vm227, %v195
      %229 = vst.msk [vmem:[#allocation2 + $0x4] sm:$0xf] %vm227, %v196
      %230 = vst.msk [vmem:[#allocation2 + $0x8] sm:$0xf] %vm227, %v197
      %231 = vst.msk [vmem:[#allocation2 + $0xc] sm:$0xf] %vm227, %v198
      %232 = vst.msk [vmem:[#allocation2 + $0x10] sm:$0xf] %vm227, %v199
      %233 = vst.msk [vmem:[#allocation2 + $0x14] sm:$0xf] %vm227, %v200
      %234 = vst.msk [vmem:[#allocation2 + $0x18] sm:$0xf] %vm227, %v201
      %235 = vst.msk [vmem:[#allocation2 + $0x1c] sm:$0xf] %vm227, %v202
      %236 = vst.msk [vmem:[#allocation2 + $0x20] sm:$0xf] %vm227, %v203
      %237 = vst.msk [vmem:[#allocation2 + $0x24] sm:$0xf] %vm227, %v204
      %238 = vst.msk [vmem:[#allocation2 + $0x28] sm:$0xf] %vm227, %v205
      %239 = vst.msk [vmem:[#allocation2 + $0x2c] sm:$0xf] %vm227, %v206
      %240 = vst.msk [vmem:[#allocation2 + $0x30] sm:$0xf] %vm227, %v207
      %241 = vst.msk [vmem:[#allocation2 + $0x34] sm:$0xf] %vm227, %v208
      %242 = vst.msk [vmem:[#allocation2 + $0x38] sm:$0xf] %vm227, %v209
      %243 = vst.msk [vmem:[#allocation2 + $0x3c] sm:$0xf] %vm227, %v210
      %244 = vst.msk [vmem:[#allocation2 + $0x40] sm:$0xf] %vm227, %v211
      %245 = vst.msk [vmem:[#allocation2 + $0x44] sm:$0xf] %vm227, %v212
      %246 = vst.msk [vmem:[#allocation2 + $0x48] sm:$0xf] %vm227, %v213
      %247 = vst.msk [vmem:[#allocation2 + $0x4c] sm:$0xf] %vm227, %v214
      %248 = vst.msk [vmem:[#allocation2 + $0x50] sm:$0xf] %vm227, %v215
      %249 = vst.msk [vmem:[#allocation2 + $0x54] sm:$0xf] %vm227, %v216
      %250 = vst.msk [vmem:[#allocation2 + $0x58] sm:$0xf] %vm227, %v217
      %251 = vst.msk [vmem:[#allocation2 + $0x5c] sm:$0xf] %vm227, %v218
      %252 = vst.msk [vmem:[#allocation2 + $0x60] sm:$0xf] %vm227, %v219
      %253 = vst.msk [vmem:[#allocation2 + $0x64] sm:$0xf] %vm227, %v220
      %254 = vst.msk [vmem:[#allocation2 + $0x68] sm:$0xf] %vm227, %v221
      %255 = vst.msk [vmem:[#allocation2 + $0x6c] sm:$0xf] %vm227, %v222
      %256 = vst.msk [vmem:[#allocation2 + $0x70] sm:$0xf] %vm227, %v223
      %257 = vst.msk [vmem:[#allocation2 + $0x74] sm:$0xf] %vm227, %v224
      %258 = vst.msk [vmem:[#allocation2 + $0x78] sm:$0xf] %vm227, %v225
      %259 = vst.msk [vmem:[#allocation2 + $0x7c] sm:$0xf] %vm227, %v226
      %v260 = vld [vmem:[%s183] sm:$0xf]
      %v261 = vld [vmem:[%s183 + $0x4] sm:$0xf]
      %v262 = vld [vmem:[%s183 + $0x8] sm:$0x1]
      %v263 = vld [vmem:[%s183 + $0xc] sm:$0xf]
      %v264 = vld [vmem:[%s183 + $0x10] sm:$0xf]
      %v265 = vld [vmem:[%s183 + $0x14] sm:$0x1]
      %v266 = vld [vmem:[%s183 + $0x18] sm:$0xf]
      %v267 = vld [vmem:[%s183 + $0x1c] sm:$0xf]
      %v268 = vld [vmem:[%s183 + $0x20] sm:$0x1]
      %v269 = vld [vmem:[%s183 + $0x24] sm:$0xf]
      %v270 = vld [vmem:[%s183 + $0x28] sm:$0xf]
      %v271 = vld [vmem:[%s183 + $0x2c] sm:$0x1]
      %v272 = vld [vmem:[%s183 + $0x30] sm:$0xf]
      %v273 = vld [vmem:[%s183 + $0x34] sm:$0xf]
      %v274 = vld [vmem:[%s183 + $0x38] sm:$0x1]
      %v275 = vld [vmem:[%s183 + $0x3c] sm:$0xf]
      %v276 = vld [vmem:[%s183 + $0x40] sm:$0xf]
      %v277 = vld [vmem:[%s183 + $0x44] sm:$0x1]
      %v278 = vld [vmem:[%s183 + $0x48] sm:$0xf]
      %v279 = vld [vmem:[%s183 + $0x4c] sm:$0xf]
      %v280 = vld [vmem:[%s183 + $0x50] sm:$0x1]
      %v281 = vld [vmem:[%s183 + $0x54] sm:$0xf]
      %v282 = vld [vmem:[%s183 + $0x58] sm:$0xf]
      %v283 = vld [vmem:[%s183 + $0x5c] sm:$0x1]
      %v284 = vld [vmem:[%s183 + $0x60] sm:$0xf]
      %v285 = vld [vmem:[%s183 + $0x64] sm:$0xf]
      %v286 = vld [vmem:[%s183 + $0x68] sm:$0x1]
      %v287 = vld [vmem:[%s183 + $0x6c] sm:$0xf]
      %v288 = vld [vmem:[%s183 + $0x70] sm:$0xf]
      %v289 = vld [vmem:[%s183 + $0x74] sm:$0x1]
      %v290 = vld [vmem:[%s183 + $0x78] sm:$0xf]
      %v291 = vld [vmem:[%s183 + $0x7c] sm:$0xf]
      %v292 = vld [vmem:[%s183 + $0x80] sm:$0x1]
      %v293 = vld [vmem:[%s183 + $0x84] sm:$0xf]
      %v294 = vld [vmem:[%s183 + $0x88] sm:$0xf]
      %v295 = vld [vmem:[%s183 + $0x8c] sm:$0x1]
      %v296 = vld [vmem:[%s183 + $0x90] sm:$0xf]
      %v297 = vld [vmem:[%s183 + $0x94] sm:$0xf]
      %v298 = vld [vmem:[%s183 + $0x98] sm:$0x1]
      %v299 = vld [vmem:[%s183 + $0x9c] sm:$0xf]
      %v300 = vld [vmem:[%s183 + $0xa0] sm:$0xf]
      %v301 = vld [vmem:[%s183 + $0xa4] sm:$0x1]
      %v302 = vld [vmem:[%s183 + $0xa8] sm:$0xf]
      %v303 = vld [vmem:[%s183 + $0xac] sm:$0xf]
      %v304 = vld [vmem:[%s183 + $0xb0] sm:$0x1]
      %v305 = vld [vmem:[%s183 + $0xb4] sm:$0xf]
      %v306 = vld [vmem:[%s183 + $0xb8] sm:$0xf]
      %v307 = vld [vmem:[%s183 + $0xbc] sm:$0x1]
      %vm308 = vsmask.f32 3328
      %vm309 = vsmask.f32 7440
      %vm310 = vmor %vm308, %vm309
      %v312 = vshrl.u32 %v260, 16
      %v314 = vrot.slane %v312, 4
      %v315 = vshll.u32 %v260, 16
      %v317 = vrot.slane %v315, 5
      %v318 = vor.u32 %v314, %v317
      %v319 = vrot.slane %v318, 4
      %v321 = vshll.u32 %v261, 16
      %v323 = vrot.slane %v321, 5
      %v324 = vsel %vm310, %v319, %v323
      %v325 = vshrl.u32 %v261, 16
      %v327 = vrot.slane %v325, 4
      %v328 = vor.u32 %v327, %v323
      %v329 = vrot.slane %v328, 4
      %v331 = vshll.u32 %v262, 16
      %v333 = vrot.slane %v331, 5
      %v334 = vsel %vm310, %v329, %v333
      %v336 = vshrl.u32 %v263, 16
      %v338 = vrot.slane %v336, 4
      %v339 = vshll.u32 %v263, 16
      %v341 = vrot.slane %v339, 5
      %v342 = vor.u32 %v338, %v341
      %v343 = vrot.slane %v342, 4
      %v345 = vshll.u32 %v264, 16
      %v347 = vrot.slane %v345, 5
      %v348 = vsel %vm310, %v343, %v347
      %v349 = vshrl.u32 %v264, 16
      %v351 = vrot.slane %v349, 4
      %v352 = vor.u32 %v351, %v347
      %v353 = vrot.slane %v352, 4
      %v355 = vshll.u32 %v265, 16
      %v357 = vrot.slane %v355, 5
      %v358 = vsel %vm310, %v353, %v357
      %v360 = vshrl.u32 %v266, 16
      %v362 = vrot.slane %v360, 4
      %v363 = vshll.u32 %v266, 16
      %v365 = vrot.slane %v363, 5
      %v366 = vor.u32 %v362, %v365
      %v367 = vrot.slane %v366, 4
      %v369 = vshll.u32 %v267, 16
      %v371 = vrot.slane %v369, 5
      %v372 = vsel %vm310, %v367, %v371
      %v373 = vshrl.u32 %v267, 16
      %v375 = vrot.slane %v373, 4
      %v376 = vor.u32 %v375, %v371
      %v377 = vrot.slane %v376, 4
      %v379 = vshll.u32 %v268, 16
      %v381 = vrot.slane %v379, 5
      %v382 = vsel %vm310, %v377, %v381
      %v384 = vshrl.u32 %v269, 16
      %v386 = vrot.slane %v384, 4
      %v387 = vshll.u32 %v269, 16
      %v389 = vrot.slane %v387, 5
      %v390 = vor.u32 %v386, %v389
      %v391 = vrot.slane %v390, 4
      %v393 = vshll.u32 %v270, 16
      %v395 = vrot.slane %v393, 5
      %v396 = vsel %vm310, %v391, %v395
      %v397 = vshrl.u32 %v270, 16
      %v399 = vrot.slane %v397, 4
      %v400 = vor.u32 %v399, %v395
      %v401 = vrot.slane %v400, 4
      %v403 = vshll.u32 %v271, 16
      %v405 = vrot.slane %v403, 5
      %v406 = vsel %vm310, %v401, %v405
      %v408 = vshrl.u32 %v272, 16
      %v410 = vrot.slane %v408, 4
      %v411 = vshll.u32 %v272, 16
      %v413 = vrot.slane %v411, 5
      %v414 = vor.u32 %v410, %v413
      %v415 = vrot.slane %v414, 4
      %v417 = vshll.u32 %v273, 16
      %v419 = vrot.slane %v417, 5
      %v420 = vsel %vm310, %v415, %v419
      %v421 = vshrl.u32 %v273, 16
      %v423 = vrot.slane %v421, 4
      %v424 = vor.u32 %v423, %v419
      %v425 = vrot.slane %v424, 4
      %v427 = vshll.u32 %v274, 16
      %v429 = vrot.slane %v427, 5
      %v430 = vsel %vm310, %v425, %v429
      %v432 = vshrl.u32 %v275, 16
      %v434 = vrot.slane %v432, 4
      %v435 = vshll.u32 %v275, 16
      %v437 = vrot.slane %v435, 5
      %v438 = vor.u32 %v434, %v437
      %v439 = vrot.slane %v438, 4
      %v441 = vshll.u32 %v276, 16
      %v443 = vrot.slane %v441, 5
      %v444 = vsel %vm310, %v439, %v443
      %v445 = vshrl.u32 %v276, 16
      %v447 = vrot.slane %v445, 4
      %v448 = vor.u32 %v447, %v443
      %v449 = vrot.slane %v448, 4
      %v451 = vshll.u32 %v277, 16
      %v453 = vrot.slane %v451, 5
      %v454 = vsel %vm310, %v449, %v453
      %v456 = vshrl.u32 %v278, 16
      %v458 = vrot.slane %v456, 4
      %v459 = vshll.u32 %v278, 16
      %v461 = vrot.slane %v459, 5
      %v462 = vor.u32 %v458, %v461
      %v463 = vrot.slane %v462, 4
      %v465 = vshll.u32 %v279, 16
      %v467 = vrot.slane %v465, 5
      %v468 = vsel %vm310, %v463, %v467
      %v469 = vshrl.u32 %v279, 16
      %v471 = vrot.slane %v469, 4
      %v472 = vor.u32 %v471, %v467
      %v473 = vrot.slane %v472, 4
      %v475 = vshll.u32 %v280, 16
      %v477 = vrot.slane %v475, 5
      %v478 = vsel %vm310, %v473, %v477
      %v480 = vshrl.u32 %v281, 16
      %v482 = vrot.slane %v480, 4
      %v483 = vshll.u32 %v281, 16
      %v485 = vrot.slane %v483, 5
      %v486 = vor.u32 %v482, %v485
      %v487 = vrot.slane %v486, 4
      %v489 = vshll.u32 %v282, 16
      %v491 = vrot.slane %v489, 5
      %v492 = vsel %vm310, %v487, %v491
      %v493 = vshrl.u32 %v282, 16
      %v495 = vrot.slane %v493, 4
      %v496 = vor.u32 %v495, %v491
      %v497 = vrot.slane %v496, 4
      %v499 = vshll.u32 %v283, 16
      %v501 = vrot.slane %v499, 5
      %v502 = vsel %vm310, %v497, %v501
      %v504 = vshrl.u32 %v284, 16
      %v506 = vrot.slane %v504, 4
      %v507 = vshll.u32 %v284, 16
      %v509 = vrot.slane %v507, 5
      %v510 = vor.u32 %v506, %v509
      %v511 = vrot.slane %v510, 4
      %v513 = vshll.u32 %v285, 16
      %v515 = vrot.slane %v513, 5
      %v516 = vsel %vm310, %v511, %v515
      %v517 = vshrl.u32 %v285, 16
      %v519 = vrot.slane %v517, 4
      %v520 = vor.u32 %v519, %v515
      %v521 = vrot.slane %v520, 4
      %v523 = vshll.u32 %v286, 16
      %v525 = vrot.slane %v523, 5
      %v526 = vsel %vm310, %v521, %v525
      %v528 = vshrl.u32 %v287, 16
      %v530 = vrot.slane %v528, 4
      %v531 = vshll.u32 %v287, 16
      %v533 = vrot.slane %v531, 5
      %v534 = vor.u32 %v530, %v533
      %v535 = vrot.slane %v534, 4
      %v537 = vshll.u32 %v288, 16
      %v539 = vrot.slane %v537, 5
      %v540 = vsel %vm310, %v535, %v539
      %v541 = vshrl.u32 %v288, 16
      %v543 = vrot.slane %v541, 4
      %v544 = vor.u32 %v543, %v539
      %v545 = vrot.slane %v544, 4
      %v547 = vshll.u32 %v289, 16
      %v549 = vrot.slane %v547, 5
      %v550 = vsel %vm310, %v545, %v549
      %v552 = vshrl.u32 %v290, 16
      %v554 = vrot.slane %v552, 4
      %v555 = vshll.u32 %v290, 16
      %v557 = vrot.slane %v555, 5
      %v558 = vor.u32 %v554, %v557
      %v559 = vrot.slane %v558, 4
      %v561 = vshll.u32 %v291, 16
      %v563 = vrot.slane %v561, 5
      %v564 = vsel %vm310, %v559, %v563
      %v565 = vshrl.u32 %v291, 16
      %v567 = vrot.slane %v565, 4
      %v568 = vor.u32 %v567, %v563
      %v569 = vrot.slane %v568, 4
      %v571 = vshll.u32 %v292, 16
      %v573 = vrot.slane %v571, 5
      %v574 = vsel %vm310, %v569, %v573
      %v576 = vshrl.u32 %v293, 16
      %v578 = vrot.slane %v576, 4
      %v579 = vshll.u32 %v293, 16
      %v581 = vrot.slane %v579, 5
      %v582 = vor.u32 %v578, %v581
      %v583 = vrot.slane %v582, 4
      %v585 = vshll.u32 %v294, 16
      %v587 = vrot.slane %v585, 5
      %v588 = vsel %vm310, %v583, %v587
      %v589 = vshrl.u32 %v294, 16
      %v591 = vrot.slane %v589, 4
      %v592 = vor.u32 %v591, %v587
      %v593 = vrot.slane %v592, 4
      %v595 = vshll.u32 %v295, 16
      %v597 = vrot.slane %v595, 5
      %v598 = vsel %vm310, %v593, %v597
      %v600 = vshrl.u32 %v296, 16
      %v602 = vrot.slane %v600, 4
      %v603 = vshll.u32 %v296, 16
      %v605 = vrot.slane %v603, 5
      %v606 = vor.u32 %v602, %v605
      %v607 = vrot.slane %v606, 4
      %v609 = vshll.u32 %v297, 16
      %v611 = vrot.slane %v609, 5
      %v612 = vsel %vm310, %v607, %v611
      %v613 = vshrl.u32 %v297, 16
      %v615 = vrot.slane %v613, 4
      %v616 = vor.u32 %v615, %v611
      %v617 = vrot.slane %v616, 4
      %v619 = vshll.u32 %v298, 16
      %v621 = vrot.slane %v619, 5
      %v622 = vsel %vm310, %v617, %v621
      %v624 = vshrl.u32 %v299, 16
      %v626 = vrot.slane %v624, 4
      %v627 = vshll.u32 %v299, 16
      %v629 = vrot.slane %v627, 5
      %v630 = vor.u32 %v626, %v629
      %v631 = vrot.slane %v630, 4
      %v633 = vshll.u32 %v300, 16
      %v635 = vrot.slane %v633, 5
      %v636 = vsel %vm310, %v631, %v635
      %v637 = vshrl.u32 %v300, 16
      %v639 = vrot.slane %v637, 4
      %v640 = vor.u32 %v639, %v635
      %v641 = vrot.slane %v640, 4
      %v643 = vshll.u32 %v301, 16
      %v645 = vrot.slane %v643, 5
      %v646 = vsel %vm310, %v641, %v645
      %v648 = vshrl.u32 %v302, 16
      %v650 = vrot.slane %v648, 4
      %v651 = vshll.u32 %v302, 16
      %v653 = vrot.slane %v651, 5
      %v654 = vor.u32 %v650, %v653
      %v655 = vrot.slane %v654, 4
      %v657 = vshll.u32 %v303, 16
      %v659 = vrot.slane %v657, 5
      %v660 = vsel %vm310, %v655, %v659
      %v661 = vshrl.u32 %v303, 16
      %v663 = vrot.slane %v661, 4
      %v664 = vor.u32 %v663, %v659
      %v665 = vrot.slane %v664, 4
      %v667 = vshll.u32 %v304, 16
      %v669 = vrot.slane %v667, 5
      %v670 = vsel %vm310, %v665, %v669
      %v672 = vshrl.u32 %v305, 16
      %v674 = vrot.slane %v672, 4
      %v675 = vshll.u32 %v305, 16
      %v677 = vrot.slane %v675, 5
      %v678 = vor.u32 %v674, %v677
      %v679 = vrot.slane %v678, 4
      %v681 = vshll.u32 %v306, 16
      %v683 = vrot.slane %v681, 5
      %v684 = vsel %vm310, %v679, %v683
      %v685 = vshrl.u32 %v306, 16
      %v687 = vrot.slane %v685, 4
      %v688 = vor.u32 %v687, %v683
      %v689 = vrot.slane %v688, 4
      %v691 = vshll.u32 %v307, 16
      %v693 = vrot.slane %v691, 5
      %v694 = vsel %vm310, %v689, %v693
      %695 = vrot.lane.b32.xlu0 %v324, 4
      %v696 = vpop.permute.xlu0 %695
      %697 = vrot.lane.b32.xlu0 %v334, 4
      %v698 = vpop.permute.xlu0 %697
      %699 = vrot.lane.b32.xlu0 %v348, 4
      %v700 = vpop.permute.xlu0 %699
      %701 = vrot.lane.b32.xlu0 %v358, 4
      %v702 = vpop.permute.xlu0 %701
      %703 = vrot.lane.b32.xlu0 %v372, 4
      %v704 = vpop.permute.xlu0 %703
      %705 = vrot.lane.b32.xlu0 %v382, 4
      %v706 = vpop.permute.xlu0 %705
      %707 = vrot.lane.b32.xlu0 %v396, 4
      %v708 = vpop.permute.xlu0 %707
      %709 = vrot.lane.b32.xlu0 %v406, 4
      %v710 = vpop.permute.xlu0 %709
      %711 = vrot.lane.b32.xlu0 %v420, 4
      %v712 = vpop.permute.xlu0 %711
      %713 = vrot.lane.b32.xlu0 %v430, 4
      %v714 = vpop.permute.xlu0 %713
      %715 = vrot.lane.b32.xlu0 %v444, 4
      %v716 = vpop.permute.xlu0 %715
      %717 = vrot.lane.b32.xlu0 %v454, 4
      %v718 = vpop.permute.xlu0 %717
      %719 = vrot.lane.b32.xlu0 %v468, 4
      %v720 = vpop.permute.xlu0 %719
      %721 = vrot.lane.b32.xlu0 %v478, 4
      %v722 = vpop.permute.xlu0 %721
      %723 = vrot.lane.b32.xlu0 %v492, 4
      %v724 = vpop.permute.xlu0 %723
      %725 = vrot.lane.b32.xlu0 %v502, 4
      %v726 = vpop.permute.xlu0 %725
      %727 = vrot.lane.b32.xlu0 %v516, 4
      %v728 = vpop.permute.xlu0 %727
      %729 = vrot.lane.b32.xlu0 %v526, 4
      %v730 = vpop.permute.xlu0 %729
      %731 = vrot.lane.b32.xlu0 %v540, 4
      %v732 = vpop.permute.xlu0 %731
      %733 = vrot.lane.b32.xlu0 %v550, 4
      %v734 = vpop.permute.xlu0 %733
      %735 = vrot.lane.b32.xlu0 %v564, 4
      %v736 = vpop.permute.xlu0 %735
      %737 = vrot.lane.b32.xlu0 %v574, 4
      %v738 = vpop.permute.xlu0 %737
      %739 = vrot.lane.b32.xlu0 %v588, 4
      %v740 = vpop.permute.xlu0 %739
      %741 = vrot.lane.b32.xlu0 %v598, 4
      %v742 = vpop.permute.xlu0 %741
      %743 = vrot.lane.b32.xlu0 %v612, 4
      %v744 = vpop.permute.xlu0 %743
      %745 = vrot.lane.b32.xlu0 %v622, 4
      %v746 = vpop.permute.xlu0 %745
      %747 = vrot.lane.b32.xlu0 %v636, 4
      %v748 = vpop.permute.xlu0 %747
      %749 = vrot.lane.b32.xlu0 %v646, 4
      %v750 = vpop.permute.xlu0 %749
      %751 = vrot.lane.b32.xlu0 %v660, 4
      %v752 = vpop.permute.xlu0 %751
      %753 = vrot.lane.b32.xlu0 %v670, 4
      %v754 = vpop.permute.xlu0 %753
      %755 = vrot.lane.b32.xlu0 %v684, 4
      %v756 = vpop.permute.xlu0 %755
      %757 = vrot.lane.b32.xlu0 %v694, 4
      %v758 = vpop.permute.xlu0 %757
      %vm791 = vcmask 60448
      %792 = vst.msk [vmem:[#allocation2] sm:$0xf] %vm791, %v696
      %793 = vst.msk [vmem:[#allocation2 + $0x4] sm:$0xf] %vm791, %v698
      %794 = vst.msk [vmem:[#allocation2 + $0x8] sm:$0xf] %vm791, %v700
      %795 = vst.msk [vmem:[#allocation2 + $0xc] sm:$0xf] %vm791, %v702
      %796 = vst.msk [vmem:[#allocation2 + $0x10] sm:$0xf] %vm791, %v704
      %797 = vst.msk [vmem:[#allocation2 + $0x14] sm:$0xf] %vm791, %v706
      %798 = vst.msk [vmem:[#allocation2 + $0x18] sm:$0xf] %vm791, %v708
      %799 = vst.msk [vmem:[#allocation2 + $0x1c] sm:$0xf] %vm791, %v710
      %800 = vst.msk [vmem:[#allocation2 + $0x20] sm:$0xf] %vm791, %v712
      %801 = vst.msk [vmem:[#allocation2 + $0x24] sm:$0xf] %vm791, %v714
      %802 = vst.msk [vmem:[#allocation2 + $0x28] sm:$0xf] %vm791, %v716
      %803 = vst.msk [vmem:[#allocation2 + $0x2c] sm:$0xf] %vm791, %v718
      %804 = vst.msk [vmem:[#allocation2 + $0x30] sm:$0xf] %vm791, %v720
      %805 = vst.msk [vmem:[#allocation2 + $0x34] sm:$0xf] %vm791, %v722
      %806 = vst.msk [vmem:[#allocation2 + $0x38] sm:$0xf] %vm791, %v724
      %807 = vst.msk [vmem:[#allocation2 + $0x3c] sm:$0xf] %vm791, %v726
      %808 = vst.msk [vmem:[#allocation2 + $0x40] sm:$0xf] %vm791, %v728
      %809 = vst.msk [vmem:[#allocation2 + $0x44] sm:$0xf] %vm791, %v730
      %810 = vst.msk [vmem:[#allocation2 + $0x48] sm:$0xf] %vm791, %v732
      %811 = vst.msk [vmem:[#allocation2 + $0x4c] sm:$0xf] %vm791, %v734
      %812 = vst.msk [vmem:[#allocation2 + $0x50] sm:$0xf] %vm791, %v736
      %813 = vst.msk [vmem:[#allocation2 + $0x54] sm:$0xf] %vm791, %v738
      %814 = vst.msk [vmem:[#allocation2 + $0x58] sm:$0xf] %vm791, %v740
      %815 = vst.msk [vmem:[#allocation2 + $0x5c] sm:$0xf] %vm791, %v742
      %816 = vst.msk [vmem:[#allocation2 + $0x60] sm:$0xf] %vm791, %v744
      %817 = vst.msk [vmem:[#allocation2 + $0x64] sm:$0xf] %vm791, %v746
      %818 = vst.msk [vmem:[#allocation2 + $0x68] sm:$0xf] %vm791, %v748
      %819 = vst.msk [vmem:[#allocation2 + $0x6c] sm:$0xf] %vm791, %v750
      %820 = vst.msk [vmem:[#allocation2 + $0x70] sm:$0xf] %vm791, %v752
      %821 = vst.msk [vmem:[#allocation2 + $0x74] sm:$0xf] %vm791, %v754
      %822 = vst.msk [vmem:[#allocation2 + $0x78] sm:$0xf] %vm791, %v756
      %823 = vst.msk [vmem:[#allocation2 + $0x7c] sm:$0xf] %vm791, %v758
      %v824 = vld [vmem:[%s183] sm:$0xe]
      %v825 = vld [vmem:[%s183 + $0x4] sm:$0xf]
      %v826 = vld [vmem:[%s183 + $0x8] sm:$0x1]
      %v827 = vld [vmem:[%s183 + $0xc] sm:$0xe]
      %v828 = vld [vmem:[%s183 + $0x10] sm:$0xf]
      %v829 = vld [vmem:[%s183 + $0x14] sm:$0x1]
      %v830 = vld [vmem:[%s183 + $0x18] sm:$0xe]
      %v831 = vld [vmem:[%s183 + $0x1c] sm:$0xf]
      %v832 = vld [vmem:[%s183 + $0x20] sm:$0x1]
      %v833 = vld [vmem:[%s183 + $0x24] sm:$0xe]
      %v834 = vld [vmem:[%s183 + $0x28] sm:$0xf]
      %v835 = vld [vmem:[%s183 + $0x2c] sm:$0x1]
      %v836 = vld [vmem:[%s183 + $0x30] sm:$0xe]
      %v837 = vld [vmem:[%s183 + $0x34] sm:$0xf]
      %v838 = vld [vmem:[%s183 + $0x38] sm:$0x1]
      %v839 = vld [vmem:[%s183 + $0x3c] sm:$0xe]
      %v840 = vld [vmem:[%s183 + $0x40] sm:$0xf]
      %v841 = vld [vmem:[%s183 + $0x44] sm:$0x1]
      %v842 = vld [vmem:[%s183 + $0x48] sm:$0xe]
      %v843 = vld [vmem:[%s183 + $0x4c] sm:$0xf]
      %v844 = vld [vmem:[%s183 + $0x50] sm:$0x1]
      %v845 = vld [vmem:[%s183 + $0x54] sm:$0xe]
      %v846 = vld [vmem:[%s183 + $0x58] sm:$0xf]
      %v847 = vld [vmem:[%s183 + $0x5c] sm:$0x1]
      %v848 = vld [vmem:[%s183 + $0x60] sm:$0xe]
      %v849 = vld [vmem:[%s183 + $0x64] sm:$0xf]
      %v850 = vld [vmem:[%s183 + $0x68] sm:$0x1]
      %v851 = vld [vmem:[%s183 + $0x6c] sm:$0xe]
      %v852 = vld [vmem:[%s183 + $0x70] sm:$0xf]
      %v853 = vld [vmem:[%s183 + $0x74] sm:$0x1]
      %v854 = vld [vmem:[%s183 + $0x78] sm:$0xe]
      %v855 = vld [vmem:[%s183 + $0x7c] sm:$0xf]
      %v856 = vld [vmem:[%s183 + $0x80] sm:$0x1]
      %v857 = vld [vmem:[%s183 + $0x84] sm:$0xe]
      %v858 = vld [vmem:[%s183 + $0x88] sm:$0xf]
      %v859 = vld [vmem:[%s183 + $0x8c] sm:$0x1]
      %v860 = vld [vmem:[%s183 + $0x90] sm:$0xe]
      %v861 = vld [vmem:[%s183 + $0x94] sm:$0xf]
      %v862 = vld [vmem:[%s183 + $0x98] sm:$0x1]
      %v863 = vld [vmem:[%s183 + $0x9c] sm:$0xe]
      %v864 = vld [vmem:[%s183 + $0xa0] sm:$0xf]
      %v865 = vld [vmem:[%s183 + $0xa4] sm:$0x1]
      %v866 = vld [vmem:[%s183 + $0xa8] sm:$0xe]
      %v867 = vld [vmem:[%s183 + $0xac] sm:$0xf]
      %v868 = vld [vmem:[%s183 + $0xb0] sm:$0x1]
      %v869 = vld [vmem:[%s183 + $0xb4] sm:$0xe]
      %v870 = vld [vmem:[%s183 + $0xb8] sm:$0xf]
      %v871 = vld [vmem:[%s183 + $0xbc] sm:$0x1]
      %vm920 = vcmask 1042432
      %vm921 = vcmask 1046532
      %vm922 = vmor %vm920, %vm921
      %v923 = vrot.slane %v824, 5
      %v924 = vrot.slane %v923, 4
      %v925 = vrot.slane %v825, 5
      %v926 = vsel %vm922, %v924, %v925
      %v927 = vrot.slane %v925, 4
      %v928 = vrot.slane %v826, 5
      %v929 = vsel %vm922, %v927, %v928
      %v930 = vrot.slane %v827, 5
      %v931 = vrot.slane %v930, 4
      %v932 = vrot.slane %v828, 5
      %v933 = vsel %vm922, %v931, %v932
      %v934 = vrot.slane %v932, 4
      %v935 = vrot.slane %v829, 5
      %v936 = vsel %vm922, %v934, %v935
      %v937 = vrot.slane %v830, 5
      %v938 = vrot.slane %v937, 4
      %v939 = vrot.slane %v831, 5
      %v940 = vsel %vm922, %v938, %v939
      %v941 = vrot.slane %v939, 4
      %v942 = vrot.slane %v832, 5
      %v943 = vsel %vm922, %v941, %v942
      %v944 = vrot.slane %v833, 5
      %v945 = vrot.slane %v944, 4
      %v946 = vrot.slane %v834, 5
      %v947 = vsel %vm922, %v945, %v946
      %v948 = vrot.slane %v946, 4
      %v949 = vrot.slane %v835, 5
      %v950 = vsel %vm922, %v948, %v949
      %v951 = vrot.slane %v836, 5
      %v952 = vrot.slane %v951, 4
      %v953 = vrot.slane %v837, 5
      %v954 = vsel %vm922, %v952, %v953
      %v955 = vrot.slane %v953, 4
      %v956 = vrot.slane %v838, 5
      %v957 = vsel %vm922, %v955, %v956
      %v958 = vrot.slane %v839, 5
      %v959 = vrot.slane %v958, 4
      %v960 = vrot.slane %v840, 5
      %v961 = vsel %vm922, %v959, %v960
      %v962 = vrot.slane %v960, 4
      %v963 = vrot.slane %v841, 5
      %v964 = vsel %vm922, %v962, %v963
      %v965 = vrot.slane %v842, 5
      %v966 = vrot.slane %v965, 4
      %v967 = vrot.slane %v843, 5
      %v968 = vsel %vm922, %v966, %v967
      %v969 = vrot.slane %v967, 4
      %v970 = vrot.slane %v844, 5
      %v971 = vsel %vm922, %v969, %v970
      %v972 = vrot.slane %v845, 5
      %v973 = vrot.slane %v972, 4
      %v974 = vrot.slane %v846, 5
      %v975 = vsel %vm922, %v973, %v974
      %v976 = vrot.slane %v974, 4
      %v977 = vrot.slane %v847, 5
      %v978 = vsel %vm922, %v976, %v977
      %v979 = vrot.slane %v848, 5
      %v980 = vrot.slane %v979, 4
      %v981 = vrot.slane %v849, 5
      %v982 = vsel %vm922, %v980, %v981
      %v983 = vrot.slane %v981, 4
      %v984 = vrot.slane %v850, 5
      %v985 = vsel %vm922, %v983, %v984
      %v986 = vrot.slane %v851, 5
      %v987 = vrot.slane %v986, 4
      %v988 = vrot.slane %v852, 5
      %v989 = vsel %vm922, %v987, %v988
      %v990 = vrot.slane %v988, 4
      %v991 = vrot.slane %v853, 5
      %v992 = vsel %vm922, %v990, %v991
      %v993 = vrot.slane %v854, 5
      %v994 = vrot.slane %v993, 4
      %v995 = vrot.slane %v855, 5
      %v996 = vsel %vm922, %v994, %v995
      %v997 = vrot.slane %v995, 4
      %v998 = vrot.slane %v856, 5
      %v999 = vsel %vm922, %v997, %v998
      %v1000 = vrot.slane %v857, 5
      %v1001 = vrot.slane %v1000, 4
      %v1002 = vrot.slane %v858, 5
      %v1003 = vsel %vm922, %v1001, %v1002
      %v1004 = vrot.slane %v1002, 4
      %v1005 = vrot.slane %v859, 5
      %v1006 = vsel %vm922, %v1004, %v1005
      %v1007 = vrot.slane %v860, 5
      %v1008 = vrot.slane %v1007, 4
      %v1009 = vrot.slane %v861, 5
      %v1010 = vsel %vm922, %v1008, %v1009
      %v1011 = vrot.slane %v1009, 4
      %v1012 = vrot.slane %v862, 5
      %v1013 = vsel %vm922, %v1011, %v1012
      %v1014 = vrot.slane %v863, 5
      %v1015 = vrot.slane %v1014, 4
      %v1016 = vrot.slane %v864, 5
      %v1017 = vsel %vm922, %v1015, %v1016
      %v1018 = vrot.slane %v1016, 4
      %v1019 = vrot.slane %v865, 5
      %v1020 = vsel %vm922, %v1018, %v1019
      %v1021 = vrot.slane %v866, 5
      %v1022 = vrot.slane %v1021, 4
      %v1023 = vrot.slane %v867, 5
      %v1024 = vsel %vm922, %v1022, %v1023
      %v1025 = vrot.slane %v1023, 4
      %v1026 = vrot.slane %v868, 5
      %v1027 = vsel %vm922, %v1025, %v1026
      %v1028 = vrot.slane %v869, 5
      %v1029 = vrot.slane %v1028, 4
      %v1030 = vrot.slane %v870, 5
      %v1031 = vsel %vm922, %v1029, %v1030
      %v1032 = vrot.slane %v1030, 4
      %v1033 = vrot.slane %v871, 5
      %v1034 = vsel %vm922, %v1032, %v1033
      %1035 = vrot.lane.b32.xlu0 %v926, 8
      %v1036 = vpop.permute.xlu0 %1035
      %1037 = vrot.lane.b32.xlu0 %v929, 8
      %v1038 = vpop.permute.xlu0 %1037
      %1039 = vrot.lane.b32.xlu0 %v933, 8
      %v1040 = vpop.permute.xlu0 %1039
      %1041 = vrot.lane.b32.xlu0 %v936, 8
      %v1042 = vpop.permute.xlu0 %1041
      %1043 = vrot.lane.b32.xlu0 %v940, 8
      %v1044 = vpop.permute.xlu0 %1043
      %1045 = vrot.lane.b32.xlu0 %v943, 8
      %v1046 = vpop.permute.xlu0 %1045
      %1047 = vrot.lane.b32.xlu0 %v947, 8
      %v1048 = vpop.permute.xlu0 %1047
      %1049 = vrot.lane.b32.xlu0 %v950, 8
      %v1050 = vpop.permute.xlu0 %1049
      %1051 = vrot.lane.b32.xlu0 %v954, 8
      %v1052 = vpop.permute.xlu0 %1051
      %1053 = vrot.lane.b32.xlu0 %v957, 8
      %v1054 = vpop.permute.xlu0 %1053
      %1055 = vrot.lane.b32.xlu0 %v961, 8
      %v1056 = vpop.permute.xlu0 %1055
      %1057 = vrot.lane.b32.xlu0 %v964, 8
      %v1058 = vpop.permute.xlu0 %1057
      %1059 = vrot.lane.b32.xlu0 %v968, 8
      %v1060 = vpop.permute.xlu0 %1059
      %1061 = vrot.lane.b32.xlu0 %v971, 8
      %v1062 = vpop.permute.xlu0 %1061
      %1063 = vrot.lane.b32.xlu0 %v975, 8
      %v1064 = vpop.permute.xlu0 %1063
      %1065 = vrot.lane.b32.xlu0 %v978, 8
      %v1066 = vpop.permute.xlu0 %1065
      %1067 = vrot.lane.b32.xlu0 %v982, 8
      %v1068 = vpop.permute.xlu0 %1067
      %1069 = vrot.lane.b32.xlu0 %v985, 8
      %v1070 = vpop.permute.xlu0 %1069
      %1071 = vrot.lane.b32.xlu0 %v989, 8
      %v1072 = vpop.permute.xlu0 %1071
      %1073 = vrot.lane.b32.xlu0 %v992, 8
      %v1074 = vpop.permute.xlu0 %1073
      %1075 = vrot.lane.b32.xlu0 %v996, 8
      %v1076 = vpop.permute.xlu0 %1075
      %1077 = vrot.lane.b32.xlu0 %v999, 8
      %v1078 = vpop.permute.xlu0 %1077
      %1079 = vrot.lane.b32.xlu0 %v1003, 8
      %v1080 = vpop.permute.xlu0 %1079
      %1081 = vrot.lane.b32.xlu0 %v1006, 8
      %v1082 = vpop.permute.xlu0 %1081
      %1083 = vrot.lane.b32.xlu0 %v1010, 8
      %v1084 = vpop.permute.xlu0 %1083
      %1085 = vrot.lane.b32.xlu0 %v1013, 8
      %v1086 = vpop.permute.xlu0 %1085
      %1087 = vrot.lane.b32.xlu0 %v1017, 8
      %v1088 = vpop.permute.xlu0 %1087
      %1089 = vrot.lane.b32.xlu0 %v1020, 8
      %v1090 = vpop.permute.xlu0 %1089
      %1091 = vrot.lane.b32.xlu0 %v1024, 8
      %v1092 = vpop.permute.xlu0 %1091
      %1093 = vrot.lane.b32.xlu0 %v1027, 8
      %v1094 = vpop.permute.xlu0 %1093
      %1095 = vrot.lane.b32.xlu0 %v1031, 8
      %v1096 = vpop.permute.xlu0 %1095
      %1097 = vrot.lane.b32.xlu0 %v1034, 8
      %v1098 = vpop.permute.xlu0 %1097
      %vm1131 = vcmask 93248
      %1132 = vst.msk [vmem:[#allocation2] sm:$0xf] %vm1131, %v1036
      %1133 = vst.msk [vmem:[#allocation2 + $0x4] sm:$0xf] %vm1131, %v1038
      %1134 = vst.msk [vmem:[#allocation2 + $0x8] sm:$0xf] %vm1131, %v1040
      %1135 = vst.msk [vmem:[#allocation2 + $0xc] sm:$0xf] %vm1131, %v1042
      %1136 = vst.msk [vmem:[#allocation2 + $0x10] sm:$0xf] %vm1131, %v1044
      %1137 = vst.msk [vmem:[#allocation2 + $0x14] sm:$0xf] %vm1131, %v1046
      %1138 = vst.msk [vmem:[#allocation2 + $0x18] sm:$0xf] %vm1131, %v1048
      %1139 = vst.msk [vmem:[#allocation2 + $0x1c] sm:$0xf] %vm1131, %v1050
      %1140 = vst.msk [vmem:[#allocation2 + $0x20] sm:$0xf] %vm1131, %v1052
      %1141 = vst.msk [vmem:[#allocation2 + $0x24] sm:$0xf] %vm1131, %v1054
      %1142 = vst.msk [vmem:[#allocation2 + $0x28] sm:$0xf] %vm1131, %v1056
      %1143 = vst.msk [vmem:[#allocation2 + $0x2c] sm:$0xf] %vm1131, %v1058
      %1144 = vst.msk [vmem:[#allocation2 + $0x30] sm:$0xf] %vm1131, %v1060
      %1145 = vst.msk [vmem:[#allocation2 + $0x34] sm:$0xf] %vm1131, %v1062
      %1146 = vst.msk [vmem:[#allocation2 + $0x38] sm:$0xf] %vm1131, %v1064
      %1147 = vst.msk [vmem:[#allocation2 + $0x3c] sm:$0xf] %vm1131, %v1066
      %1148 = vst.msk [vmem:[#allocation2 + $0x40] sm:$0xf] %vm1131, %v1068
      %1149 = vst.msk [vmem:[#allocation2 + $0x44] sm:$0xf] %vm1131, %v1070
      %1150 = vst.msk [vmem:[#allocation2 + $0x48] sm:$0xf] %vm1131, %v1072
      %1151 = vst.msk [vmem:[#allocation2 + $0x4c] sm:$0xf] %vm1131, %v1074
      %1152 = vst.msk [vmem:[#allocation2 + $0x50] sm:$0xf] %vm1131, %v1076
      %1153 = vst.msk [vmem:[#allocation2 + $0x54] sm:$0xf] %vm1131, %v1078
      %1154 = vst.msk [vmem:[#allocation2 + $0x58] sm:$0xf] %vm1131, %v1080
      %1155 = vst.msk [vmem:[#allocation2 + $0x5c] sm:$0xf] %vm1131, %v1082
      %1156 = vst.msk [vmem:[#allocation2 + $0x60] sm:$0xf] %vm1131, %v1084
      %1157 = vst.msk [vmem:[#allocation2 + $0x64] sm:$0xf] %vm1131, %v1086
      %1158 = vst.msk [vmem:[#allocation2 + $0x68] sm:$0xf] %vm1131, %v1088
      %1159 = vst.msk [vmem:[#allocation2 + $0x6c] sm:$0xf] %vm1131, %v1090
      %1160 = vst.msk [vmem:[#allocation2 + $0x70] sm:$0xf] %vm1131, %v1092
      %1161 = vst.msk [vmem:[#allocation2 + $0x74] sm:$0xf] %vm1131, %v1094
      %1162 = vst.msk [vmem:[#allocation2 + $0x78] sm:$0xf] %vm1131, %v1096
      %1163 = vst.msk [vmem:[#allocation2 + $0x7c] sm:$0xf] %vm1131, %v1098
      %s1164 = scalar_lea.vmem %s183, 12
      %v1165 = vld [vmem:[%s1164] sm:$0xf]
      %v1166 = vld [vmem:[%s1164 + $0x4] sm:$0xf]
      %v1167 = vld [vmem:[%s1164 + $0xc] sm:$0xf]
      %v1168 = vld [vmem:[%s1164 + $0x10] sm:$0xf]
      %v1169 = vld [vmem:[%s1164 + $0x18] sm:$0xf]
      %v1170 = vld [vmem:[%s1164 + $0x1c] sm:$0xf]
      %v1171 = vld [vmem:[%s1164 + $0x24] sm:$0xf]
      %v1172 = vld [vmem:[%s1164 + $0x28] sm:$0xf]
      %v1173 = vld [vmem:[%s1164 + $0x30] sm:$0xf]
      %v1174 = vld [vmem:[%s1164 + $0x34] sm:$0xf]
      %v1175 = vld [vmem:[%s1164 + $0x3c] sm:$0xf]
      %v1176 = vld [vmem:[%s1164 + $0x40] sm:$0xf]
      %v1177 = vld [vmem:[%s1164 + $0x48] sm:$0xf]
      %v1178 = vld [vmem:[%s1164 + $0x4c] sm:$0xf]
      %v1179 = vld [vmem:[%s1164 + $0x54] sm:$0xf]
      %v1180 = vld [vmem:[%s1164 + $0x58] sm:$0xf]
      %v1181 = vld [vmem:[%s1164 + $0x60] sm:$0xf]
      %v1182 = vld [vmem:[%s1164 + $0x64] sm:$0xf]
      %v1183 = vld [vmem:[%s1164 + $0x6c] sm:$0xf]
      %v1184 = vld [vmem:[%s1164 + $0x70] sm:$0xf]
      %v1185 = vld [vmem:[%s1164 + $0x78] sm:$0xf]
      %v1186 = vld [vmem:[%s1164 + $0x7c] sm:$0xf]
      %v1187 = vld [vmem:[%s1164 + $0x84] sm:$0xf]
      %v1188 = vld [vmem:[%s1164 + $0x88] sm:$0xf]
      %v1189 = vld [vmem:[%s1164 + $0x90] sm:$0xf]
      %v1190 = vld [vmem:[%s1164 + $0x94] sm:$0xf]
      %v1191 = vld [vmem:[%s1164 + $0x9c] sm:$0xf]
      %v1192 = vld [vmem:[%s1164 + $0xa0] sm:$0xf]
      %v1193 = vld [vmem:[%s1164 + $0xa8] sm:$0xf]
      %v1194 = vld [vmem:[%s1164 + $0xac] sm:$0xf]
      %v1195 = vld [vmem:[%s1164 + $0xb4] sm:$0xf]
      %v1196 = vld [vmem:[%s1164 + $0xb8] sm:$0xf]
      %1229 = vrot.lane.b32.xlu0 %v1165, 12
      %v1230 = vpop.permute.xlu0 %1229
      %1231 = vrot.lane.b32.xlu0 %v1166, 12
      %v1232 = vpop.permute.xlu0 %1231
      %1233 = vrot.lane.b32.xlu0 %v1167, 12
      %v1234 = vpop.permute.xlu0 %1233
      %1235 = vrot.lane.b32.xlu0 %v1168, 12
      %v1236 = vpop.permute.xlu0 %1235
      %1237 = vrot.lane.b32.xlu0 %v1169, 12
      %v1238 = vpop.permute.xlu0 %1237
      %1239 = vrot.lane.b32.xlu0 %v1170, 12
      %v1240 = vpop.permute.xlu0 %1239
      %1241 = vrot.lane.b32.xlu0 %v1171, 12
      %v1242 = vpop.permute.xlu0 %1241
      %1243 = vrot.lane.b32.xlu0 %v1172, 12
      %v1244 = vpop.permute.xlu0 %1243
      %1245 = vrot.lane.b32.xlu0 %v1173, 12
      %v1246 = vpop.permute.xlu0 %1245
      %1247 = vrot.lane.b32.xlu0 %v1174, 12
      %v1248 = vpop.permute.xlu0 %1247
      %1249 = vrot.lane.b32.xlu0 %v1175, 12
      %v1250 = vpop.permute.xlu0 %1249
      %1251 = vrot.lane.b32.xlu0 %v1176, 12
      %v1252 = vpop.permute.xlu0 %1251
      %1253 = vrot.lane.b32.xlu0 %v1177, 12
      %v1254 = vpop.permute.xlu0 %1253
      %1255 = vrot.lane.b32.xlu0 %v1178, 12
      %v1256 = vpop.permute.xlu0 %1255
      %1257 = vrot.lane.b32.xlu0 %v1179, 12
      %v1258 = vpop.permute.xlu0 %1257
      %1259 = vrot.lane.b32.xlu0 %v1180, 12
      %v1260 = vpop.permute.xlu0 %1259
      %1261 = vrot.lane.b32.xlu0 %v1181, 12
      %v1262 = vpop.permute.xlu0 %1261
      %1263 = vrot.lane.b32.xlu0 %v1182, 12
      %v1264 = vpop.permute.xlu0 %1263
      %1265 = vrot.lane.b32.xlu0 %v1183, 12
      %v1266 = vpop.permute.xlu0 %1265
      %1267 = vrot.lane.b32.xlu0 %v1184, 12
      %v1268 = vpop.permute.xlu0 %1267
      %1269 = vrot.lane.b32.xlu0 %v1185, 12
      %v1270 = vpop.permute.xlu0 %1269
      %1271 = vrot.lane.b32.xlu0 %v1186, 12
      %v1272 = vpop.permute.xlu0 %1271
      %1273 = vrot.lane.b32.xlu0 %v1187, 12
      %v1274 = vpop.permute.xlu0 %1273
      %1275 = vrot.lane.b32.xlu0 %v1188, 12
      %v1276 = vpop.permute.xlu0 %1275
      %1277 = vrot.lane.b32.xlu0 %v1189, 12
      %v1278 = vpop.permute.xlu0 %1277
      %1279 = vrot.lane.b32.xlu0 %v1190, 12
      %v1280 = vpop.permute.xlu0 %1279
      %1281 = vrot.lane.b32.xlu0 %v1191, 12
      %v1282 = vpop.permute.xlu0 %1281
      %1283 = vrot.lane.b32.xlu0 %v1192, 12
      %v1284 = vpop.permute.xlu0 %1283
      %1285 = vrot.lane.b32.xlu0 %v1193, 12
      %v1286 = vpop.permute.xlu0 %1285
      %1287 = vrot.lane.b32.xlu0 %v1194, 12
      %v1288 = vpop.permute.xlu0 %1287
      %1289 = vrot.lane.b32.xlu0 %v1195, 12
      %v1290 = vpop.permute.xlu0 %1289
      %1291 = vrot.lane.b32.xlu0 %v1196, 12
      %v1292 = vpop.permute.xlu0 %1291
      %vm1325 = vcmask 126048
      %1326 = vst.msk [vmem:[#allocation2] sm:$0xf] %vm1325, %v1230
      %1327 = vst.msk [vmem:[#allocation2 + $0x4] sm:$0xf] %vm1325, %v1232
      %1328 = vst.msk [vmem:[#allocation2 + $0x8] sm:$0xf] %vm1325, %v1234
      %1329 = vst.msk [vmem:[#allocation2 + $0xc] sm:$0xf] %vm1325, %v1236
      %1330 = vst.msk [vmem:[#allocation2 + $0x10] sm:$0xf] %vm1325, %v1238
      %1331 = vst.msk [vmem:[#allocation2 + $0x14] sm:$0xf] %vm1325, %v1240
      %1332 = vst.msk [vmem:[#allocation2 + $0x18] sm:$0xf] %vm1325, %v1242
      %1333 = vst.msk [vmem:[#allocation2 + $0x1c] sm:$0xf] %vm1325, %v1244
      %1334 = vst.msk [vmem:[#allocation2 + $0x20] sm:$0xf] %vm1325, %v1246
      %1335 = vst.msk [vmem:[#allocation2 + $0x24] sm:$0xf] %vm1325, %v1248
      %1336 = vst.msk [vmem:[#allocation2 + $0x28] sm:$0xf] %vm1325, %v1250
      %1337 = vst.msk [vmem:[#allocation2 + $0x2c] sm:$0xf] %vm1325, %v1252
      %1338 = vst.msk [vmem:[#allocation2 + $0x30] sm:$0xf] %vm1325, %v1254
      %1339 = vst.msk [vmem:[#allocation2 + $0x34] sm:$0xf] %vm1325, %v1256
      %1340 = vst.msk [vmem:[#allocation2 + $0x38] sm:$0xf] %vm1325, %v1258
      %1341 = vst.msk [vmem:[#allocation2 + $0x3c] sm:$0xf] %vm1325, %v1260
      %1342 = vst.msk [vmem:[#allocation2 + $0x40] sm:$0xf] %vm1325, %v1262
      %1343 = vst.msk [vmem:[#allocation2 + $0x44] sm:$0xf] %vm1325, %v1264
      %1344 = vst.msk [vmem:[#allocation2 + $0x48] sm:$0xf] %vm1325, %v1266
      %1345 = vst.msk [vmem:[#allocation2 + $0x4c] sm:$0xf] %vm1325, %v1268
      %1346 = vst.msk [vmem:[#allocation2 + $0x50] sm:$0xf] %vm1325, %v1270
      %1347 = vst.msk [vmem:[#allocation2 + $0x54] sm:$0xf] %vm1325, %v1272
      %1348 = vst.msk [vmem:[#allocation2 + $0x58] sm:$0xf] %vm1325, %v1274
      %1349 = vst.msk [vmem:[#allocation2 + $0x5c] sm:$0xf] %vm1325, %v1276
      %1350 = vst.msk [vmem:[#allocation2 + $0x60] sm:$0xf] %vm1325, %v1278
      %1351 = vst.msk [vmem:[#allocation2 + $0x64] sm:$0xf] %vm1325, %v1280
      %1352 = vst.msk [vmem:[#allocation2 + $0x68] sm:$0xf] %vm1325, %v1282
      %1353 = vst.msk [vmem:[#allocation2 + $0x6c] sm:$0xf] %vm1325, %v1284
      %1354 = vst.msk [vmem:[#allocation2 + $0x70] sm:$0xf] %vm1325, %v1286
      %1355 = vst.msk [vmem:[#allocation2 + $0x74] sm:$0xf] %vm1325, %v1288
      %1356 = vst.msk [vmem:[#allocation2 + $0x78] sm:$0xf] %vm1325, %v1290
      %1357 = vst.msk [vmem:[#allocation2 + $0x7c] sm:$0xf] %vm1325, %v1292
      %v1358 = vld [vmem:[%s1164] sm:$0xf]
      %v1359 = vld [vmem:[%s1164 + $0x4] sm:$0xf]
      %v1360 = vld [vmem:[%s1164 + $0x8] sm:$0x1]
      %v1361 = vld [vmem:[%s1164 + $0xc] sm:$0xf]
      %v1362 = vld [vmem:[%s1164 + $0x10] sm:$0xf]
      %v1363 = vld [vmem:[%s1164 + $0x14] sm:$0x1]
      %v1364 = vld [vmem:[%s1164 + $0x18] sm:$0xf]
      %v1365 = vld [vmem:[%s1164 + $0x1c] sm:$0xf]
      %v1366 = vld [vmem:[%s1164 + $0x20] sm:$0x1]
      %v1367 = vld [vmem:[%s1164 + $0x24] sm:$0xf]
      %v1368 = vld [vmem:[%s1164 + $0x28] sm:$0xf]
      %v1369 = vld [vmem:[%s1164 + $0x2c] sm:$0x1]
      %v1370 = vld [vmem:[%s1164 + $0x30] sm:$0xf]
      %v1371 = vld [vmem:[%s1164 + $0x34] sm:$0xf]
      %v1372 = vld [vmem:[%s1164 + $0x38] sm:$0x1]
      %v1373 = vld [vmem:[%s1164 + $0x3c] sm:$0xf]
      %v1374 = vld [vmem:[%s1164 + $0x40] sm:$0xf]
      %v1375 = vld [vmem:[%s1164 + $0x44] sm:$0x1]
      %v1376 = vld [vmem:[%s1164 + $0x48] sm:$0xf]
      %v1377 = vld [vmem:[%s1164 + $0x4c] sm:$0xf]
      %v1378 = vld [vmem:[%s1164 + $0x50] sm:$0x1]
      %v1379 = vld [vmem:[%s1164 + $0x54] sm:$0xf]
      %v1380 = vld [vmem:[%s1164 + $0x58] sm:$0xf]
      %v1381 = vld [vmem:[%s1164 + $0x5c] sm:$0x1]
      %v1382 = vld [vmem:[%s1164 + $0x60] sm:$0xf]
      %v1383 = vld [vmem:[%s1164 + $0x64] sm:$0xf]
      %v1384 = vld [vmem:[%s1164 + $0x68] sm:$0x1]
      %v1385 = vld [vmem:[%s1164 + $0x6c] sm:$0xf]
      %v1386 = vld [vmem:[%s1164 + $0x70] sm:$0xf]
      %v1387 = vld [vmem:[%s1164 + $0x74] sm:$0x1]
      %v1388 = vld [vmem:[%s1164 + $0x78] sm:$0xf]
      %v1389 = vld [vmem:[%s1164 + $0x7c] sm:$0xf]
      %v1390 = vld [vmem:[%s1164 + $0x80] sm:$0x1]
      %v1391 = vld [vmem:[%s1164 + $0x84] sm:$0xf]
      %v1392 = vld [vmem:[%s1164 + $0x88] sm:$0xf]
      %v1393 = vld [vmem:[%s1164 + $0x8c] sm:$0x1]
      %v1394 = vld [vmem:[%s1164 + $0x90] sm:$0xf]
      %v1395 = vld [vmem:[%s1164 + $0x94] sm:$0xf]
      %v1396 = vld [vmem:[%s1164 + $0x98] sm:$0x1]
      %v1397 = vld [vmem:[%s1164 + $0x9c] sm:$0xf]
      %v1398 = vld [vmem:[%s1164 + $0xa0] sm:$0xf]
      %v1399 = vld [vmem:[%s1164 + $0xa4] sm:$0x1]
      %v1400 = vld [vmem:[%s1164 + $0xa8] sm:$0xf]
      %v1401 = vld [vmem:[%s1164 + $0xac] sm:$0xf]
      %v1402 = vld [vmem:[%s1164 + $0xb0] sm:$0x1]
      %v1403 = vld [vmem:[%s1164 + $0xb4] sm:$0xf]
      %v1404 = vld [vmem:[%s1164 + $0xb8] sm:$0xf]
      %v1405 = vld [vmem:[%s1164 + $0xbc] sm:$0x1]
      %v1407 = vshrl.u32 %v1358, 16
      %v1409 = vrot.slane %v1407, 4
      %v1410 = vshll.u32 %v1358, 16
      %v1412 = vrot.slane %v1410, 5
      %v1413 = vor.u32 %v1409, %v1412
      %v1414 = vrot.slane %v1413, 4
      %v1416 = vshll.u32 %v1359, 16
      %v1418 = vrot.slane %v1416, 5
      %v1419 = vsel %vm310, %v1414, %v1418
      %v1420 = vshrl.u32 %v1359, 16
      %v1422 = vrot.slane %v1420, 4
      %v1423 = vor.u32 %v1422, %v1418
      %v1424 = vrot.slane %v1423, 4
      %v1426 = vshll.u32 %v1360, 16
      %v1428 = vrot.slane %v1426, 5
      %v1429 = vsel %vm310, %v1424, %v1428
      %v1431 = vshrl.u32 %v1361, 16
      %v1433 = vrot.slane %v1431, 4
      %v1434 = vshll.u32 %v1361, 16
      %v1436 = vrot.slane %v1434, 5
      %v1437 = vor.u32 %v1433, %v1436
      %v1438 = vrot.slane %v1437, 4
      %v1440 = vshll.u32 %v1362, 16
      %v1442 = vrot.slane %v1440, 5
      %v1443 = vsel %vm310, %v1438, %v1442
      %v1444 = vshrl.u32 %v1362, 16
      %v1446 = vrot.slane %v1444, 4
      %v1447 = vor.u32 %v1446, %v1442
      %v1448 = vrot.slane %v1447, 4
      %v1450 = vshll.u32 %v1363, 16
      %v1452 = vrot.slane %v1450, 5
      %v1453 = vsel %vm310, %v1448, %v1452
      %v1455 = vshrl.u32 %v1364, 16
      %v1457 = vrot.slane %v1455, 4
      %v1458 = vshll.u32 %v1364, 16
      %v1460 = vrot.slane %v1458, 5
      %v1461 = vor.u32 %v1457, %v1460
      %v1462 = vrot.slane %v1461, 4
      %v1464 = vshll.u32 %v1365, 16
      %v1466 = vrot.slane %v1464, 5
      %v1467 = vsel %vm310, %v1462, %v1466
      %v1468 = vshrl.u32 %v1365, 16
      %v1470 = vrot.slane %v1468, 4
      %v1471 = vor.u32 %v1470, %v1466
      %v1472 = vrot.slane %v1471, 4
      %v1474 = vshll.u32 %v1366, 16
      %v1476 = vrot.slane %v1474, 5
      %v1477 = vsel %vm310, %v1472, %v1476
      %v1479 = vshrl.u32 %v1367, 16
      %v1481 = vrot.slane %v1479, 4
      %v1482 = vshll.u32 %v1367, 16
      %v1484 = vrot.slane %v1482, 5
      %v1485 = vor.u32 %v1481, %v1484
      %v1486 = vrot.slane %v1485, 4
      %v1488 = vshll.u32 %v1368, 16
      %v1490 = vrot.slane %v1488, 5
      %v1491 = vsel %vm310, %v1486, %v1490
      %v1492 = vshrl.u32 %v1368, 16
      %v1494 = vrot.slane %v1492, 4
      %v1495 = vor.u32 %v1494, %v1490
      %v1496 = vrot.slane %v1495, 4
      %v1498 = vshll.u32 %v1369, 16
      %v1500 = vrot.slane %v1498, 5
      %v1501 = vsel %vm310, %v1496, %v1500
      %v1503 = vshrl.u32 %v1370, 16
      %v1505 = vrot.slane %v1503, 4
      %v1506 = vshll.u32 %v1370, 16
      %v1508 = vrot.slane %v1506, 5
      %v1509 = vor.u32 %v1505, %v1508
      %v1510 = vrot.slane %v1509, 4
      %v1512 = vshll.u32 %v1371, 16
      %v1514 = vrot.slane %v1512, 5
      %v1515 = vsel %vm310, %v1510, %v1514
      %v1516 = vshrl.u32 %v1371, 16
      %v1518 = vrot.slane %v1516, 4
      %v1519 = vor.u32 %v1518, %v1514
      %v1520 = vrot.slane %v1519, 4
      %v1522 = vshll.u32 %v1372, 16
      %v1524 = vrot.slane %v1522, 5
      %v1525 = vsel %vm310, %v1520, %v1524
      %v1527 = vshrl.u32 %v1373, 16
      %v1529 = vrot.slane %v1527, 4
      %v1530 = vshll.u32 %v1373, 16
      %v1532 = vrot.slane %v1530, 5
      %v1533 = vor.u32 %v1529, %v1532
      %v1534 = vrot.slane %v1533, 4
      %v1536 = vshll.u32 %v1374, 16
      %v1538 = vrot.slane %v1536, 5
      %v1539 = vsel %vm310, %v1534, %v1538
      %v1540 = vshrl.u32 %v1374, 16
      %v1542 = vrot.slane %v1540, 4
      %v1543 = vor.u32 %v1542, %v1538
      %v1544 = vrot.slane %v1543, 4
      %v1546 = vshll.u32 %v1375, 16
      %v1548 = vrot.slane %v1546, 5
      %v1549 = vsel %vm310, %v1544, %v1548
      %v1551 = vshrl.u32 %v1376, 16
      %v1553 = vrot.slane %v1551, 4
      %v1554 = vshll.u32 %v1376, 16
      %v1556 = vrot.slane %v1554, 5
      %v1557 = vor.u32 %v1553, %v1556
      %v1558 = vrot.slane %v1557, 4
      %v1560 = vshll.u32 %v1377, 16
      %v1562 = vrot.slane %v1560, 5
      %v1563 = vsel %vm310, %v1558, %v1562
      %v1564 = vshrl.u32 %v1377, 16
      %v1566 = vrot.slane %v1564, 4
      %v1567 = vor.u32 %v1566, %v1562
      %v1568 = vrot.slane %v1567, 4
      %v1570 = vshll.u32 %v1378, 16
      %v1572 = vrot.slane %v1570, 5
      %v1573 = vsel %vm310, %v1568, %v1572
      %v1575 = vshrl.u32 %v1379, 16
      %v1577 = vrot.slane %v1575, 4
      %v1578 = vshll.u32 %v1379, 16
      %v1580 = vrot.slane %v1578, 5
      %v1581 = vor.u32 %v1577, %v1580
      %v1582 = vrot.slane %v1581, 4
      %v1584 = vshll.u32 %v1380, 16
      %v1586 = vrot.slane %v1584, 5
      %v1587 = vsel %vm310, %v1582, %v1586
      %v1588 = vshrl.u32 %v1380, 16
      %v1590 = vrot.slane %v1588, 4
      %v1591 = vor.u32 %v1590, %v1586
      %v1592 = vrot.slane %v1591, 4
      %v1594 = vshll.u32 %v1381, 16
      %v1596 = vrot.slane %v1594, 5
      %v1597 = vsel %vm310, %v1592, %v1596
      %v1599 = vshrl.u32 %v1382, 16
      %v1601 = vrot.slane %v1599, 4
      %v1602 = vshll.u32 %v1382, 16
      %v1604 = vrot.slane %v1602, 5
      %v1605 = vor.u32 %v1601, %v1604
      %v1606 = vrot.slane %v1605, 4
      %v1608 = vshll.u32 %v1383, 16
      %v1610 = vrot.slane %v1608, 5
      %v1611 = vsel %vm310, %v1606, %v1610
      %v1612 = vshrl.u32 %v1383, 16
      %v1614 = vrot.slane %v1612, 4
      %v1615 = vor.u32 %v1614, %v1610
      %v1616 = vrot.slane %v1615, 4
      %v1618 = vshll.u32 %v1384, 16
      %v1620 = vrot.slane %v1618, 5
      %v1621 = vsel %vm310, %v1616, %v1620
      %v1623 = vshrl.u32 %v1385, 16
      %v1625 = vrot.slane %v1623, 4
      %v1626 = vshll.u32 %v1385, 16
      %v1628 = vrot.slane %v1626, 5
      %v1629 = vor.u32 %v1625, %v1628
      %v1630 = vrot.slane %v1629, 4
      %v1632 = vshll.u32 %v1386, 16
      %v1634 = vrot.slane %v1632, 5
      %v1635 = vsel %vm310, %v1630, %v1634
      %v1636 = vshrl.u32 %v1386, 16
      %v1638 = vrot.slane %v1636, 4
      %v1639 = vor.u32 %v1638, %v1634
      %v1640 = vrot.slane %v1639, 4
      %v1642 = vshll.u32 %v1387, 16
      %v1644 = vrot.slane %v1642, 5
      %v1645 = vsel %vm310, %v1640, %v1644
      %v1647 = vshrl.u32 %v1388, 16
      %v1649 = vrot.slane %v1647, 4
      %v1650 = vshll.u32 %v1388, 16
      %v1652 = vrot.slane %v1650, 5
      %v1653 = vor.u32 %v1649, %v1652
      %v1654 = vrot.slane %v1653, 4
      %v1656 = vshll.u32 %v1389, 16
      %v1658 = vrot.slane %v1656, 5
      %v1659 = vsel %vm310, %v1654, %v1658
      %v1660 = vshrl.u32 %v1389, 16
      %v1662 = vrot.slane %v1660, 4
      %v1663 = vor.u32 %v1662, %v1658
      %v1664 = vrot.slane %v1663, 4
      %v1666 = vshll.u32 %v1390, 16
      %v1668 = vrot.slane %v1666, 5
      %v1669 = vsel %vm310, %v1664, %v1668
      %v1671 = vshrl.u32 %v1391, 16
      %v1673 = vrot.slane %v1671, 4
      %v1674 = vshll.u32 %v1391, 16
      %v1676 = vrot.slane %v1674, 5
      %v1677 = vor.u32 %v1673, %v1676
      %v1678 = vrot.slane %v1677, 4
      %v1680 = vshll.u32 %v1392, 16
      %v1682 = vrot.slane %v1680, 5
      %v1683 = vsel %vm310, %v1678, %v1682
      %v1684 = vshrl.u32 %v1392, 16
      %v1686 = vrot.slane %v1684, 4
      %v1687 = vor.u32 %v1686, %v1682
      %v1688 = vrot.slane %v1687, 4
      %v1690 = vshll.u32 %v1393, 16
      %v1692 = vrot.slane %v1690, 5
      %v1693 = vsel %vm310, %v1688, %v1692
      %v1695 = vshrl.u32 %v1394, 16
      %v1697 = vrot.slane %v1695, 4
      %v1698 = vshll.u32 %v1394, 16
      %v1700 = vrot.slane %v1698, 5
      %v1701 = vor.u32 %v1697, %v1700
      %v1702 = vrot.slane %v1701, 4
      %v1704 = vshll.u32 %v1395, 16
      %v1706 = vrot.slane %v1704, 5
      %v1707 = vsel %vm310, %v1702, %v1706
      %v1708 = vshrl.u32 %v1395, 16
      %v1710 = vrot.slane %v1708, 4
      %v1711 = vor.u32 %v1710, %v1706
      %v1712 = vrot.slane %v1711, 4
      %v1714 = vshll.u32 %v1396, 16
      %v1716 = vrot.slane %v1714, 5
      %v1717 = vsel %vm310, %v1712, %v1716
      %v1719 = vshrl.u32 %v1397, 16
      %v1721 = vrot.slane %v1719, 4
      %v1722 = vshll.u32 %v1397, 16
      %v1724 = vrot.slane %v1722, 5
      %v1725 = vor.u32 %v1721, %v1724
      %v1726 = vrot.slane %v1725, 4
      %v1728 = vshll.u32 %v1398, 16
      %v1730 = vrot.slane %v1728, 5
      %v1731 = vsel %vm310, %v1726, %v1730
      %v1732 = vshrl.u32 %v1398, 16
      %v1734 = vrot.slane %v1732, 4
      %v1735 = vor.u32 %v1734, %v1730
      %v1736 = vrot.slane %v1735, 4
      %v1738 = vshll.u32 %v1399, 16
      %v1740 = vrot.slane %v1738, 5
      %v1741 = vsel %vm310, %v1736, %v1740
      %v1743 = vshrl.u32 %v1400, 16
      %v1745 = vrot.slane %v1743, 4
      %v1746 = vshll.u32 %v1400, 16
      %v1748 = vrot.slane %v1746, 5
      %v1749 = vor.u32 %v1745, %v1748
      %v1750 = vrot.slane %v1749, 4
      %v1752 = vshll.u32 %v1401, 16
      %v1754 = vrot.slane %v1752, 5
      %v1755 = vsel %vm310, %v1750, %v1754
      %v1756 = vshrl.u32 %v1401, 16
      %v1758 = vrot.slane %v1756, 4
      %v1759 = vor.u32 %v1758, %v1754
      %v1760 = vrot.slane %v1759, 4
      %v1762 = vshll.u32 %v1402, 16
      %v1764 = vrot.slane %v1762, 5
      %v1765 = vsel %vm310, %v1760, %v1764
      %v1767 = vshrl.u32 %v1403, 16
      %v1769 = vrot.slane %v1767, 4
      %v1770 = vshll.u32 %v1403, 16
      %v1772 = vrot.slane %v1770, 5
      %v1773 = vor.u32 %v1769, %v1772
      %v1774 = vrot.slane %v1773, 4
      %v1776 = vshll.u32 %v1404, 16
      %v1778 = vrot.slane %v1776, 5
      %v1779 = vsel %vm310, %v1774, %v1778
      %v1780 = vshrl.u32 %v1404, 16
      %v1782 = vrot.slane %v1780, 4
      %v1783 = vor.u32 %v1782, %v1778
      %v1784 = vrot.slane %v1783, 4
      %v1786 = vshll.u32 %v1405, 16
      %v1788 = vrot.slane %v1786, 5
      %v1789 = vsel %vm310, %v1784, %v1788
      %1790 = vrot.lane.b32.xlu0 %v1419, 16
      %v1791 = vpop.permute.xlu0 %1790
      %1792 = vrot.lane.b32.xlu0 %v1429, 16
      %v1793 = vpop.permute.xlu0 %1792
      %1794 = vrot.lane.b32.xlu0 %v1443, 16
      %v1795 = vpop.permute.xlu0 %1794
      %1796 = vrot.lane.b32.xlu0 %v1453, 16
      %v1797 = vpop.permute.xlu0 %1796
      %1798 = vrot.lane.b32.xlu0 %v1467, 16
      %v1799 = vpop.permute.xlu0 %1798
      %1800 = vrot.lane.b32.xlu0 %v1477, 16
      %v1801 = vpop.permute.xlu0 %1800
      %1802 = vrot.lane.b32.xlu0 %v1491, 16
      %v1803 = vpop.permute.xlu0 %1802
      %1804 = vrot.lane.b32.xlu0 %v1501, 16
      %v1805 = vpop.permute.xlu0 %1804
      %1806 = vrot.lane.b32.xlu0 %v1515, 16
      %v1807 = vpop.permute.xlu0 %1806
      %1808 = vrot.lane.b32.xlu0 %v1525, 16
      %v1809 = vpop.permute.xlu0 %1808
      %1810 = vrot.lane.b32.xlu0 %v1539, 16
      %v1811 = vpop.permute.xlu0 %1810
      %1812 = vrot.lane.b32.xlu0 %v1549, 16
      %v1813 = vpop.permute.xlu0 %1812
      %1814 = vrot.lane.b32.xlu0 %v1563, 16
      %v1815 = vpop.permute.xlu0 %1814
      %1816 = vrot.lane.b32.xlu0 %v1573, 16
      %v1817 = vpop.permute.xlu0 %1816
      %1818 = vrot.lane.b32.xlu0 %v1587, 16
      %v1819 = vpop.permute.xlu0 %1818
      %1820 = vrot.lane.b32.xlu0 %v1597, 16
      %v1821 = vpop.permute.xlu0 %1820
      %1822 = vrot.lane.b32.xlu0 %v1611, 16
      %v1823 = vpop.permute.xlu0 %1822
      %1824 = vrot.lane.b32.xlu0 %v1621, 16
      %v1825 = vpop.permute.xlu0 %1824
      %1826 = vrot.lane.b32.xlu0 %v1635, 16
      %v1827 = vpop.permute.xlu0 %1826
      %1828 = vrot.lane.b32.xlu0 %v1645, 16
      %v1829 = vpop.permute.xlu0 %1828
      %1830 = vrot.lane.b32.xlu0 %v1659, 16
      %v1831 = vpop.permute.xlu0 %1830
      %1832 = vrot.lane.b32.xlu0 %v1669, 16
      %v1833 = vpop.permute.xlu0 %1832
      %1834 = vrot.lane.b32.xlu0 %v1683, 16
      %v1835 = vpop.permute.xlu0 %1834
      %1836 = vrot.lane.b32.xlu0 %v1693, 16
      %v1837 = vpop.permute.xlu0 %1836
      %1838 = vrot.lane.b32.xlu0 %v1707, 16
      %v1839 = vpop.permute.xlu0 %1838
      %1840 = vrot.lane.b32.xlu0 %v1717, 16
      %v1841 = vpop.permute.xlu0 %1840
      %1842 = vrot.lane.b32.xlu0 %v1731, 16
      %v1843 = vpop.permute.xlu0 %1842
      %1844 = vrot.lane.b32.xlu0 %v1741, 16
      %v1845 = vpop.permute.xlu0 %1844
      %1846 = vrot.lane.b32.xlu0 %v1755, 16
      %v1847 = vpop.permute.xlu0 %1846
      %1848 = vrot.lane.b32.xlu0 %v1765, 16
      %v1849 = vpop.permute.xlu0 %1848
      %1850 = vrot.lane.b32.xlu0 %v1779, 16
      %v1851 = vpop.permute.xlu0 %1850
      %1852 = vrot.lane.b32.xlu0 %v1789, 16
      %v1853 = vpop.permute.xlu0 %1852
      %vm1886 = vcmask 158848
      %1887 = vst.msk [vmem:[#allocation2] sm:$0xf] %vm1886, %v1791
      %1888 = vst.msk [vmem:[#allocation2 + $0x4] sm:$0xf] %vm1886, %v1793
      %1889 = vst.msk [vmem:[#allocation2 + $0x8] sm:$0xf] %vm1886, %v1795
      %1890 = vst.msk [vmem:[#allocation2 + $0xc] sm:$0xf] %vm1886, %v1797
      %1891 = vst.msk [vmem:[#allocation2 + $0x10] sm:$0xf] %vm1886, %v1799
      %1892 = vst.msk [vmem:[#allocation2 + $0x14] sm:$0xf] %vm1886, %v1801
      %1893 = vst.msk [vmem:[#allocation2 + $0x18] sm:$0xf] %vm1886, %v1803
      %1894 = vst.msk [vmem:[#allocation2 + $0x1c] sm:$0xf] %vm1886, %v1805
      %1895 = vst.msk [vmem:[#allocation2 + $0x20] sm:$0xf] %vm1886, %v1807
      %1896 = vst.msk [vmem:[#allocation2 + $0x24] sm:$0xf] %vm1886, %v1809
      %1897 = vst.msk [vmem:[#allocation2 + $0x28] sm:$0xf] %vm1886, %v1811
      %1898 = vst.msk [vmem:[#allocation2 + $0x2c] sm:$0xf] %vm1886, %v1813
      %1899 = vst.msk [vmem:[#allocation2 + $0x30] sm:$0xf] %vm1886, %v1815
      %1900 = vst.msk [vmem:[#allocation2 + $0x34] sm:$0xf] %vm1886, %v1817
      %1901 = vst.msk [vmem:[#allocation2 + $0x38] sm:$0xf] %vm1886, %v1819
      %1902 = vst.msk [vmem:[#allocation2 + $0x3c] sm:$0xf] %vm1886, %v1821
      %1903 = vst.msk [vmem:[#allocation2 + $0x40] sm:$0xf] %vm1886, %v1823
      %1904 = vst.msk [vmem:[#allocation2 + $0x44] sm:$0xf] %vm1886, %v1825
      %1905 = vst.msk [vmem:[#allocation2 + $0x48] sm:$0xf] %vm1886, %v1827
      %1906 = vst.msk [vmem:[#allocation2 + $0x4c] sm:$0xf] %vm1886, %v1829
      %1907 = vst.msk [vmem:[#allocation2 + $0x50] sm:$0xf] %vm1886, %v1831
      %1908 = vst.msk [vmem:[#allocation2 + $0x54] sm:$0xf] %vm1886, %v1833
      %1909 = vst.msk [vmem:[#allocation2 + $0x58] sm:$0xf] %vm1886, %v1835
      %1910 = vst.msk [vmem:[#allocation2 + $0x5c] sm:$0xf] %vm1886, %v1837
      %1911 = vst.msk [vmem:[#allocation2 + $0x60] sm:$0xf] %vm1886, %v1839
      %1912 = vst.msk [vmem:[#allocation2 + $0x64] sm:$0xf] %vm1886, %v1841
      %1913 = vst.msk [vmem:[#allocation2 + $0x68] sm:$0xf] %vm1886, %v1843
      %1914 = vst.msk [vmem:[#allocation2 + $0x6c] sm:$0xf] %vm1886, %v1845
      %1915 = vst.msk [vmem:[#allocation2 + $0x70] sm:$0xf] %vm1886, %v1847
      %1916 = vst.msk [vmem:[#allocation2 + $0x74] sm:$0xf] %vm1886, %v1849
      %1917 = vst.msk [vmem:[#allocation2 + $0x78] sm:$0xf] %vm1886, %v1851
      %1918 = vst.msk [vmem:[#allocation2 + $0x7c] sm:$0xf] %vm1886, %v1853
      %v1919 = vld [vmem:[%s1164] sm:$0xe]
      %v1920 = vld [vmem:[%s1164 + $0x4] sm:$0xf]
      %v1921 = vld [vmem:[%s1164 + $0x8] sm:$0x1]
      %v1922 = vld [vmem:[%s1164 + $0xc] sm:$0xe]
      %v1923 = vld [vmem:[%s1164 + $0x10] sm:$0xf]
      %v1924 = vld [vmem:[%s1164 + $0x14] sm:$0x1]
      %v1925 = vld [vmem:[%s1164 + $0x18] sm:$0xe]
      %v1926 = vld [vmem:[%s1164 + $0x1c] sm:$0xf]
      %v1927 = vld [vmem:[%s1164 + $0x20] sm:$0x1]
      %v1928 = vld [vmem:[%s1164 + $0x24] sm:$0xe]
      %v1929 = vld [vmem:[%s1164 + $0x28] sm:$0xf]
      %v1930 = vld [vmem:[%s1164 + $0x2c] sm:$0x1]
      %v1931 = vld [vmem:[%s1164 + $0x30] sm:$0xe]
      %v1932 = vld [vmem:[%s1164 + $0x34] sm:$0xf]
      %v1933 = vld [vmem:[%s1164 + $0x38] sm:$0x1]
      %v1934 = vld [vmem:[%s1164 + $0x3c] sm:$0xe]
      %v1935 = vld [vmem:[%s1164 + $0x40] sm:$0xf]
      %v1936 = vld [vmem:[%s1164 + $0x44] sm:$0x1]
      %v1937 = vld [vmem:[%s1164 + $0x48] sm:$0xe]
      %v1938 = vld [vmem:[%s1164 + $0x4c] sm:$0xf]
      %v1939 = vld [vmem:[%s1164 + $0x50] sm:$0x1]
      %v1940 = vld [vmem:[%s1164 + $0x54] sm:$0xe]
      %v1941 = vld [vmem:[%s1164 + $0x58] sm:$0xf]
      %v1942 = vld [vmem:[%s1164 + $0x5c] sm:$0x1]
      %v1943 = vld [vmem:[%s1164 + $0x60] sm:$0xe]
      %v1944 = vld [vmem:[%s1164 + $0x64] sm:$0xf]
      %v1945 = vld [vmem:[%s1164 + $0x68] sm:$0x1]
      %v1946 = vld [vmem:[%s1164 + $0x6c] sm:$0xe]
      %v1947 = vld [vmem:[%s1164 + $0x70] sm:$0xf]
      %v1948 = vld [vmem:[%s1164 + $0x74] sm:$0x1]
      %v1949 = vld [vmem:[%s1164 + $0x78] sm:$0xe]
      %v1950 = vld [vmem:[%s1164 + $0x7c] sm:$0xf]
      %v1951 = vld [vmem:[%s1164 + $0x80] sm:$0x1]
      %v1952 = vld [vmem:[%s1164 + $0x84] sm:$0xe]
      %v1953 = vld [vmem:[%s1164 + $0x88] sm:$0xf]
      %v1954 = vld [vmem:[%s1164 + $0x8c] sm:$0x1]
      %v1955 = vld [vmem:[%s1164 + $0x90] sm:$0xe]
      %v1956 = vld [vmem:[%s1164 + $0x94] sm:$0xf]
      %v1957 = vld [vmem:[%s1164 + $0x98] sm:$0x1]
      %v1958 = vld [vmem:[%s1164 + $0x9c] sm:$0xe]
      %v1959 = vld [vmem:[%s1164 + $0xa0] sm:$0xf]
      %v1960 = vld [vmem:[%s1164 + $0xa4] sm:$0x1]
      %v1961 = vld [vmem:[%s1164 + $0xa8] sm:$0xe]
      %v1962 = vld [vmem:[%s1164 + $0xac] sm:$0xf]
      %v1963 = vld [vmem:[%s1164 + $0xb0] sm:$0x1]
      %v1964 = vld [vmem:[%s1164 + $0xb4] sm:$0xe]
      %v1965 = vld [vmem:[%s1164 + $0xb8] sm:$0xf]
      %v1966 = vld [vmem:[%s1164 + $0xbc] sm:$0x1]
      %v2015 = vrot.slane %v1919, 5
      %v2016 = vrot.slane %v2015, 4
      %v2017 = vrot.slane %v1920, 5
      %v2018 = vsel %vm922, %v2016, %v2017
      %v2019 = vrot.slane %v2017, 4
      %v2020 = vrot.slane %v1921, 5
      %v2021 = vsel %vm922, %v2019, %v2020
      %v2022 = vrot.slane %v1922, 5
      %v2023 = vrot.slane %v2022, 4
      %v2024 = vrot.slane %v1923, 5
      %v2025 = vsel %vm922, %v2023, %v2024
      %v2026 = vrot.slane %v2024, 4
      %v2027 = vrot.slane %v1924, 5
      %v2028 = vsel %vm922, %v2026, %v2027
      %v2029 = vrot.slane %v1925, 5
      %v2030 = vrot.slane %v2029, 4
      %v2031 = vrot.slane %v1926, 5
      %v2032 = vsel %vm922, %v2030, %v2031
      %v2033 = vrot.slane %v2031, 4
      %v2034 = vrot.slane %v1927, 5
      %v2035 = vsel %vm922, %v2033, %v2034
      %v2036 = vrot.slane %v1928, 5
      %v2037 = vrot.slane %v2036, 4
      %v2038 = vrot.slane %v1929, 5
      %v2039 = vsel %vm922, %v2037, %v2038
      %v2040 = vrot.slane %v2038, 4
      %v2041 = vrot.slane %v1930, 5
      %v2042 = vsel %vm922, %v2040, %v2041
      %v2043 = vrot.slane %v1931, 5
      %v2044 = vrot.slane %v2043, 4
      %v2045 = vrot.slane %v1932, 5
      %v2046 = vsel %vm922, %v2044, %v2045
      %v2047 = vrot.slane %v2045, 4
      %v2048 = vrot.slane %v1933, 5
      %v2049 = vsel %vm922, %v2047, %v2048
      %v2050 = vrot.slane %v1934, 5
      %v2051 = vrot.slane %v2050, 4
      %v2052 = vrot.slane %v1935, 5
      %v2053 = vsel %vm922, %v2051, %v2052
      %v2054 = vrot.slane %v2052, 4
      %v2055 = vrot.slane %v1936, 5
      %v2056 = vsel %vm922, %v2054, %v2055
      %v2057 = vrot.slane %v1937, 5
      %v2058 = vrot.slane %v2057, 4
      %v2059 = vrot.slane %v1938, 5
      %v2060 = vsel %vm922, %v2058, %v2059
      %v2061 = vrot.slane %v2059, 4
      %v2062 = vrot.slane %v1939, 5
      %v2063 = vsel %vm922, %v2061, %v2062
      %v2064 = vrot.slane %v1940, 5
      %v2065 = vrot.slane %v2064, 4
      %v2066 = vrot.slane %v1941, 5
      %v2067 = vsel %vm922, %v2065, %v2066
      %v2068 = vrot.slane %v2066, 4
      %v2069 = vrot.slane %v1942, 5
      %v2070 = vsel %vm922, %v2068, %v2069
      %v2071 = vrot.slane %v1943, 5
      %v2072 = vrot.slane %v2071, 4
      %v2073 = vrot.slane %v1944, 5
      %v2074 = vsel %vm922, %v2072, %v2073
      %v2075 = vrot.slane %v2073, 4
      %v2076 = vrot.slane %v1945, 5
      %v2077 = vsel %vm922, %v2075, %v2076
      %v2078 = vrot.slane %v1946, 5
      %v2079 = vrot.slane %v2078, 4
      %v2080 = vrot.slane %v1947, 5
      %v2081 = vsel %vm922, %v2079, %v2080
      %v2082 = vrot.slane %v2080, 4
      %v2083 = vrot.slane %v1948, 5
      %v2084 = vsel %vm922, %v2082, %v2083
      %v2085 = vrot.slane %v1949, 5
      %v2086 = vrot.slane %v2085, 4
      %v2087 = vrot.slane %v1950, 5
      %v2088 = vsel %vm922, %v2086, %v2087
      %v2089 = vrot.slane %v2087, 4
      %v2090 = vrot.slane %v1951, 5
      %v2091 = vsel %vm922, %v2089, %v2090
      %v2092 = vrot.slane %v1952, 5
      %v2093 = vrot.slane %v2092, 4
      %v2094 = vrot.slane %v1953, 5
      %v2095 = vsel %vm922, %v2093, %v2094
      %v2096 = vrot.slane %v2094, 4
      %v2097 = vrot.slane %v1954, 5
      %v2098 = vsel %vm922, %v2096, %v2097
      %v2099 = vrot.slane %v1955, 5
      %v2100 = vrot.slane %v2099, 4
      %v2101 = vrot.slane %v1956, 5
      %v2102 = vsel %vm922, %v2100, %v2101
      %v2103 = vrot.slane %v2101, 4
      %v2104 = vrot.slane %v1957, 5
      %v2105 = vsel %vm922, %v2103, %v2104
      %v2106 = vrot.slane %v1958, 5
      %v2107 = vrot.slane %v2106, 4
      %v2108 = vrot.slane %v1959, 5
      %v2109 = vsel %vm922, %v2107, %v2108
      %v2110 = vrot.slane %v2108, 4
      %v2111 = vrot.slane %v1960, 5
      %v2112 = vsel %vm922, %v2110, %v2111
      %v2113 = vrot.slane %v1961, 5
      %v2114 = vrot.slane %v2113, 4
      %v2115 = vrot.slane %v1962, 5
      %v2116 = vsel %vm922, %v2114, %v2115
      %v2117 = vrot.slane %v2115, 4
      %v2118 = vrot.slane %v1963, 5
      %v2119 = vsel %vm922, %v2117, %v2118
      %v2120 = vrot.slane %v1964, 5
      %v2121 = vrot.slane %v2120, 4
      %v2122 = vrot.slane %v1965, 5
      %v2123 = vsel %vm922, %v2121, %v2122
      %v2124 = vrot.slane %v2122, 4
      %v2125 = vrot.slane %v1966, 5
      %v2126 = vsel %vm922, %v2124, %v2125
      %2127 = vrot.lane.b32.xlu0 %v2018, 20
      %v2128 = vpop.permute.xlu0 %2127
      %2129 = vrot.lane.b32.xlu0 %v2021, 20
      %v2130 = vpop.permute.xlu0 %2129
      %2131 = vrot.lane.b32.xlu0 %v2025, 20
      %v2132 = vpop.permute.xlu0 %2131
      %2133 = vrot.lane.b32.xlu0 %v2028, 20
      %v2134 = vpop.permute.xlu0 %2133
      %2135 = vrot.lane.b32.xlu0 %v2032, 20
      %v2136 = vpop.permute.xlu0 %2135
      %2137 = vrot.lane.b32.xlu0 %v2035, 20
      %v2138 = vpop.permute.xlu0 %2137
      %2139 = vrot.lane.b32.xlu0 %v2039, 20
      %v2140 = vpop.permute.xlu0 %2139
      %2141 = vrot.lane.b32.xlu0 %v2042, 20
      %v2142 = vpop.permute.xlu0 %2141
      %2143 = vrot.lane.b32.xlu0 %v2046, 20
      %v2144 = vpop.permute.xlu0 %2143
      %2145 = vrot.lane.b32.xlu0 %v2049, 20
      %v2146 = vpop.permute.xlu0 %2145
      %2147 = vrot.lane.b32.xlu0 %v2053, 20
      %v2148 = vpop.permute.xlu0 %2147
      %2149 = vrot.lane.b32.xlu0 %v2056, 20
      %v2150 = vpop.permute.xlu0 %2149
      %2151 = vrot.lane.b32.xlu0 %v2060, 20
      %v2152 = vpop.permute.xlu0 %2151
      %2153 = vrot.lane.b32.xlu0 %v2063, 20
      %v2154 = vpop.permute.xlu0 %2153
      %2155 = vrot.lane.b32.xlu0 %v2067, 20
      %v2156 = vpop.permute.xlu0 %2155
      %2157 = vrot.lane.b32.xlu0 %v2070, 20
      %v2158 = vpop.permute.xlu0 %2157
      %2159 = vrot.lane.b32.xlu0 %v2074, 20
      %v2160 = vpop.permute.xlu0 %2159
      %2161 = vrot.lane.b32.xlu0 %v2077, 20
      %v2162 = vpop.permute.xlu0 %2161
      %2163 = vrot.lane.b32.xlu0 %v2081, 20
      %v2164 = vpop.permute.xlu0 %2163
      %2165 = vrot.lane.b32.xlu0 %v2084, 20
      %v2166 = vpop.permute.xlu0 %2165
      %2167 = vrot.lane.b32.xlu0 %v2088, 20
      %v2168 = vpop.permute.xlu0 %2167
      %2169 = vrot.lane.b32.xlu0 %v2091, 20
      %v2170 = vpop.permute.xlu0 %2169
      %2171 = vrot.lane.b32.xlu0 %v2095, 20
      %v2172 = vpop.permute.xlu0 %2171
      %2173 = vrot.lane.b32.xlu0 %v2098, 20
      %v2174 = vpop.permute.xlu0 %2173
      %2175 = vrot.lane.b32.xlu0 %v2102, 20
      %v2176 = vpop.permute.xlu0 %2175
      %2177 = vrot.lane.b32.xlu0 %v2105, 20
      %v2178 = vpop.permute.xlu0 %2177
      %2179 = vrot.lane.b32.xlu0 %v2109, 20
      %v2180 = vpop.permute.xlu0 %2179
      %2181 = vrot.lane.b32.xlu0 %v2112, 20
      %v2182 = vpop.permute.xlu0 %2181
      %2183 = vrot.lane.b32.xlu0 %v2116, 20
      %v2184 = vpop.permute.xlu0 %2183
      %2185 = vrot.lane.b32.xlu0 %v2119, 20
      %v2186 = vpop.permute.xlu0 %2185
      %2187 = vrot.lane.b32.xlu0 %v2123, 20
      %v2188 = vpop.permute.xlu0 %2187
      %2189 = vrot.lane.b32.xlu0 %v2126, 20
      %v2190 = vpop.permute.xlu0 %2189
      %vm2223 = vcmask 191648
      %2224 = vst.msk [vmem:[#allocation2] sm:$0xf] %vm2223, %v2128
      %2225 = vst.msk [vmem:[#allocation2 + $0x4] sm:$0xf] %vm2223, %v2130
      %2226 = vst.msk [vmem:[#allocation2 + $0x8] sm:$0xf] %vm2223, %v2132
      %2227 = vst.msk [vmem:[#allocation2 + $0xc] sm:$0xf] %vm2223, %v2134
      %2228 = vst.msk [vmem:[#allocation2 + $0x10] sm:$0xf] %vm2223, %v2136
      %2229 = vst.msk [vmem:[#allocation2 + $0x14] sm:$0xf] %vm2223, %v2138
      %2230 = vst.msk [vmem:[#allocation2 + $0x18] sm:$0xf] %vm2223, %v2140
      %2231 = vst.msk [vmem:[#allocation2 + $0x1c] sm:$0xf] %vm2223, %v2142
      %2232 = vst.msk [vmem:[#allocation2 + $0x20] sm:$0xf] %vm2223, %v2144
      %2233 = vst.msk [vmem:[#allocation2 + $0x24] sm:$0xf] %vm2223, %v2146
      %2234 = vst.msk [vmem:[#allocation2 + $0x28] sm:$0xf] %vm2223, %v2148
      %2235 = vst.msk [vmem:[#allocation2 + $0x2c] sm:$0xf] %vm2223, %v2150
      %2236 = vst.msk [vmem:[#allocation2 + $0x30] sm:$0xf] %vm2223, %v2152
      %2237 = vst.msk [vmem:[#allocation2 + $0x34] sm:$0xf] %vm2223, %v2154
      %2238 = vst.msk [vmem:[#allocation2 + $0x38] sm:$0xf] %vm2223, %v2156
      %2239 = vst.msk [vmem:[#allocation2 + $0x3c] sm:$0xf] %vm2223, %v2158
      %2240 = vst.msk [vmem:[#allocation2 + $0x40] sm:$0xf] %vm2223, %v2160
      %2241 = vst.msk [vmem:[#allocation2 + $0x44] sm:$0xf] %vm2223, %v2162
      %2242 = vst.msk [vmem:[#allocation2 + $0x48] sm:$0xf] %vm2223, %v2164
      %2243 = vst.msk [vmem:[#allocation2 + $0x4c] sm:$0xf] %vm2223, %v2166
      %2244 = vst.msk [vmem:[#allocation2 + $0x50] sm:$0xf] %vm2223, %v2168
      %2245 = vst.msk [vmem:[#allocation2 + $0x54] sm:$0xf] %vm2223, %v2170
      %2246 = vst.msk [vmem:[#allocation2 + $0x58] sm:$0xf] %vm2223, %v2172
      %2247 = vst.msk [vmem:[#allocation2 + $0x5c] sm:$0xf] %vm2223, %v2174
      %2248 = vst.msk [vmem:[#allocation2 + $0x60] sm:$0xf] %vm2223, %v2176
      %2249 = vst.msk [vmem:[#allocation2 + $0x64] sm:$0xf] %vm2223, %v2178
      %2250 = vst.msk [vmem:[#allocation2 + $0x68] sm:$0xf] %vm2223, %v2180
      %2251 = vst.msk [vmem:[#allocation2 + $0x6c] sm:$0xf] %vm2223, %v2182
      %2252 = vst.msk [vmem:[#allocation2 + $0x70] sm:$0xf] %vm2223, %v2184
      %2253 = vst.msk [vmem:[#allocation2 + $0x74] sm:$0xf] %vm2223, %v2186
      %2254 = vst.msk [vmem:[#allocation2 + $0x78] sm:$0xf] %vm2223, %v2188
      %2255 = vst.msk [vmem:[#allocation2 + $0x7c] sm:$0xf] %vm2223, %v2190
      %s2256 = scalar_lea.vmem %s183, 24
      %v2257 = vld [vmem:[%s2256] sm:$0xf]
      %v2258 = vld [vmem:[%s2256 + $0x4] sm:$0xf]
      %v2259 = vld [vmem:[%s2256 + $0xc] sm:$0xf]
      %v2260 = vld [vmem:[%s2256 + $0x10] sm:$0xf]
      %v2261 = vld [vmem:[%s2256 + $0x18] sm:$0xf]
      %v2262 = vld [vmem:[%s2256 + $0x1c] sm:$0xf]
      %v2263 = vld [vmem:[%s2256 + $0x24] sm:$0xf]
      %v2264 = vld [vmem:[%s2256 + $0x28] sm:$0xf]
      %v2265 = vld [vmem:[%s2256 + $0x30] sm:$0xf]
      %v2266 = vld [vmem:[%s2256 + $0x34] sm:$0xf]
      %v2267 = vld [vmem:[%s2256 + $0x3c] sm:$0xf]
      %v2268 = vld [vmem:[%s2256 + $0x40] sm:$0xf]
      %v2269 = vld [vmem:[%s2256 + $0x48] sm:$0xf]
      %v2270 = vld [vmem:[%s2256 + $0x4c] sm:$0xf]
      %v2271 = vld [vmem:[%s2256 + $0x54] sm:$0xf]
      %v2272 = vld [vmem:[%s2256 + $0x58] sm:$0xf]
      %v2273 = vld [vmem:[%s2256 + $0x60] sm:$0xf]
      %v2274 = vld [vmem:[%s2256 + $0x64] sm:$0xf]
      %v2275 = vld [vmem:[%s2256 + $0x6c] sm:$0xf]
      %v2276 = vld [vmem:[%s2256 + $0x70] sm:$0xf]
      %v2277 = vld [vmem:[%s2256 + $0x78] sm:$0xf]
      %v2278 = vld [vmem:[%s2256 + $0x7c] sm:$0xf]
      %v2279 = vld [vmem:[%s2256 + $0x84] sm:$0xf]
      %v2280 = vld [vmem:[%s2256 + $0x88] sm:$0xf]
      %v2281 = vld [vmem:[%s2256 + $0x90] sm:$0xf]
      %v2282 = vld [vmem:[%s2256 + $0x94] sm:$0xf]
      %v2283 = vld [vmem:[%s2256 + $0x9c] sm:$0xf]
      %v2284 = vld [vmem:[%s2256 + $0xa0] sm:$0xf]
      %v2285 = vld [vmem:[%s2256 + $0xa8] sm:$0xf]
      %v2286 = vld [vmem:[%s2256 + $0xac] sm:$0xf]
      %v2287 = vld [vmem:[%s2256 + $0xb4] sm:$0xf]
      %v2288 = vld [vmem:[%s2256 + $0xb8] sm:$0xf]
      %2321 = vrot.lane.b32.xlu0 %v2257, 24
      %v2322 = vpop.permute.xlu0 %2321
      %2323 = vrot.lane.b32.xlu0 %v2258, 24
      %v2324 = vpop.permute.xlu0 %2323
      %2325 = vrot.lane.b32.xlu0 %v2259, 24
      %v2326 = vpop.permute.xlu0 %2325
      %2327 = vrot.lane.b32.xlu0 %v2260, 24
      %v2328 = vpop.permute.xlu0 %2327
      %2329 = vrot.lane.b32.xlu0 %v2261, 24
      %v2330 = vpop.permute.xlu0 %2329
      %2331 = vrot.lane.b32.xlu0 %v2262, 24
      %v2332 = vpop.permute.xlu0 %2331
      %2333 = vrot.lane.b32.xlu0 %v2263, 24
      %v2334 = vpop.permute.xlu0 %2333
      %2335 = vrot.lane.b32.xlu0 %v2264, 24
      %v2336 = vpop.permute.xlu0 %2335
      %2337 = vrot.lane.b32.xlu0 %v2265, 24
      %v2338 = vpop.permute.xlu0 %2337
      %2339 = vrot.lane.b32.xlu0 %v2266, 24
      %v2340 = vpop.permute.xlu0 %2339
      %2341 = vrot.lane.b32.xlu0 %v2267, 24
      %v2342 = vpop.permute.xlu0 %2341
      %2343 = vrot.lane.b32.xlu0 %v2268, 24
      %v2344 = vpop.permute.xlu0 %2343
      %2345 = vrot.lane.b32.xlu0 %v2269, 24
      %v2346 = vpop.permute.xlu0 %2345
      %2347 = vrot.lane.b32.xlu0 %v2270, 24
      %v2348 = vpop.permute.xlu0 %2347
      %2349 = vrot.lane.b32.xlu0 %v2271, 24
      %v2350 = vpop.permute.xlu0 %2349
      %2351 = vrot.lane.b32.xlu0 %v2272, 24
      %v2352 = vpop.permute.xlu0 %2351
      %2353 = vrot.lane.b32.xlu0 %v2273, 24
      %v2354 = vpop.permute.xlu0 %2353
      %2355 = vrot.lane.b32.xlu0 %v2274, 24
      %v2356 = vpop.permute.xlu0 %2355
      %2357 = vrot.lane.b32.xlu0 %v2275, 24
      %v2358 = vpop.permute.xlu0 %2357
      %2359 = vrot.lane.b32.xlu0 %v2276, 24
      %v2360 = vpop.permute.xlu0 %2359
      %2361 = vrot.lane.b32.xlu0 %v2277, 24
      %v2362 = vpop.permute.xlu0 %2361
      %2363 = vrot.lane.b32.xlu0 %v2278, 24
      %v2364 = vpop.permute.xlu0 %2363
      %2365 = vrot.lane.b32.xlu0 %v2279, 24
      %v2366 = vpop.permute.xlu0 %2365
      %2367 = vrot.lane.b32.xlu0 %v2280, 24
      %v2368 = vpop.permute.xlu0 %2367
      %2369 = vrot.lane.b32.xlu0 %v2281, 24
      %v2370 = vpop.permute.xlu0 %2369
      %2371 = vrot.lane.b32.xlu0 %v2282, 24
      %v2372 = vpop.permute.xlu0 %2371
      %2373 = vrot.lane.b32.xlu0 %v2283, 24
      %v2374 = vpop.permute.xlu0 %2373
      %2375 = vrot.lane.b32.xlu0 %v2284, 24
      %v2376 = vpop.permute.xlu0 %2375
      %2377 = vrot.lane.b32.xlu0 %v2285, 24
      %v2378 = vpop.permute.xlu0 %2377
      %2379 = vrot.lane.b32.xlu0 %v2286, 24
      %v2380 = vpop.permute.xlu0 %2379
      %2381 = vrot.lane.b32.xlu0 %v2287, 24
      %v2382 = vpop.permute.xlu0 %2381
      %2383 = vrot.lane.b32.xlu0 %v2288, 24
      %v2384 = vpop.permute.xlu0 %2383
      %vm2417 = vcmask 224448
      %2418 = vst.msk [vmem:[#allocation2] sm:$0xf] %vm2417, %v2322
      %2419 = vst.msk [vmem:[#allocation2 + $0x4] sm:$0xf] %vm2417, %v2324
      %2420 = vst.msk [vmem:[#allocation2 + $0x8] sm:$0xf] %vm2417, %v2326
      %2421 = vst.msk [vmem:[#allocation2 + $0xc] sm:$0xf] %vm2417, %v2328
      %2422 = vst.msk [vmem:[#allocation2 + $0x10] sm:$0xf] %vm2417, %v2330
      %2423 = vst.msk [vmem:[#allocation2 + $0x14] sm:$0xf] %vm2417, %v2332
      %2424 = vst.msk [vmem:[#allocation2 + $0x18] sm:$0xf] %vm2417, %v2334
      %2425 = vst.msk [vmem:[#allocation2 + $0x1c] sm:$0xf] %vm2417, %v2336
      %2426 = vst.msk [vmem:[#allocation2 + $0x20] sm:$0xf] %vm2417, %v2338
      %2427 = vst.msk [vmem:[#allocation2 + $0x24] sm:$0xf] %vm2417, %v2340
      %2428 = vst.msk [vmem:[#allocation2 + $0x28] sm:$0xf] %vm2417, %v2342
      %2429 = vst.msk [vmem:[#allocation2 + $0x2c] sm:$0xf] %vm2417, %v2344
      %2430 = vst.msk [vmem:[#allocation2 + $0x30] sm:$0xf] %vm2417, %v2346
      %2431 = vst.msk [vmem:[#allocation2 + $0x34] sm:$0xf] %vm2417, %v2348
      %2432 = vst.msk [vmem:[#allocation2 + $0x38] sm:$0xf] %vm2417, %v2350
      %2433 = vst.msk [vmem:[#allocation2 + $0x3c] sm:$0xf] %vm2417, %v2352
      %2434 = vst.msk [vmem:[#allocation2 + $0x40] sm:$0xf] %vm2417, %v2354
      %2435 = vst.msk [vmem:[#allocation2 + $0x44] sm:$0xf] %vm2417, %v2356
      %2436 = vst.msk [vmem:[#allocation2 + $0x48] sm:$0xf] %vm2417, %v2358
      %2437 = vst.msk [vmem:[#allocation2 + $0x4c] sm:$0xf] %vm2417, %v2360
      %2438 = vst.msk [vmem:[#allocation2 + $0x50] sm:$0xf] %vm2417, %v2362
      %2439 = vst.msk [vmem:[#allocation2 + $0x54] sm:$0xf] %vm2417, %v2364
      %2440 = vst.msk [vmem:[#allocation2 + $0x58] sm:$0xf] %vm2417, %v2366
      %2441 = vst.msk [vmem:[#allocation2 + $0x5c] sm:$0xf] %vm2417, %v2368
      %2442 = vst.msk [vmem:[#allocation2 + $0x60] sm:$0xf] %vm2417, %v2370
      %2443 = vst.msk [vmem:[#allocation2 + $0x64] sm:$0xf] %vm2417, %v2372
      %2444 = vst.msk [vmem:[#allocation2 + $0x68] sm:$0xf] %vm2417, %v2374
      %2445 = vst.msk [vmem:[#allocation2 + $0x6c] sm:$0xf] %vm2417, %v2376
      %2446 = vst.msk [vmem:[#allocation2 + $0x70] sm:$0xf] %vm2417, %v2378
      %2447 = vst.msk [vmem:[#allocation2 + $0x74] sm:$0xf] %vm2417, %v2380
      %2448 = vst.msk [vmem:[#allocation2 + $0x78] sm:$0xf] %vm2417, %v2382
      %2449 = vst.msk [vmem:[#allocation2 + $0x7c] sm:$0xf] %vm2417, %v2384
      %v2450 = vld [vmem:[%s2256] sm:$0xf]
      %v2451 = vld [vmem:[%s2256 + $0x4] sm:$0xf]
      %v2452 = vld [vmem:[%s2256 + $0x8] sm:$0x1]
      %v2453 = vld [vmem:[%s2256 + $0xc] sm:$0xf]
      %v2454 = vld [vmem:[%s2256 + $0x10] sm:$0xf]
      %v2455 = vld [vmem:[%s2256 + $0x14] sm:$0x1]
      %v2456 = vld [vmem:[%s2256 + $0x18] sm:$0xf]
      %v2457 = vld [vmem:[%s2256 + $0x1c] sm:$0xf]
      %v2458 = vld [vmem:[%s2256 + $0x20] sm:$0x1]
      %v2459 = vld [vmem:[%s2256 + $0x24] sm:$0xf]
      %v2460 = vld [vmem:[%s2256 + $0x28] sm:$0xf]
      %v2461 = vld [vmem:[%s2256 + $0x2c] sm:$0x1]
      %v2462 = vld [vmem:[%s2256 + $0x30] sm:$0xf]
      %v2463 = vld [vmem:[%s2256 + $0x34] sm:$0xf]
      %v2464 = vld [vmem:[%s2256 + $0x38] sm:$0x1]
      %v2465 = vld [vmem:[%s2256 + $0x3c] sm:$0xf]
      %v2466 = vld [vmem:[%s2256 + $0x40] sm:$0xf]
      %v2467 = vld [vmem:[%s2256 + $0x44] sm:$0x1]
      %v2468 = vld [vmem:[%s2256 + $0x48] sm:$0xf]
      %v2469 = vld [vmem:[%s2256 + $0x4c] sm:$0xf]
      %v2470 = vld [vmem:[%s2256 + $0x50] sm:$0x1]
      %v2471 = vld [vmem:[%s2256 + $0x54] sm:$0xf]
      %v2472 = vld [vmem:[%s2256 + $0x58] sm:$0xf]
      %v2473 = vld [vmem:[%s2256 + $0x5c] sm:$0x1]
      %v2474 = vld [vmem:[%s2256 + $0x60] sm:$0xf]
      %v2475 = vld [vmem:[%s2256 + $0x64] sm:$0xf]
      %v2476 = vld [vmem:[%s2256 + $0x68] sm:$0x1]
      %v2477 = vld [vmem:[%s2256 + $0x6c] sm:$0xf]
      %v2478 = vld [vmem:[%s2256 + $0x70] sm:$0xf]
      %v2479 = vld [vmem:[%s2256 + $0x74] sm:$0x1]
      %v2480 = vld [vmem:[%s2256 + $0x78] sm:$0xf]
      %v2481 = vld [vmem:[%s2256 + $0x7c] sm:$0xf]
      %v2482 = vld [vmem:[%s2256 + $0x80] sm:$0x1]
      %v2483 = vld [vmem:[%s2256 + $0x84] sm:$0xf]
      %v2484 = vld [vmem:[%s2256 + $0x88] sm:$0xf]
      %v2485 = vld [vmem:[%s2256 + $0x8c] sm:$0x1]
      %v2486 = vld [vmem:[%s2256 + $0x90] sm:$0xf]
      %v2487 = vld [vmem:[%s2256 + $0x94] sm:$0xf]
      %v2488 = vld [vmem:[%s2256 + $0x98] sm:$0x1]
      %v2489 = vld [vmem:[%s2256 + $0x9c] sm:$0xf]
      %v2490 = vld [vmem:[%s2256 + $0xa0] sm:$0xf]
      %v2491 = vld [vmem:[%s2256 + $0xa4] sm:$0x1]
      %v2492 = vld [vmem:[%s2256 + $0xa8] sm:$0xf]
      %v2493 = vld [vmem:[%s2256 + $0xac] sm:$0xf]
      %v2494 = vld [vmem:[%s2256 + $0xb0] sm:$0x1]
      %v2495 = vld [vmem:[%s2256 + $0xb4] sm:$0xf]
      %v2496 = vld [vmem:[%s2256 + $0xb8] sm:$0xf]
      %v2497 = vld [vmem:[%s2256 + $0xbc] sm:$0x1]
      %v2499 = vshrl.u32 %v2450, 16
      %v2501 = vrot.slane %v2499, 4
      %v2502 = vshll.u32 %v2450, 16
      %v2504 = vrot.slane %v2502, 5
      %v2505 = vor.u32 %v2501, %v2504
      %v2506 = vrot.slane %v2505, 4
      %v2508 = vshll.u32 %v2451, 16
      %v2510 = vrot.slane %v2508, 5
      %v2511 = vsel %vm310, %v2506, %v2510
      %v2512 = vshrl.u32 %v2451, 16
      %v2514 = vrot.slane %v2512, 4
      %v2515 = vor.u32 %v2514, %v2510
      %v2516 = vrot.slane %v2515, 4
      %v2518 = vshll.u32 %v2452, 16
      %v2520 = vrot.slane %v2518, 5
      %v2521 = vsel %vm310, %v2516, %v2520
      %v2523 = vshrl.u32 %v2453, 16
      %v2525 = vrot.slane %v2523, 4
      %v2526 = vshll.u32 %v2453, 16
      %v2528 = vrot.slane %v2526, 5
      %v2529 = vor.u32 %v2525, %v2528
      %v2530 = vrot.slane %v2529, 4
      %v2532 = vshll.u32 %v2454, 16
      %v2534 = vrot.slane %v2532, 5
      %v2535 = vsel %vm310, %v2530, %v2534
      %v2536 = vshrl.u32 %v2454, 16
      %v2538 = vrot.slane %v2536, 4
      %v2539 = vor.u32 %v2538, %v2534
      %v2540 = vrot.slane %v2539, 4
      %v2542 = vshll.u32 %v2455, 16
      %v2544 = vrot.slane %v2542, 5
      %v2545 = vsel %vm310, %v2540, %v2544
      %v2547 = vshrl.u32 %v2456, 16
      %v2549 = vrot.slane %v2547, 4
      %v2550 = vshll.u32 %v2456, 16
      %v2552 = vrot.slane %v2550, 5
      %v2553 = vor.u32 %v2549, %v2552
      %v2554 = vrot.slane %v2553, 4
      %v2556 = vshll.u32 %v2457, 16
      %v2558 = vrot.slane %v2556, 5
      %v2559 = vsel %vm310, %v2554, %v2558
      %v2560 = vshrl.u32 %v2457, 16
      %v2562 = vrot.slane %v2560, 4
      %v2563 = vor.u32 %v2562, %v2558
      %v2564 = vrot.slane %v2563, 4
      %v2566 = vshll.u32 %v2458, 16
      %v2568 = vrot.slane %v2566, 5
      %v2569 = vsel %vm310, %v2564, %v2568
      %v2571 = vshrl.u32 %v2459, 16
      %v2573 = vrot.slane %v2571, 4
      %v2574 = vshll.u32 %v2459, 16
      %v2576 = vrot.slane %v2574, 5
      %v2577 = vor.u32 %v2573, %v2576
      %v2578 = vrot.slane %v2577, 4
      %v2580 = vshll.u32 %v2460, 16
      %v2582 = vrot.slane %v2580, 5
      %v2583 = vsel %vm310, %v2578, %v2582
      %v2584 = vshrl.u32 %v2460, 16
      %v2586 = vrot.slane %v2584, 4
      %v2587 = vor.u32 %v2586, %v2582
      %v2588 = vrot.slane %v2587, 4
      %v2590 = vshll.u32 %v2461, 16
      %v2592 = vrot.slane %v2590, 5
      %v2593 = vsel %vm310, %v2588, %v2592
      %v2595 = vshrl.u32 %v2462, 16
      %v2597 = vrot.slane %v2595, 4
      %v2598 = vshll.u32 %v2462, 16
      %v2600 = vrot.slane %v2598, 5
      %v2601 = vor.u32 %v2597, %v2600
      %v2602 = vrot.slane %v2601, 4
      %v2604 = vshll.u32 %v2463, 16
      %v2606 = vrot.slane %v2604, 5
      %v2607 = vsel %vm310, %v2602, %v2606
      %v2608 = vshrl.u32 %v2463, 16
      %v2610 = vrot.slane %v2608, 4
      %v2611 = vor.u32 %v2610, %v2606
      %v2612 = vrot.slane %v2611, 4
      %v2614 = vshll.u32 %v2464, 16
      %v2616 = vrot.slane %v2614, 5
      %v2617 = vsel %vm310, %v2612, %v2616
      %v2619 = vshrl.u32 %v2465, 16
      %v2621 = vrot.slane %v2619, 4
      %v2622 = vshll.u32 %v2465, 16
      %v2624 = vrot.slane %v2622, 5
      %v2625 = vor.u32 %v2621, %v2624
      %v2626 = vrot.slane %v2625, 4
      %v2628 = vshll.u32 %v2466, 16
      %v2630 = vrot.slane %v2628, 5
      %v2631 = vsel %vm310, %v2626, %v2630
      %v2632 = vshrl.u32 %v2466, 16
      %v2634 = vrot.slane %v2632, 4
      %v2635 = vor.u32 %v2634, %v2630
      %v2636 = vrot.slane %v2635, 4
      %v2638 = vshll.u32 %v2467, 16
      %v2640 = vrot.slane %v2638, 5
      %v2641 = vsel %vm310, %v2636, %v2640
      %v2643 = vshrl.u32 %v2468, 16
      %v2645 = vrot.slane %v2643, 4
      %v2646 = vshll.u32 %v2468, 16
      %v2648 = vrot.slane %v2646, 5
      %v2649 = vor.u32 %v2645, %v2648
      %v2650 = vrot.slane %v2649, 4
      %v2652 = vshll.u32 %v2469, 16
      %v2654 = vrot.slane %v2652, 5
      %v2655 = vsel %vm310, %v2650, %v2654
      %v2656 = vshrl.u32 %v2469, 16
      %v2658 = vrot.slane %v2656, 4
      %v2659 = vor.u32 %v2658, %v2654
      %v2660 = vrot.slane %v2659, 4
      %v2662 = vshll.u32 %v2470, 16
      %v2664 = vrot.slane %v2662, 5
      %v2665 = vsel %vm310, %v2660, %v2664
      %v2667 = vshrl.u32 %v2471, 16
      %v2669 = vrot.slane %v2667, 4
      %v2670 = vshll.u32 %v2471, 16
      %v2672 = vrot.slane %v2670, 5
      %v2673 = vor.u32 %v2669, %v2672
      %v2674 = vrot.slane %v2673, 4
      %v2676 = vshll.u32 %v2472, 16
      %v2678 = vrot.slane %v2676, 5
      %v2679 = vsel %vm310, %v2674, %v2678
      %v2680 = vshrl.u32 %v2472, 16
      %v2682 = vrot.slane %v2680, 4
      %v2683 = vor.u32 %v2682, %v2678
      %v2684 = vrot.slane %v2683, 4
      %v2686 = vshll.u32 %v2473, 16
      %v2688 = vrot.slane %v2686, 5
      %v2689 = vsel %vm310, %v2684, %v2688
      %v2691 = vshrl.u32 %v2474, 16
      %v2693 = vrot.slane %v2691, 4
      %v2694 = vshll.u32 %v2474, 16
      %v2696 = vrot.slane %v2694, 5
      %v2697 = vor.u32 %v2693, %v2696
      %v2698 = vrot.slane %v2697, 4
      %v2700 = vshll.u32 %v2475, 16
      %v2702 = vrot.slane %v2700, 5
      %v2703 = vsel %vm310, %v2698, %v2702
      %v2704 = vshrl.u32 %v2475, 16
      %v2706 = vrot.slane %v2704, 4
      %v2707 = vor.u32 %v2706, %v2702
      %v2708 = vrot.slane %v2707, 4
      %v2710 = vshll.u32 %v2476, 16
      %v2712 = vrot.slane %v2710, 5
      %v2713 = vsel %vm310, %v2708, %v2712
      %v2715 = vshrl.u32 %v2477, 16
      %v2717 = vrot.slane %v2715, 4
      %v2718 = vshll.u32 %v2477, 16
      %v2720 = vrot.slane %v2718, 5
      %v2721 = vor.u32 %v2717, %v2720
      %v2722 = vrot.slane %v2721, 4
      %v2724 = vshll.u32 %v2478, 16
      %v2726 = vrot.slane %v2724, 5
      %v2727 = vsel %vm310, %v2722, %v2726
      %v2728 = vshrl.u32 %v2478, 16
      %v2730 = vrot.slane %v2728, 4
      %v2731 = vor.u32 %v2730, %v2726
      %v2732 = vrot.slane %v2731, 4
      %v2734 = vshll.u32 %v2479, 16
      %v2736 = vrot.slane %v2734, 5
      %v2737 = vsel %vm310, %v2732, %v2736
      %v2739 = vshrl.u32 %v2480, 16
      %v2741 = vrot.slane %v2739, 4
      %v2742 = vshll.u32 %v2480, 16
      %v2744 = vrot.slane %v2742, 5
      %v2745 = vor.u32 %v2741, %v2744
      %v2746 = vrot.slane %v2745, 4
      %v2748 = vshll.u32 %v2481, 16
      %v2750 = vrot.slane %v2748, 5
      %v2751 = vsel %vm310, %v2746, %v2750
      %v2752 = vshrl.u32 %v2481, 16
      %v2754 = vrot.slane %v2752, 4
      %v2755 = vor.u32 %v2754, %v2750
      %v2756 = vrot.slane %v2755, 4
      %v2758 = vshll.u32 %v2482, 16
      %v2760 = vrot.slane %v2758, 5
      %v2761 = vsel %vm310, %v2756, %v2760
      %v2763 = vshrl.u32 %v2483, 16
      %v2765 = vrot.slane %v2763, 4
      %v2766 = vshll.u32 %v2483, 16
      %v2768 = vrot.slane %v2766, 5
      %v2769 = vor.u32 %v2765, %v2768
      %v2770 = vrot.slane %v2769, 4
      %v2772 = vshll.u32 %v2484, 16
      %v2774 = vrot.slane %v2772, 5
      %v2775 = vsel %vm310, %v2770, %v2774
      %v2776 = vshrl.u32 %v2484, 16
      %v2778 = vrot.slane %v2776, 4
      %v2779 = vor.u32 %v2778, %v2774
      %v2780 = vrot.slane %v2779, 4
      %v2782 = vshll.u32 %v2485, 16
      %v2784 = vrot.slane %v2782, 5
      %v2785 = vsel %vm310, %v2780, %v2784
      %v2787 = vshrl.u32 %v2486, 16
      %v2789 = vrot.slane %v2787, 4
      %v2790 = vshll.u32 %v2486, 16
      %v2792 = vrot.slane %v2790, 5
      %v2793 = vor.u32 %v2789, %v2792
      %v2794 = vrot.slane %v2793, 4
      %v2796 = vshll.u32 %v2487, 16
      %v2798 = vrot.slane %v2796, 5
      %v2799 = vsel %vm310, %v2794, %v2798
      %v2800 = vshrl.u32 %v2487, 16
      %v2802 = vrot.slane %v2800, 4
      %v2803 = vor.u32 %v2802, %v2798
      %v2804 = vrot.slane %v2803, 4
      %v2806 = vshll.u32 %v2488, 16
      %v2808 = vrot.slane %v2806, 5
      %v2809 = vsel %vm310, %v2804, %v2808
      %v2811 = vshrl.u32 %v2489, 16
      %v2813 = vrot.slane %v2811, 4
      %v2814 = vshll.u32 %v2489, 16
      %v2816 = vrot.slane %v2814, 5
      %v2817 = vor.u32 %v2813, %v2816
      %v2818 = vrot.slane %v2817, 4
      %v2820 = vshll.u32 %v2490, 16
      %v2822 = vrot.slane %v2820, 5
      %v2823 = vsel %vm310, %v2818, %v2822
      %v2824 = vshrl.u32 %v2490, 16
      %v2826 = vrot.slane %v2824, 4
      %v2827 = vor.u32 %v2826, %v2822
      %v2828 = vrot.slane %v2827, 4
      %v2830 = vshll.u32 %v2491, 16
      %v2832 = vrot.slane %v2830, 5
      %v2833 = vsel %vm310, %v2828, %v2832
      %v2835 = vshrl.u32 %v2492, 16
      %v2837 = vrot.slane %v2835, 4
      %v2838 = vshll.u32 %v2492, 16
      %v2840 = vrot.slane %v2838, 5
      %v2841 = vor.u32 %v2837, %v2840
      %v2842 = vrot.slane %v2841, 4
      %v2844 = vshll.u32 %v2493, 16
      %v2846 = vrot.slane %v2844, 5
      %v2847 = vsel %vm310, %v2842, %v2846
      %v2848 = vshrl.u32 %v2493, 16
      %v2850 = vrot.slane %v2848, 4
      %v2851 = vor.u32 %v2850, %v2846
      %v2852 = vrot.slane %v2851, 4
      %v2854 = vshll.u32 %v2494, 16
      %v2856 = vrot.slane %v2854, 5
      %v2857 = vsel %vm310, %v2852, %v2856
      %v2859 = vshrl.u32 %v2495, 16
      %v2861 = vrot.slane %v2859, 4
      %v2862 = vshll.u32 %v2495, 16
      %v2864 = vrot.slane %v2862, 5
      %v2865 = vor.u32 %v2861, %v2864
      %v2866 = vrot.slane %v2865, 4
      %v2868 = vshll.u32 %v2496, 16
      %v2870 = vrot.slane %v2868, 5
      %v2871 = vsel %vm310, %v2866, %v2870
      %v2872 = vshrl.u32 %v2496, 16
      %v2874 = vrot.slane %v2872, 4
      %v2875 = vor.u32 %v2874, %v2870
      %v2876 = vrot.slane %v2875, 4
      %v2878 = vshll.u32 %v2497, 16
      %v2880 = vrot.slane %v2878, 5
      %v2881 = vsel %vm310, %v2876, %v2880
      %2882 = vrot.lane.b32.xlu0 %v2511, 28
      %v2883 = vpop.permute.xlu0 %2882
      %2884 = vrot.lane.b32.xlu0 %v2521, 28
      %v2885 = vpop.permute.xlu0 %2884
      %2886 = vrot.lane.b32.xlu0 %v2535, 28
      %v2887 = vpop.permute.xlu0 %2886
      %2888 = vrot.lane.b32.xlu0 %v2545, 28
      %v2889 = vpop.permute.xlu0 %2888
      %2890 = vrot.lane.b32.xlu0 %v2559, 28
      %v2891 = vpop.permute.xlu0 %2890
      %2892 = vrot.lane.b32.xlu0 %v2569, 28
      %v2893 = vpop.permute.xlu0 %2892
      %2894 = vrot.lane.b32.xlu0 %v2583, 28
      %v2895 = vpop.permute.xlu0 %2894
      %2896 = vrot.lane.b32.xlu0 %v2593, 28
      %v2897 = vpop.permute.xlu0 %2896
      %2898 = vrot.lane.b32.xlu0 %v2607, 28
      %v2899 = vpop.permute.xlu0 %2898
      %2900 = vrot.lane.b32.xlu0 %v2617, 28
      %v2901 = vpop.permute.xlu0 %2900
      %2902 = vrot.lane.b32.xlu0 %v2631, 28
      %v2903 = vpop.permute.xlu0 %2902
      %2904 = vrot.lane.b32.xlu0 %v2641, 28
      %v2905 = vpop.permute.xlu0 %2904
      %2906 = vrot.lane.b32.xlu0 %v2655, 28
      %v2907 = vpop.permute.xlu0 %2906
      %2908 = vrot.lane.b32.xlu0 %v2665, 28
      %v2909 = vpop.permute.xlu0 %2908
      %2910 = vrot.lane.b32.xlu0 %v2679, 28
      %v2911 = vpop.permute.xlu0 %2910
      %2912 = vrot.lane.b32.xlu0 %v2689, 28
      %v2913 = vpop.permute.xlu0 %2912
      %2914 = vrot.lane.b32.xlu0 %v2703, 28
      %v2915 = vpop.permute.xlu0 %2914
      %2916 = vrot.lane.b32.xlu0 %v2713, 28
      %v2917 = vpop.permute.xlu0 %2916
      %2918 = vrot.lane.b32.xlu0 %v2727, 28
      %v2919 = vpop.permute.xlu0 %2918
      %2920 = vrot.lane.b32.xlu0 %v2737, 28
      %v2921 = vpop.permute.xlu0 %2920
      %2922 = vrot.lane.b32.xlu0 %v2751, 28
      %v2923 = vpop.permute.xlu0 %2922
      %2924 = vrot.lane.b32.xlu0 %v2761, 28
      %v2925 = vpop.permute.xlu0 %2924
      %2926 = vrot.lane.b32.xlu0 %v2775, 28
      %v2927 = vpop.permute.xlu0 %2926
      %2928 = vrot.lane.b32.xlu0 %v2785, 28
      %v2929 = vpop.permute.xlu0 %2928
      %2930 = vrot.lane.b32.xlu0 %v2799, 28
      %v2931 = vpop.permute.xlu0 %2930
      %2932 = vrot.lane.b32.xlu0 %v2809, 28
      %v2933 = vpop.permute.xlu0 %2932
      %2934 = vrot.lane.b32.xlu0 %v2823, 28
      %v2935 = vpop.permute.xlu0 %2934
      %2936 = vrot.lane.b32.xlu0 %v2833, 28
      %v2937 = vpop.permute.xlu0 %2936
      %2938 = vrot.lane.b32.xlu0 %v2847, 28
      %v2939 = vpop.permute.xlu0 %2938
      %2940 = vrot.lane.b32.xlu0 %v2857, 28
      %v2941 = vpop.permute.xlu0 %2940
      %2942 = vrot.lane.b32.xlu0 %v2871, 28
      %v2943 = vpop.permute.xlu0 %2942
      %2944 = vrot.lane.b32.xlu0 %v2881, 28
      %v2945 = vpop.permute.xlu0 %2944
      %vm2978 = vcmask 257248
      %2979 = vst.msk [vmem:[#allocation2] sm:$0xf] %vm2978, %v2883
      %2980 = vst.msk [vmem:[#allocation2 + $0x4] sm:$0xf] %vm2978, %v2885
      %2981 = vst.msk [vmem:[#allocation2 + $0x8] sm:$0xf] %vm2978, %v2887
      %2982 = vst.msk [vmem:[#allocation2 + $0xc] sm:$0xf] %vm2978, %v2889
      %2983 = vst.msk [vmem:[#allocation2 + $0x10] sm:$0xf] %vm2978, %v2891
      %2984 = vst.msk [vmem:[#allocation2 + $0x14] sm:$0xf] %vm2978, %v2893
      %2985 = vst.msk [vmem:[#allocation2 + $0x18] sm:$0xf] %vm2978, %v2895
      %2986 = vst.msk [vmem:[#allocation2 + $0x1c] sm:$0xf] %vm2978, %v2897
      %2987 = vst.msk [vmem:[#allocation2 + $0x20] sm:$0xf] %vm2978, %v2899
      %2988 = vst.msk [vmem:[#allocation2 + $0x24] sm:$0xf] %vm2978, %v2901
      %2989 = vst.msk [vmem:[#allocation2 + $0x28] sm:$0xf] %vm2978, %v2903
      %2990 = vst.msk [vmem:[#allocation2 + $0x2c] sm:$0xf] %vm2978, %v2905
      %2991 = vst.msk [vmem:[#allocation2 + $0x30] sm:$0xf] %vm2978, %v2907
      %2992 = vst.msk [vmem:[#allocation2 + $0x34] sm:$0xf] %vm2978, %v2909
      %2993 = vst.msk [vmem:[#allocation2 + $0x38] sm:$0xf] %vm2978, %v2911
      %2994 = vst.msk [vmem:[#allocation2 + $0x3c] sm:$0xf] %vm2978, %v2913
      %2995 = vst.msk [vmem:[#allocation2 + $0x40] sm:$0xf] %vm2978, %v2915
      %2996 = vst.msk [vmem:[#allocation2 + $0x44] sm:$0xf] %vm2978, %v2917
      %2997 = vst.msk [vmem:[#allocation2 + $0x48] sm:$0xf] %vm2978, %v2919
      %2998 = vst.msk [vmem:[#allocation2 + $0x4c] sm:$0xf] %vm2978, %v2921
      %2999 = vst.msk [vmem:[#allocation2 + $0x50] sm:$0xf] %vm2978, %v2923
      %3000 = vst.msk [vmem:[#allocation2 + $0x54] sm:$0xf] %vm2978, %v2925
      %3001 = vst.msk [vmem:[#allocation2 + $0x58] sm:$0xf] %vm2978, %v2927
      %3002 = vst.msk [vmem:[#allocation2 + $0x5c] sm:$0xf] %vm2978, %v2929
      %3003 = vst.msk [vmem:[#allocation2 + $0x60] sm:$0xf] %vm2978, %v2931
      %3004 = vst.msk [vmem:[#allocation2 + $0x64] sm:$0xf] %vm2978, %v2933
      %3005 = vst.msk [vmem:[#allocation2 + $0x68] sm:$0xf] %vm2978, %v2935
      %3006 = vst.msk [vmem:[#allocation2 + $0x6c] sm:$0xf] %vm2978, %v2937
      %3007 = vst.msk [vmem:[#allocation2 + $0x70] sm:$0xf] %vm2978, %v2939
      %3008 = vst.msk [vmem:[#allocation2 + $0x74] sm:$0xf] %vm2978, %v2941
      %3009 = vst.msk [vmem:[#allocation2 + $0x78] sm:$0xf] %vm2978, %v2943
      %3010 = vst.msk [vmem:[#allocation2 + $0x7c] sm:$0xf] %vm2978, %v2945
      %v3011 = vld [vmem:[%s2256] sm:$0xe]
      %v3012 = vld [vmem:[%s2256 + $0x4] sm:$0xf]
      %v3013 = vld [vmem:[%s2256 + $0x8] sm:$0x1]
      %v3014 = vld [vmem:[%s2256 + $0xc] sm:$0xe]
      %v3015 = vld [vmem:[%s2256 + $0x10] sm:$0xf]
      %v3016 = vld [vmem:[%s2256 + $0x14] sm:$0x1]
      %v3017 = vld [vmem:[%s2256 + $0x18] sm:$0xe]
      %v3018 = vld [vmem:[%s2256 + $0x1c] sm:$0xf]
      %v3019 = vld [vmem:[%s2256 + $0x20] sm:$0x1]
      %v3020 = vld [vmem:[%s2256 + $0x24] sm:$0xe]
      %v3021 = vld [vmem:[%s2256 + $0x28] sm:$0xf]
      %v3022 = vld [vmem:[%s2256 + $0x2c] sm:$0x1]
      %v3023 = vld [vmem:[%s2256 + $0x30] sm:$0xe]
      %v3024 = vld [vmem:[%s2256 + $0x34] sm:$0xf]
      %v3025 = vld [vmem:[%s2256 + $0x38] sm:$0x1]
      %v3026 = vld [vmem:[%s2256 + $0x3c] sm:$0xe]
      %v3027 = vld [vmem:[%s2256 + $0x40] sm:$0xf]
      %v3028 = vld [vmem:[%s2256 + $0x44] sm:$0x1]
      %v3029 = vld [vmem:[%s2256 + $0x48] sm:$0xe]
      %v3030 = vld [vmem:[%s2256 + $0x4c] sm:$0xf]
      %v3031 = vld [vmem:[%s2256 + $0x50] sm:$0x1]
      %v3032 = vld [vmem:[%s2256 + $0x54] sm:$0xe]
      %v3033 = vld [vmem:[%s2256 + $0x58] sm:$0xf]
      %v3034 = vld [vmem:[%s2256 + $0x5c] sm:$0x1]
      %v3035 = vld [vmem:[%s2256 + $0x60] sm:$0xe]
      %v3036 = vld [vmem:[%s2256 + $0x64] sm:$0xf]
      %v3037 = vld [vmem:[%s2256 + $0x68] sm:$0x1]
      %v3038 = vld [vmem:[%s2256 + $0x6c] sm:$0xe]
      %v3039 = vld [vmem:[%s2256 + $0x70] sm:$0xf]
      %v3040 = vld [vmem:[%s2256 + $0x74] sm:$0x1]
      %v3041 = vld [vmem:[%s2256 + $0x78] sm:$0xe]
      %v3042 = vld [vmem:[%s2256 + $0x7c] sm:$0xf]
      %v3043 = vld [vmem:[%s2256 + $0x80] sm:$0x1]
      %v3044 = vld [vmem:[%s2256 + $0x84] sm:$0xe]
      %v3045 = vld [vmem:[%s2256 + $0x88] sm:$0xf]
      %v3046 = vld [vmem:[%s2256 + $0x8c] sm:$0x1]
      %v3047 = vld [vmem:[%s2256 + $0x90] sm:$0xe]
      %v3048 = vld [vmem:[%s2256 + $0x94] sm:$0xf]
      %v3049 = vld [vmem:[%s2256 + $0x98] sm:$0x1]
      %v3050 = vld [vmem:[%s2256 + $0x9c] sm:$0xe]
      %v3051 = vld [vmem:[%s2256 + $0xa0] sm:$0xf]
      %v3052 = vld [vmem:[%s2256 + $0xa4] sm:$0x1]
      %v3053 = vld [vmem:[%s2256 + $0xa8] sm:$0xe]
      %v3054 = vld [vmem:[%s2256 + $0xac] sm:$0xf]
      %v3055 = vld [vmem:[%s2256 + $0xb0] sm:$0x1]
      %v3056 = vld [vmem:[%s2256 + $0xb4] sm:$0xe]
      %v3057 = vld [vmem:[%s2256 + $0xb8] sm:$0xf]
      %v3058 = vld [vmem:[%s2256 + $0xbc] sm:$0x1]
      %v3107 = vrot.slane %v3011, 5
      %v3108 = vrot.slane %v3107, 4
      %v3109 = vrot.slane %v3012, 5
      %v3110 = vsel %vm922, %v3108, %v3109
      %v3111 = vrot.slane %v3109, 4
      %v3112 = vrot.slane %v3013, 5
      %v3113 = vsel %vm922, %v3111, %v3112
      %v3114 = vrot.slane %v3014, 5
      %v3115 = vrot.slane %v3114, 4
      %v3116 = vrot.slane %v3015, 5
      %v3117 = vsel %vm922, %v3115, %v3116
      %v3118 = vrot.slane %v3116, 4
      %v3119 = vrot.slane %v3016, 5
      %v3120 = vsel %vm922, %v3118, %v3119
      %v3121 = vrot.slane %v3017, 5
      %v3122 = vrot.slane %v3121, 4
      %v3123 = vrot.slane %v3018, 5
      %v3124 = vsel %vm922, %v3122, %v3123
      %v3125 = vrot.slane %v3123, 4
      %v3126 = vrot.slane %v3019, 5
      %v3127 = vsel %vm922, %v3125, %v3126
      %v3128 = vrot.slane %v3020, 5
      %v3129 = vrot.slane %v3128, 4
      %v3130 = vrot.slane %v3021, 5
      %v3131 = vsel %vm922, %v3129, %v3130
      %v3132 = vrot.slane %v3130, 4
      %v3133 = vrot.slane %v3022, 5
      %v3134 = vsel %vm922, %v3132, %v3133
      %v3135 = vrot.slane %v3023, 5
      %v3136 = vrot.slane %v3135, 4
      %v3137 = vrot.slane %v3024, 5
      %v3138 = vsel %vm922, %v3136, %v3137
      %v3139 = vrot.slane %v3137, 4
      %v3140 = vrot.slane %v3025, 5
      %v3141 = vsel %vm922, %v3139, %v3140
      %v3142 = vrot.slane %v3026, 5
      %v3143 = vrot.slane %v3142, 4
      %v3144 = vrot.slane %v3027, 5
      %v3145 = vsel %vm922, %v3143, %v3144
      %v3146 = vrot.slane %v3144, 4
      %v3147 = vrot.slane %v3028, 5
      %v3148 = vsel %vm922, %v3146, %v3147
      %v3149 = vrot.slane %v3029, 5
      %v3150 = vrot.slane %v3149, 4
      %v3151 = vrot.slane %v3030, 5
      %v3152 = vsel %vm922, %v3150, %v3151
      %v3153 = vrot.slane %v3151, 4
      %v3154 = vrot.slane %v3031, 5
      %v3155 = vsel %vm922, %v3153, %v3154
      %v3156 = vrot.slane %v3032, 5
      %v3157 = vrot.slane %v3156, 4
      %v3158 = vrot.slane %v3033, 5
      %v3159 = vsel %vm922, %v3157, %v3158
      %v3160 = vrot.slane %v3158, 4
      %v3161 = vrot.slane %v3034, 5
      %v3162 = vsel %vm922, %v3160, %v3161
      %v3163 = vrot.slane %v3035, 5
      %v3164 = vrot.slane %v3163, 4
      %v3165 = vrot.slane %v3036, 5
      %v3166 = vsel %vm922, %v3164, %v3165
      %v3167 = vrot.slane %v3165, 4
      %v3168 = vrot.slane %v3037, 5
      %v3169 = vsel %vm922, %v3167, %v3168
      %v3170 = vrot.slane %v3038, 5
      %v3171 = vrot.slane %v3170, 4
      %v3172 = vrot.slane %v3039, 5
      %v3173 = vsel %vm922, %v3171, %v3172
      %v3174 = vrot.slane %v3172, 4
      %v3175 = vrot.slane %v3040, 5
      %v3176 = vsel %vm922, %v3174, %v3175
      %v3177 = vrot.slane %v3041, 5
      %v3178 = vrot.slane %v3177, 4
      %v3179 = vrot.slane %v3042, 5
      %v3180 = vsel %vm922, %v3178, %v3179
      %v3181 = vrot.slane %v3179, 4
      %v3182 = vrot.slane %v3043, 5
      %v3183 = vsel %vm922, %v3181, %v3182
      %v3184 = vrot.slane %v3044, 5
      %v3185 = vrot.slane %v3184, 4
      %v3186 = vrot.slane %v3045, 5
      %v3187 = vsel %vm922, %v3185, %v3186
      %v3188 = vrot.slane %v3186, 4
      %v3189 = vrot.slane %v3046, 5
      %v3190 = vsel %vm922, %v3188, %v3189
      %v3191 = vrot.slane %v3047, 5
      %v3192 = vrot.slane %v3191, 4
      %v3193 = vrot.slane %v3048, 5
      %v3194 = vsel %vm922, %v3192, %v3193
      %v3195 = vrot.slane %v3193, 4
      %v3196 = vrot.slane %v3049, 5
      %v3197 = vsel %vm922, %v3195, %v3196
      %v3198 = vrot.slane %v3050, 5
      %v3199 = vrot.slane %v3198, 4
      %v3200 = vrot.slane %v3051, 5
      %v3201 = vsel %vm922, %v3199, %v3200
      %v3202 = vrot.slane %v3200, 4
      %v3203 = vrot.slane %v3052, 5
      %v3204 = vsel %vm922, %v3202, %v3203
      %v3205 = vrot.slane %v3053, 5
      %v3206 = vrot.slane %v3205, 4
      %v3207 = vrot.slane %v3054, 5
      %v3208 = vsel %vm922, %v3206, %v3207
      %v3209 = vrot.slane %v3207, 4
      %v3210 = vrot.slane %v3055, 5
      %v3211 = vsel %vm922, %v3209, %v3210
      %v3212 = vrot.slane %v3056, 5
      %v3213 = vrot.slane %v3212, 4
      %v3214 = vrot.slane %v3057, 5
      %v3215 = vsel %vm922, %v3213, %v3214
      %v3216 = vrot.slane %v3214, 4
      %v3217 = vrot.slane %v3058, 5
      %v3218 = vsel %vm922, %v3216, %v3217
      %3219 = vrot.lane.b32.xlu0 %v3110, 32
      %v3220 = vpop.permute.xlu0 %3219
      %3221 = vrot.lane.b32.xlu0 %v3113, 32
      %v3222 = vpop.permute.xlu0 %3221
      %3223 = vrot.lane.b32.xlu0 %v3117, 32
      %v3224 = vpop.permute.xlu0 %3223
      %3225 = vrot.lane.b32.xlu0 %v3120, 32
      %v3226 = vpop.permute.xlu0 %3225
      %3227 = vrot.lane.b32.xlu0 %v3124, 32
      %v3228 = vpop.permute.xlu0 %3227
      %3229 = vrot.lane.b32.xlu0 %v3127, 32
      %v3230 = vpop.permute.xlu0 %3229
      %3231 = vrot.lane.b32.xlu0 %v3131, 32
      %v3232 = vpop.permute.xlu0 %3231
      %3233 = vrot.lane.b32.xlu0 %v3134, 32
      %v3234 = vpop.permute.xlu0 %3233
      %3235 = vrot.lane.b32.xlu0 %v3138, 32
      %v3236 = vpop.permute.xlu0 %3235
      %3237 = vrot.lane.b32.xlu0 %v3141, 32
      %v3238 = vpop.permute.xlu0 %3237
      %3239 = vrot.lane.b32.xlu0 %v3145, 32
      %v3240 = vpop.permute.xlu0 %3239
      %3241 = vrot.lane.b32.xlu0 %v3148, 32
      %v3242 = vpop.permute.xlu0 %3241
      %3243 = vrot.lane.b32.xlu0 %v3152, 32
      %v3244 = vpop.permute.xlu0 %3243
      %3245 = vrot.lane.b32.xlu0 %v3155, 32
      %v3246 = vpop.permute.xlu0 %3245
      %3247 = vrot.lane.b32.xlu0 %v3159, 32
      %v3248 = vpop.permute.xlu0 %3247
      %3249 = vrot.lane.b32.xlu0 %v3162, 32
      %v3250 = vpop.permute.xlu0 %3249
      %3251 = vrot.lane.b32.xlu0 %v3166, 32
      %v3252 = vpop.permute.xlu0 %3251
      %3253 = vrot.lane.b32.xlu0 %v3169, 32
      %v3254 = vpop.permute.xlu0 %3253
      %3255 = vrot.lane.b32.xlu0 %v3173, 32
      %v3256 = vpop.permute.xlu0 %3255
      %3257 = vrot.lane.b32.xlu0 %v3176, 32
      %v3258 = vpop.permute.xlu0 %3257
      %3259 = vrot.lane.b32.xlu0 %v3180, 32
      %v3260 = vpop.permute.xlu0 %3259
      %3261 = vrot.lane.b32.xlu0 %v3183, 32
      %v3262 = vpop.permute.xlu0 %3261
      %3263 = vrot.lane.b32.xlu0 %v3187, 32
      %v3264 = vpop.permute.xlu0 %3263
      %3265 = vrot.lane.b32.xlu0 %v3190, 32
      %v3266 = vpop.permute.xlu0 %3265
      %3267 = vrot.lane.b32.xlu0 %v3194, 32
      %v3268 = vpop.permute.xlu0 %3267
      %3269 = vrot.lane.b32.xlu0 %v3197, 32
      %v3270 = vpop.permute.xlu0 %3269
      %3271 = vrot.lane.b32.xlu0 %v3201, 32
      %v3272 = vpop.permute.xlu0 %3271
      %3273 = vrot.lane.b32.xlu0 %v3204, 32
      %v3274 = vpop.permute.xlu0 %3273
      %3275 = vrot.lane.b32.xlu0 %v3208, 32
      %v3276 = vpop.permute.xlu0 %3275
      %3277 = vrot.lane.b32.xlu0 %v3211, 32
      %v3278 = vpop.permute.xlu0 %3277
      %3279 = vrot.lane.b32.xlu0 %v3215, 32
      %v3280 = vpop.permute.xlu0 %3279
      %3281 = vrot.lane.b32.xlu0 %v3218, 32
      %v3282 = vpop.permute.xlu0 %3281
      %vm3315 = vcmask 290048
      %3316 = vst.msk [vmem:[#allocation2] sm:$0xf] %vm3315, %v3220
      %3317 = vst.msk [vmem:[#allocation2 + $0x4] sm:$0xf] %vm3315, %v3222
      %3318 = vst.msk [vmem:[#allocation2 + $0x8] sm:$0xf] %vm3315, %v3224
      %3319 = vst.msk [vmem:[#allocation2 + $0xc] sm:$0xf] %vm3315, %v3226
      %3320 = vst.msk [vmem:[#allocation2 + $0x10] sm:$0xf] %vm3315, %v3228
      %3321 = vst.msk [vmem:[#allocation2 + $0x14] sm:$0xf] %vm3315, %v3230
      %3322 = vst.msk [vmem:[#allocation2 + $0x18] sm:$0xf] %vm3315, %v3232
      %3323 = vst.msk [vmem:[#allocation2 + $0x1c] sm:$0xf] %vm3315, %v3234
      %3324 = vst.msk [vmem:[#allocation2 + $0x20] sm:$0xf] %vm3315, %v3236
      %3325 = vst.msk [vmem:[#allocation2 + $0x24] sm:$0xf] %vm3315, %v3238
      %3326 = vst.msk [vmem:[#allocation2 + $0x28] sm:$0xf] %vm3315, %v3240
      %3327 = vst.msk [vmem:[#allocation2 + $0x2c] sm:$0xf] %vm3315, %v3242
      %3328 = vst.msk [vmem:[#allocation2 + $0x30] sm:$0xf] %vm3315, %v3244
      %3329 = vst.msk [vmem:[#allocation2 + $0x34] sm:$0xf] %vm3315, %v3246
      %3330 = vst.msk [vmem:[#allocation2 + $0x38] sm:$0xf] %vm3315, %v3248
      %3331 = vst.msk [vmem:[#allocation2 + $0x3c] sm:$0xf] %vm3315, %v3250
      %3332 = vst.msk [vmem:[#allocation2 + $0x40] sm:$0xf] %vm3315, %v3252
      %3333 = vst.msk [vmem:[#allocation2 + $0x44] sm:$0xf] %vm3315, %v3254
      %3334 = vst.msk [vmem:[#allocation2 + $0x48] sm:$0xf] %vm3315, %v3256
      %3335 = vst.msk [vmem:[#allocation2 + $0x4c] sm:$0xf] %vm3315, %v3258
      %3336 = vst.msk [vmem:[#allocation2 + $0x50] sm:$0xf] %vm3315, %v3260
      %3337 = vst.msk [vmem:[#allocation2 + $0x54] sm:$0xf] %vm3315, %v3262
      %3338 = vst.msk [vmem:[#allocation2 + $0x58] sm:$0xf] %vm3315, %v3264
      %3339 = vst.msk [vmem:[#allocation2 + $0x5c] sm:$0xf] %vm3315, %v3266
      %3340 = vst.msk [vmem:[#allocation2 + $0x60] sm:$0xf] %vm3315, %v3268
      %3341 = vst.msk [vmem:[#allocation2 + $0x64] sm:$0xf] %vm3315, %v3270
      %3342 = vst.msk [vmem:[#allocation2 + $0x68] sm:$0xf] %vm3315, %v3272
      %3343 = vst.msk [vmem:[#allocation2 + $0x6c] sm:$0xf] %vm3315, %v3274
      %3344 = vst.msk [vmem:[#allocation2 + $0x70] sm:$0xf] %vm3315, %v3276
      %3345 = vst.msk [vmem:[#allocation2 + $0x74] sm:$0xf] %vm3315, %v3278
      %3346 = vst.msk [vmem:[#allocation2 + $0x78] sm:$0xf] %vm3315, %v3280
      %3347 = vst.msk [vmem:[#allocation2 + $0x7c] sm:$0xf] %vm3315, %v3282
      %v3348 = vld [vmem:[%s1] sm:$0xf]
      %v3349 = vld [vmem:[#allocation2] sm:$0xf]
      %v3350 = vld [vmem:[#allocation2 + $0x4] sm:$0xf]
      %v3351 = vld [vmem:[#allocation2 + $0x8] sm:$0xf]
      %v3352 = vld [vmem:[#allocation2 + $0xc] sm:$0xf]
      %v3353 = vld [vmem:[#allocation2 + $0x10] sm:$0xf]
      %v3354 = vld [vmem:[#allocation2 + $0x14] sm:$0xf]
      %v3355 = vld [vmem:[#allocation2 + $0x18] sm:$0xf]
      %v3356 = vld [vmem:[#allocation2 + $0x1c] sm:$0xf]
      %v3357 = vld [vmem:[#allocation2 + $0x20] sm:$0xf]
      %v3358 = vld [vmem:[#allocation2 + $0x24] sm:$0xf]
      %v3359 = vld [vmem:[#allocation2 + $0x28] sm:$0xf]
      %v3360 = vld [vmem:[#allocation2 + $0x2c] sm:$0xf]
      %v3361 = vld [vmem:[#allocation2 + $0x30] sm:$0xf]
      %v3362 = vld [vmem:[#allocation2 + $0x34] sm:$0xf]
      %v3363 = vld [vmem:[#allocation2 + $0x38] sm:$0xf]
      %v3364 = vld [vmem:[#allocation2 + $0x3c] sm:$0xf]
      %v3365 = vld [vmem:[#allocation2 + $0x40] sm:$0xf]
      %v3366 = vld [vmem:[#allocation2 + $0x44] sm:$0xf]
      %v3367 = vld [vmem:[#allocation2 + $0x48] sm:$0xf]
      %v3368 = vld [vmem:[#allocation2 + $0x4c] sm:$0xf]
      %v3369 = vld [vmem:[#allocation2 + $0x50] sm:$0xf]
      %v3370 = vld [vmem:[#allocation2 + $0x54] sm:$0xf]
      %v3371 = vld [vmem:[#allocation2 + $0x58] sm:$0xf]
      %v3372 = vld [vmem:[#allocation2 + $0x5c] sm:$0xf]
      %v3373 = vld [vmem:[#allocation2 + $0x60] sm:$0xf]
      %v3374 = vld [vmem:[#allocation2 + $0x64] sm:$0xf]
      %v3375 = vld [vmem:[#allocation2 + $0x68] sm:$0xf]
      %v3376 = vld [vmem:[#allocation2 + $0x6c] sm:$0xf]
      %v3377 = vld [vmem:[#allocation2 + $0x70] sm:$0xf]
      %v3378 = vld [vmem:[#allocation2 + $0x74] sm:$0xf]
      %v3379 = vld [vmem:[#allocation2 + $0x78] sm:$0xf]
      %v3380 = vld [vmem:[#allocation2 + $0x7c] sm:$0xf]
      %v3381 = vld [vmem:[%s2] sm:$0xff]
      %3383 = vset.pattern.permute.xlu0 0
      %3384 = vperm.xlu0 %3383, %v3381
      %v3385 = vpop.permute.xlu0 %3384
      %v3419 = vunpack.c.l.b16 %v3349
      %v3420 = vunpack.c.l.b16 %v3350
      %v3421 = vunpack.c.l.b16 %v3351
      %v3422 = vunpack.c.l.b16 %v3352
      %v3423 = vunpack.c.l.b16 %v3353
      %v3424 = vunpack.c.l.b16 %v3354
      %v3425 = vunpack.c.l.b16 %v3355
      %v3426 = vunpack.c.l.b16 %v3356
      %v3427 = vunpack.c.l.b16 %v3357
      %v3428 = vunpack.c.l.b16 %v3358
      %v3429 = vunpack.c.l.b16 %v3359
      %v3430 = vunpack.c.l.b16 %v3360
      %v3431 = vunpack.c.l.b16 %v3361
      %v3432 = vunpack.c.l.b16 %v3362
      %v3433 = vunpack.c.l.b16 %v3363
      %v3434 = vunpack.c.l.b16 %v3364
      %v3435 = vunpack.c.l.b16 %v3365
      %v3436 = vunpack.c.l.b16 %v3366
      %v3437 = vunpack.c.l.b16 %v3367
      %v3438 = vunpack.c.l.b16 %v3368
      %v3439 = vunpack.c.l.b16 %v3369
      %v3440 = vunpack.c.l.b16 %v3370
      %v3441 = vunpack.c.l.b16 %v3371
      %v3442 = vunpack.c.l.b16 %v3372
      %v3443 = vunpack.c.l.b16 %v3373
      %v3444 = vunpack.c.l.b16 %v3374
      %v3445 = vunpack.c.l.b16 %v3375
      %v3446 = vunpack.c.l.b16 %v3376
      %v3447 = vunpack.c.l.b16 %v3377
      %v3448 = vunpack.c.l.b16 %v3378
      %v3449 = vunpack.c.l.b16 %v3379
      %v3450 = vunpack.c.l.b16 %v3380
      %v3451 = vpack.c.b16 %v3420, %v3419
      %v3452 = vpack.c.b16 %v3422, %v3421
      %v3453 = vpack.c.b16 %v3424, %v3423
      %v3454 = vpack.c.b16 %v3426, %v3425
      %v3455 = vpack.c.b16 %v3428, %v3427
      %v3456 = vpack.c.b16 %v3430, %v3429
      %v3457 = vpack.c.b16 %v3432, %v3431
      %v3458 = vpack.c.b16 %v3434, %v3433
      %v3459 = vpack.c.b16 %v3436, %v3435
      %v3460 = vpack.c.b16 %v3438, %v3437
      %v3461 = vpack.c.b16 %v3440, %v3439
      %v3462 = vpack.c.b16 %v3442, %v3441
      %v3463 = vpack.c.b16 %v3444, %v3443
      %v3464 = vpack.c.b16 %v3446, %v3445
      %v3465 = vpack.c.b16 %v3448, %v3447
      %v3466 = vpack.c.b16 %v3450, %v3449
      %vm3467 = vcmask 293888
      %v3469 = vsel %vm3467, %v3348, 0
      %v3472 = vsel %vm3467, %v3451, 0
      %v3475 = vsel %vm3467, %v3452, 0
      %v3478 = vsel %vm3467, %v3453, 0
      %v3481 = vsel %vm3467, %v3454, 0
      %v3484 = vsel %vm3467, %v3455, 0
      %v3487 = vsel %vm3467, %v3456, 0
      %v3490 = vsel %vm3467, %v3457, 0
      %v3493 = vsel %vm3467, %v3458, 0
      %v3496 = vsel %vm3467, %v3459, 0
      %v3499 = vsel %vm3467, %v3460, 0
      %v3502 = vsel %vm3467, %v3461, 0
      %v3505 = vsel %vm3467, %v3462, 0
      %v3508 = vsel %vm3467, %v3463, 0
      %v3511 = vsel %vm3467, %v3464, 0
      %v3514 = vsel %vm3467, %v3465, 0
      %v3517 = vsel %vm3467, %v3466, 0
      %3519 = vmatprep.subr.bf16.mxu0 0
      %3520 = vmatpush1.bf16.xpose.msra.mxu0 %v3493
      %3521 = vmatprep.subr.bf16.mxu0 0
      %3522 = vmatpush1.bf16.xpose.msra.mxu0 %v3490
      %3523 = vmatprep.subr.bf16.mxu0 0
      %3524 = vmatpush1.bf16.xpose.msra.mxu0 %v3487
      %3525 = vmatprep.subr.bf16.mxu0 0
      %3526 = vmatpush1.bf16.xpose.msra.mxu0 %v3484
      %3527 = vmatprep.subr.bf16.mxu0 0
      %3528 = vmatpush1.bf16.xpose.msra.mxu0 %v3481
      %3529 = vmatprep.subr.bf16.mxu0 0
      %3530 = vmatpush1.bf16.xpose.msra.mxu0 %v3478
      %3531 = vmatprep.subr.bf16.mxu0 0
      %3532 = vmatpush1.bf16.xpose.msra.mxu0 %v3475
      %3533 = vmatprep.subr.bf16.mxu0 0
      %3534 = vmatpush1.bf16.xpose.msra.mxu0 %v3472
      %3535 = vmatprep.subr.bf16.mxu0 0
      %3536 = vmatpush2.bf16.xpose.msra.mxu0 %v3517
      %3537 = vmatprep.subr.bf16.mxu0 0
      %3538 = vmatpush2.bf16.xpose.msra.mxu0 %v3514
      %3539 = vmatprep.subr.bf16.mxu0 0
      %3540 = vmatpush2.bf16.xpose.msra.mxu0 %v3511
      %3541 = vmatprep.subr.bf16.mxu0 0
      %3542 = vmatpush2.bf16.xpose.msra.mxu0 %v3508
      %3543 = vmatprep.subr.bf16.mxu0 0
      %3544 = vmatpush2.bf16.xpose.msra.mxu0 %v3505
      %3545 = vmatprep.subr.bf16.mxu0 0
      %3546 = vmatpush2.bf16.xpose.msra.mxu0 %v3502
      %3547 = vmatprep.subr.bf16.mxu0 0
      %3548 = vmatpush2.bf16.xpose.msra.mxu0 %v3499
      %3549 = vmatprep.subr.bf16.mxu0 0
      %3550 = vmatpush2.bf16.xpose.msra.mxu0 %v3496
      %3551 = vmatprep.mubr.bf16.mxu0 0
      %3552 = vmatmul.mubr.bf16.gmra.mxu0 %v3469
      %v3553 = vpop.f32.mrf.mxu0
      %v3554 = vadd.f32 %v3385, %v3553
      %v3555 = vpop.f32.mrf.mxu0
      %v3556 = vadd.f32 %v3385, %v3555
      %v3557 = vpop.f32.mrf.mxu0
      %v3558 = vpop.f32.mrf.mxu0
      %3559 = vdwg.mxu0
      %3560 = vst [vmem:[%s192] sm:$0xff] %v3554
      %3561 = vst [vmem:[%s192 + $0x8] sm:$0xff] %v3556
      %s3562 = smul.u32 2, %s19
      %p3563 = scmp.lt.s32.totalorder %s18, 1
      %s3564 = scalar_select %p3563, %s18, 1
      %p3565 = scmp.lt.s32.totalorder %s3562, 1
      %s3566 = scalar_select %p3565, %s3562, 1
      %s3567 = smul.addr %s3564, 2
      %s3568 = sadd.s32 %s3566, %s3567
      %s3569 = smul.addr %s3568, 8
      %s3570 = scalar_lea.vmem %s3, %s3569
      // Predicated region
      $region33: #{cnn_layer_plain_forward.1} parent=31 // pred_check
        %p3571 = pneg %p114
      $region34: #{cnn_layer_plain_forward.1} parent=31 // pred_check_branch
        %3573 = sbr.rel (%p3571) target = $region36
      $region35: #{cnn_layer_plain_forward.1} parent=31 // pred_region
        %s3574 = smul.u32 2, %s19
      $region36: #{cnn_layer_plain_forward.1} parent=31 // pred_fallthru
        _
    $region32: #{cnn_layer_plain_forward.1} parent=5 // pred_fallthru
      _
    %p3575 = scmp.le.s32.totalorder 2, %s9
    // Predicated region
    $region37: #{cnn_layer_plain_forward.1} parent=5 // pred_check
      %p3576 = pneg %p3575
    $region38: #{cnn_layer_plain_forward.1} parent=5 // pred_check_branch
      %3578 = sbr.rel (%p3576) target = $region40
    $region39: #{cnn_layer_plain_forward.1} parent=5 // pred_region
      %s3579 = ssub.s32 %s9, 2
      // Predicated region
      $region41: #{cnn_layer_plain_forward.1} parent=39 // pred_check
        %p3580 = pneg %p120
      $region42: #{cnn_layer_plain_forward.1} parent=39 // pred_check_branch
        %3582 = sbr.rel (%p3580) target = $region44
      $region43: #{cnn_layer_plain_forward.1} parent=39 // pred_region
        %s3583 = smul.u32 2, %s21
        %p3584 = scmp.lt.s32.totalorder %s20, 1
        %s3585 = scalar_select %p3584, %s20, 1
        %p3586 = scmp.lt.s32.totalorder %s3583, 1
        %s3587 = scalar_select %p3586, %s3583, 1
        %s3588 = smul.addr %s3585, 2
        %s3589 = sadd.s32 %s3587, %s3588
        %s3590 = smul.addr %s3589, 8
        %s3591 = scalar_lea.vmem %s3, %s3590
      $region44: #{cnn_layer_plain_forward.1} parent=39 // pred_fallthru
        _
    $region40: #{cnn_layer_plain_forward.1} parent=5 // pred_fallthru
      _
  $region6: #{cnn_layer_plain_forward.1} parent=0 // loop_footer
    %s13 = sadd.s32 1, %s9
  $region7: #{cnn_layer_plain_forward.1} parent=0 // loop_footer_branch
    %8 = sbr.rel target = $region3
  $region8: #{cnn_layer_plain_forward.1} parent=0 // loop_exit
    _

</llo_original>
